<compile_context>
chip_gen: v7x
topology: tpu7x:2x2x1
jax: 0.10.0
libtpu: 0.0.40
codegen_flags: <defaults>
</compile_context>

<pallas_src>
import functools
import math

import jax
import jax.numpy as jnp
from jax import lax
from jax.experimental import pallas as pl
from jax.experimental.pallas import tpu as pltpu

EPS = 1e-5


# ---------------------------------------------------------------------------
# helpers
# ---------------------------------------------------------------------------

def _choose_tile(n):
    """Largest multiple-of-8 divisor of n (<=128) that still leaves >=2 grid steps."""
    best = None
    for cand in range(8, 129, 8):
        if n % cand == 0 and n // cand >= 2:
            best = cand
    return best if best is not None else n


def _const_spec(arr):
    nd = arr.ndim
    return pl.BlockSpec(arr.shape, lambda *_: (0,) * nd)


def _layer_norm(x, g, b):
    mu = jnp.mean(x, axis=-1, keepdims=True)
    xc = x - mu
    var = jnp.mean(xc * xc, axis=-1, keepdims=True)
    return xc * lax.rsqrt(var + EPS) * g + b


# ---------------------------------------------------------------------------
# kernels
# ---------------------------------------------------------------------------

def _bn_stats_kernel(x_ref, scale_ref, shift_ref, sum_ref, sq_ref, *, count):
    """Per-channel batch stats of (B, N, C) x, accumulated over N tiles."""
    i = pl.program_id(0)

    @pl.when(i == 0)
    def _init():
        sum_ref[...] = jnp.zeros_like(sum_ref)
        sq_ref[...] = jnp.zeros_like(sq_ref)

    b, tn, c = x_ref.shape
    x = x_ref[...].reshape(b * tn, c)
    sum_ref[...] += jnp.sum(x, axis=0, keepdims=True)
    sq_ref[...] += jnp.sum(x * x, axis=0, keepdims=True)

    @pl.when(i == pl.num_programs(0) - 1)
    def _finalize():
        mean = sum_ref[...] * (1.0 / count)
        var = jnp.maximum(sq_ref[...] * (1.0 / count) - mean * mean, 0.0)
        inv = lax.rsqrt(var + EPS)
        scale_ref[...] = inv
        shift_ref[...] = -mean * inv


def _stem_kernel(x_ref, scale_ref, shift_ref, w_lin_ref, b_lin_ref,
                 w_c1_ref, b_c1_ref, h_ref, c1_ref):
    """Fused BatchNorm-apply + TransformerLayer.linear + conv1 (1x1)."""
    b, tn, c = x_ref.shape
    e = h_ref.shape[2]
    x = x_ref[...].reshape(b * tn, c)
    xn = (x * scale_ref[...] + shift_ref[...]).astype(jnp.bfloat16)
    h = jnp.dot(xn, w_lin_ref[...], preferred_element_type=jnp.float32) + b_lin_ref[...]
    c1 = jnp.dot(xn, w_c1_ref[...], preferred_element_type=jnp.float32) + b_c1_ref[...]
    h_ref[...] = h.reshape(b, tn, e)
    c1_ref[...] = c1.reshape(b, tn, e)


def _block_kernel(h_ref, ln1g_ref, ln1b_ref, wqkv_ref, bqkv_ref,
                  winq_ref, binq_ref, wink_ref, bink_ref, winv_ref, binv_ref,
                  wout_ref, bout_ref, rmat_ref, rtmat_ref,
                  ln2g_ref, ln2b_ref, wfc1_ref, bfc1_ref, wfc2_ref, bfc2_ref,
                  o_ref, *, num_heads, if_resi):
    """One fused MHA + FFN transformer block; all intermediates stay in VMEM."""
    b_dim, tn, e = h_ref.shape
    m = b_dim * tn
    dh = e // num_heads
    scale = 1.0 / math.sqrt(dh)

    h = h_ref[...].reshape(m, e)                              # rows ordered (b, n_local)

    # ----- MultiHeadAttention sub-block -----
    hq = _layer_norm(h, ln1g_ref[...], ln1b_ref[...])

    # packed Q/K/V projection (+ReLU): one (m,E)x(E,3E) matmul
    qkv = jnp.dot(hq.astype(jnp.bfloat16), wqkv_ref[...],
                  preferred_element_type=jnp.float32) + bqkv_ref[...]
    qkv = jnp.maximum(qkv, 0.0).astype(jnp.bfloat16)          # (m, 3E)

    # nn.MultiheadAttention in-projection: zero-padded packed weights, K=3E contractions
    qp = jnp.dot(qkv, winq_ref[...], preferred_element_type=jnp.float32) + binq_ref[...]
    kp = jnp.dot(qkv, wink_ref[...], preferred_element_type=jnp.float32) + bink_ref[...]
    vp = jnp.dot(qkv, winv_ref[...], preferred_element_type=jnp.float32) + binv_ref[...]

    # attention over the torch "sequence" axis (= original batch axis B)
    rmat = rmat_ref[...]      # (E, H) head-sum indicator
    rtmat = rtmat_ref[...]    # (H, E) head-broadcast indicator
    q_rows = [qp[bb * tn:(bb + 1) * tn, :] for bb in range(b_dim)]
    k_rows = [kp[bb * tn:(bb + 1) * tn, :] for bb in range(b_dim)]
    v_rows = [vp[bb * tn:(bb + 1) * tn, :] for bb in range(b_dim)]

    attn_rows = []
    for bq in range(b_dim):
        # logits[(bp)]: (tn, H) — Dh contraction done as VPU product + indicator matmul
        logits = [jnp.dot(q_rows[bq] * k_rows[bp], rmat,
                          preferred_element_type=jnp.float32) * scale
                  for bp in range(b_dim)]
        mx = logits[0]
        for bp in range(1, b_dim):
            mx = jnp.maximum(mx, logits[bp])
        exps = [jnp.exp(l - mx) for l in logits]
        z = exps[0]
        for bp in range(1, b_dim):
            z = z + exps[bp]
        inv_z = pl.reciprocal(z, approx=True)                 # EUP slot, otherwise idle
        out_b = jnp.zeros((tn, e), jnp.float32)
        for bp in range(b_dim):
            w_bp = jnp.dot(exps[bp] * inv_z, rtmat,
                           preferred_element_type=jnp.float32)  # per-head weight -> lanes
            out_b = out_b + w_bp * v_rows[bp]
        attn_rows.append(out_b)
    a = jnp.concatenate(attn_rows, axis=0)                    # (m, E)
    # TODO(synk): attention-prob dropout (p=0.1, train mode) omitted.

    attn_out = jnp.dot(a.astype(jnp.bfloat16), wout_ref[...],
                       preferred_element_type=jnp.float32) + bout_ref[...]
    if if_resi:
        attn_out = attn_out + h                               # fused residual

    # ----- FeedForward sub-block -----
    f = _layer_norm(attn_out, ln2g_ref[...], ln2b_ref[...])
    f = jnp.dot(f.astype(jnp.bfloat16), wfc1_ref[...],
                preferred_element_type=jnp.float32) + bfc1_ref[...]
    f = jnp.maximum(f, 0.0)
    f = jnp.dot(f.astype(jnp.bfloat16), wfc2_ref[...],
                preferred_element_type=jnp.float32) + bfc2_ref[...]
    if if_resi:
        f = f + attn_out                                      # FFN residual
        out = h + f                                           # TransformerLayer residual
    else:
        out = f
    o_ref[...] = out.reshape(b_dim, tn, e).astype(o_ref.dtype)


def _pred_kernel(h_ref, c1_ref, w1h_ref, w1c_ref, b1_ref, w2_ref, b2_ref,
                 w3_ref, b3_ref, o_ref):
    """Fused prediction head: cat([x1, conv1(x)]) -> 128 -> 64 -> 2 (padded to 128 lanes)."""
    b, tn, e = h_ref.shape
    m = b * tn
    h = h_ref[...].reshape(m, e).astype(jnp.bfloat16)
    c1 = c1_ref[...].reshape(m, e).astype(jnp.bfloat16)
    # first conv (2E -> 128) split by input halves: equivalent to concatenating [h | c1]
    y = (jnp.dot(h, w1h_ref[...], preferred_element_type=jnp.float32)
         + jnp.dot(c1, w1c_ref[...], preferred_element_type=jnp.float32)
         + b1_ref[...])
    y = jnp.maximum(y, 0.0)
    # TODO(synk): Dropout(0.1) omitted (identity).
    y = jnp.dot(y.astype(jnp.bfloat16), w2_ref[...],
                preferred_element_type=jnp.float32) + b2_ref[...]
    y = jnp.maximum(y, 0.0)
    y = jnp.dot(y.astype(jnp.bfloat16), w3_ref[...],
                preferred_element_type=jnp.float32) + b3_ref[...]
    o_ref[...] = y.reshape(b, tn, o_ref.shape[2]).astype(o_ref.dtype)


# ---------------------------------------------------------------------------
# pallas_call wrappers
# ---------------------------------------------------------------------------

def bn_stats(x3, tn):
    B, N, C = x3.shape
    return pl.pallas_call(
        functools.partial(_bn_stats_kernel, count=float(B * N)),
        out_shape=(jax.ShapeDtypeStruct((1, C), jnp.float32),
                   jax.ShapeDtypeStruct((1, C), jnp.float32)),
        grid=(N // tn,),
        in_specs=[pl.BlockSpec((B, tn, C), lambda i: (0, i, 0))],
        out_specs=(pl.BlockSpec((1, C), lambda i: (0, 0)),
                   pl.BlockSpec((1, C), lambda i: (0, 0))),
        scratch_shapes=[pltpu.VMEM((1, C), jnp.float32),
                        pltpu.VMEM((1, C), jnp.float32)],
        compiler_params=pltpu.CompilerParams(dimension_semantics=("arbitrary",)),
    )(x3)


def stem(x3, scale, shift, p, tn):
    B, N, C = x3.shape
    E = p['w_lin'].shape[1]
    return pl.pallas_call(
        _stem_kernel,
        out_shape=(jax.ShapeDtypeStruct((B, N, E), jnp.float32),
                   jax.ShapeDtypeStruct((B, N, E), jnp.float32)),
        grid=(N // tn,),
        in_specs=[pl.BlockSpec((B, tn, C), lambda i: (0, i, 0)),
                  _const_spec(scale), _const_spec(shift),
                  _const_spec(p['w_lin']), _const_spec(p['b_lin']),
                  _const_spec(p['w_conv1']), _const_spec(p['b_conv1'])],
        out_specs=(pl.BlockSpec((B, tn, E), lambda i: (0, i, 0)),
                   pl.BlockSpec((B, tn, E), lambda i: (0, i, 0))),
        compiler_params=pltpu.CompilerParams(dimension_semantics=("parallel",)),
    )(x3, scale, shift, p['w_lin'], p['b_lin'], p['w_conv1'], p['b_conv1'])


def transformer_block(h, blk, rmat, rtmat, *, num_heads, if_resi, tn):
    B, N, E = h.shape
    args = (h, blk['ln1_g'], blk['ln1_b'], blk['w_qkv'], blk['b_qkv'],
            blk['w_in_q'], blk['b_in_q'], blk['w_in_k'], blk['b_in_k'],
            blk['w_in_v'], blk['b_in_v'], blk['w_out'], blk['b_out'],
            rmat, rtmat, blk['ln2_g'], blk['ln2_b'],
            blk['w_fc1'], blk['b_fc1'], blk['w_fc2'], blk['b_fc2'])
    in_specs = [pl.BlockSpec((B, tn, E), lambda i: (0, i, 0))] + \
               [_const_spec(a) for a in args[1:]]
    return pl.pallas_call(
        functools.partial(_block_kernel, num_heads=num_heads, if_resi=if_resi),
        out_shape=jax.ShapeDtypeStruct((B, N, E), jnp.float32),
        grid=(N // tn,),
        in_specs=in_specs,
        out_specs=pl.BlockSpec((B, tn, E), lambda i: (0, i, 0)),
        compiler_params=pltpu.CompilerParams(dimension_semantics=("parallel",)),
    )(*args)


def pred_head(h, c1, p, tn):
    B, N, E = h.shape
    OP = p['w_pred3'].shape[1]          # 128 (lane-dense, padded)
    args = (h, c1, p['w_pred1_h'], p['w_pred1_c'], p['b_pred1'],
            p['w_pred2'], p['b_pred2'], p['w_pred3'], p['b_pred3'])
    in_specs = [pl.BlockSpec((B, tn, E), lambda i: (0, i, 0)),
                pl.BlockSpec((B, tn, E), lambda i: (0, i, 0))] + \
               [_const_spec(a) for a in args[2:]]
    return pl.pallas_call(
        _pred_kernel,
        out_shape=jax.ShapeDtypeStruct((B, N, OP), jnp.float32),
        grid=(N // tn,),
        in_specs=in_specs,
        out_specs=pl.BlockSpec((B, tn, OP), lambda i: (0, i, 0)),
        compiler_params=pltpu.CompilerParams(dimension_semantics=("parallel",)),
    )(*args)


# ---------------------------------------------------------------------------
# parameter construction (pre-transposed / packed / bf16-cast at init)
# ---------------------------------------------------------------------------

def _torch_linear_init(key, out_f, in_f):
    kw, kb = jax.random.split(key)
    bound = 1.0 / math.sqrt(in_f)
    w = jax.random.uniform(kw, (out_f, in_f), jnp.float32, -bound, bound)
    b = jax.random.uniform(kb, (out_f,), jnp.float32, -bound, bound)
    return w, b


def init_params(key, in_dim, out_dim, dim_feedforward, block_nums, num_heads):
    assert out_dim % num_heads == 0
    E, F, H = out_dim, dim_feedforward, num_heads
    dh = E // H
    keys = iter(jax.random.split(key, 16 * block_nums + 16))

    p = {}
    w_lin, b_lin = _torch_linear_init(next(keys), E, in_dim)       # TransformerLayer.linear
    w_c1, b_c1 = _torch_linear_init(next(keys), E, in_dim)         # Conv1d(in,out,1)
    p['w_lin'] = w_lin.T.astype(jnp.bfloat16)
    p['b_lin'] = b_lin.reshape(1, E)
    p['w_conv1'] = w_c1.T.astype(jnp.bfloat16)
    p['b_conv1'] = b_c1.reshape(1, E)

    # head-sum / head-broadcast indicator matrices (shared by all blocks)
    head_of_lane = jnp.arange(E) // dh
    rmat = (head_of_lane[:, None] == jnp.arange(H)[None, :]).astype(jnp.float32)
    p['rmat'] = rmat                    # (E, H)
    p['rtmat'] = rmat.T                 # (H, E)

    blocks = []
    for _ in range(block_nums):
        blk = {}
        blk['ln1_g'] = jnp.ones((1, E), jnp.float32)
        blk['ln1_b'] = jnp.zeros((1, E), jnp.float32)
        wq, bq = _torch_linear_init(next(keys), E, E)
        wk, bk = _torch_linear_init(next(keys), E, E)
        wv, bv = _torch_linear_init(next(keys), E, E)
        blk['w_qkv'] = jnp.concatenate([wq.T, wk.T, wv.T], axis=1).astype(jnp.bfloat16)
        blk['b_qkv'] = jnp.concatenate([bq, bk, bv]).reshape(1, 3 * E)
        # nn.MultiheadAttention packed in_proj -> zero-padded per-output weights
        w_in, b_in = _torch_linear_init(next(keys), 3 * E, E)
        for name, sl in (('q', slice(0, E)), ('k', slice(E, 2 * E)), ('v', slice(2 * E, 3 * E))):
            w_pad = jnp.zeros((3 * E, E), jnp.float32).at[sl, :].set(w_in[sl].T)
            blk[f'w_in_{name}'] = w_pad.astype(jnp.bfloat16)
            blk[f'b_in_{name}'] = b_in[sl].reshape(1, E)
        w_out, b_out = _torch_linear_init(next(keys), E, E)
        blk['w_out'] = w_out.T.astype(jnp.bfloat16)
        blk['b_out'] = b_out.reshape(1, E)
        blk['ln2_g'] = jnp.ones((1, E), jnp.float32)
        blk['ln2_b'] = jnp.zeros((1, E), jnp.float32)
        w1, b1 = _torch_linear_init(next(keys), F, E)
        w2, b2 = _torch_linear_init(next(keys), E, F)
        blk['w_fc1'] = w1.T.astype(jnp.bfloat16)
        blk['b_fc1'] = b1.reshape(1, F)
        blk['w_fc2'] = w2.T.astype(jnp.bfloat16)
        blk['b_fc2'] = b2.reshape(1, E)
        blocks.append(blk)
    p['blocks'] = blocks

    wp1, bp1 = _torch_linear_init(next(keys), 128, 2 * E)
    wp2, bp2 = _torch_linear_init(next(keys), 64, 128)
    wp3, bp3 = _torch_linear_init(next(keys), 2, 64)
    p['w_pred1_h'] = wp1[:, :E].T.astype(jnp.bfloat16)   # (E, 128) — x1 half
    p['w_pred1_c'] = wp1[:, E:].T.astype(jnp.bfloat16)   # (E, 128) — conv1 half
    p['b_pred1'] = bp1.reshape(1, 128)
    p['w_pred2'] = wp2.T.astype(jnp.bfloat16)            # (128, 64)
    p['b_pred2'] = bp2.reshape(1, 64)
    # final 2-wide conv padded to 128 lanes (lane-dense store); wrapper slices [:2]
    w3 = jnp.zeros((64, 128), jnp.float32).at[:, :2].set(wp3.T)
    b3 = jnp.zeros((1, 128), jnp.float32).at[:, :2].set(bp3.reshape(1, 2))
    p['w_pred3'] = w3.astype(jnp.bfloat16)
    p['b_pred3'] = b3
    return p


# ---------------------------------------------------------------------------
# forward
# ---------------------------------------------------------------------------

@functools.partial(jax.jit, static_argnames=("num_heads", "if_resi"))
def transformer_forward(params, x, adj, *, num_heads=8, if_resi=False):
    # NOTE: `adj` is accepted but unused — exactly like the PyTorch forward.
    del adj
    B, C_in, N = x.shape
    tn = _choose_tile(N)

    x3 = jnp.transpose(x, (0, 2, 1))                 # (B, N, C_in): the only activation transpose
    scale, shift = bn_stats(x3, tn)                  # BatchNorm1d batch stats (train mode)
    h, c1 = stem(x3, scale, shift, params, tn)       # fused BN-apply + linear + conv1

    for blk in params['blocks']:
        h = transformer_block(h, blk, params['rmat'], params['rtmat'],
                              num_heads=num_heads, if_resi=if_resi, tn=tn)

    pred_pad = pred_head(h, c1, params, tn)          # (B, N, 128) lane-dense
    return jnp.transpose(pred_pad[:, :, :2], (0, 2, 1))   # (B, 2, N)


if __name__ == "__main__":
    B, in_dim, N = 2, 8, 16
    out_dim, num_heads, dim_feedforward, block_nums = 32, 8, 64, 3

    key = jax.random.PRNGKey(0)
    kx, ka, kp = jax.random.split(key, 3)
    x = jax.random.normal(kx, (B, in_dim, N), jnp.float32)
    adj = jax.random.normal(ka, (B, N, N), jnp.float32)   # unused (matches torch forward)
    params = init_params(kp, in_dim, out_dim, dim_feedforward, block_nums, num_heads)

    out = transformer_forward(params, x, adj, num_heads=num_heads, if_resi=False)
    out = jax.block_until_ready(out)
    assert out.shape == (B, 2, N), out.shape
    assert bool(jnp.all(jnp.isfinite(out)))
    print("KERNEL_OK")
</pallas_src>

<mosaic_0001>
module attributes {stable_mosaic.version = 11 : i64} {
  func.func @_stem_kernel(%arg0: i32, %arg1: memref<2x8x8xf32, #tpu.memory_space<vmem>>, %arg2: memref<1x8xf32, #tpu.memory_space<vmem>>, %arg3: memref<1x8xf32, #tpu.memory_space<vmem>>, %arg4: memref<8x32xbf16, #tpu.memory_space<vmem>>, %arg5: memref<1x32xf32, #tpu.memory_space<vmem>>, %arg6: memref<8x32xbf16, #tpu.memory_space<vmem>>, %arg7: memref<1x32xf32, #tpu.memory_space<vmem>>, %arg8: memref<2x8x32xf32, #tpu.memory_space<vmem>>, %arg9: memref<2x8x32xf32, #tpu.memory_space<vmem>>) attributes {dimension_semantics = [#tpu.dimension_semantics<parallel>], iteration_bounds = array<i64: 2>, scalar_prefetch = 0 : i64, scratch_operands = 0 : i64, tpu.core_type = #tpu.core_type<tc>, window_params = [{transform_indices = @transform_0, window_bounds = array<i64: 2, 8, 8>}, {pipeline_mode = #tpu.pipeline_mode<synchronous>, transform_indices = @transform_1, window_bounds = array<i64: 1, 8>}, {pipeline_mode = #tpu.pipeline_mode<synchronous>, transform_indices = @transform_2, window_bounds = array<i64: 1, 8>}, {pipeline_mode = #tpu.pipeline_mode<synchronous>, transform_indices = @transform_3, window_bounds = array<i64: 8, 32>}, {pipeline_mode = #tpu.pipeline_mode<synchronous>, transform_indices = @transform_4, window_bounds = array<i64: 1, 32>}, {pipeline_mode = #tpu.pipeline_mode<synchronous>, transform_indices = @transform_5, window_bounds = array<i64: 8, 32>}, {pipeline_mode = #tpu.pipeline_mode<synchronous>, transform_indices = @transform_6, window_bounds = array<i64: 1, 32>}, {transform_indices = @transform_7, window_bounds = array<i64: 2, 8, 32>}, {transform_indices = @transform_8, window_bounds = array<i64: 2, 8, 32>}]} {
    %c0 = arith.constant 0 : index
    %c0_0 = arith.constant 0 : index
    %c0_1 = arith.constant 0 : index
    %0 = vector.load %arg1[%c0, %c0_0, %c0_1] : memref<2x8x8xf32, #tpu.memory_space<vmem>>, vector<2x8x8xf32>
    %1 = vector.shape_cast %0 : vector<2x8x8xf32> to vector<16x8xf32>
    %c0_2 = arith.constant 0 : index
    %c0_3 = arith.constant 0 : index
    %2 = vector.load %arg2[%c0_2, %c0_3] : memref<1x8xf32, #tpu.memory_space<vmem>>, vector<1x8xf32>
    %3 = vector.broadcast %2 : vector<1x8xf32> to vector<16x8xf32>
    %4 = arith.mulf %1, %3 : vector<16x8xf32>
    %c0_4 = arith.constant 0 : index
    %c0_5 = arith.constant 0 : index
    %5 = vector.load %arg3[%c0_4, %c0_5] : memref<1x8xf32, #tpu.memory_space<vmem>>, vector<1x8xf32>
    %6 = vector.broadcast %5 : vector<1x8xf32> to vector<16x8xf32>
    %7 = arith.addf %4, %6 : vector<16x8xf32>
    %8 = arith.truncf %7 : vector<16x8xf32> to vector<16x8xbf16>
    %c0_6 = arith.constant 0 : index
    %c0_7 = arith.constant 0 : index
    %9 = vector.load %arg4[%c0_6, %c0_7] : memref<8x32xbf16, #tpu.memory_space<vmem>>, vector<8x32xbf16>
    %cst = arith.constant dense<0.000000e+00> : vector<16x32xf32>
    %10 = tpu.matmul %8, %9, %cst {dimension_numbers = #tpu.dot_dimension_numbers<[1], [0], [0], [1], [0, 0, 1, 1], [], []>} : vector<16x8xbf16>, vector<8x32xbf16>, vector<16x32xf32> -> vector<16x32xf32>
    %c0_8 = arith.constant 0 : index
    %c0_9 = arith.constant 0 : index
    %11 = vector.load %arg5[%c0_8, %c0_9] : memref<1x32xf32, #tpu.memory_space<vmem>>, vector<1x32xf32>
    %12 = vector.broadcast %11 : vector<1x32xf32> to vector<16x32xf32>
    %13 = arith.addf %10, %12 : vector<16x32xf32>
    %c0_10 = arith.constant 0 : index
    %c0_11 = arith.constant 0 : index
    %14 = vector.load %arg6[%c0_10, %c0_11] : memref<8x32xbf16, #tpu.memory_space<vmem>>, vector<8x32xbf16>
    %cst_12 = arith.constant dense<0.000000e+00> : vector<16x32xf32>
    %15 = tpu.matmul %8, %14, %cst_12 {dimension_numbers = #tpu.dot_dimension_numbers<[1], [0], [0], [1], [0, 0, 1, 1], [], []>} : vector<16x8xbf16>, vector<8x32xbf16>, vector<16x32xf32> -> vector<16x32xf32>
    %c0_13 = arith.constant 0 : index
    %c0_14 = arith.constant 0 : index
    %16 = vector.load %arg7[%c0_13, %c0_14] : memref<1x32xf32, #tpu.memory_space<vmem>>, vector<1x32xf32>
    %17 = vector.broadcast %16 : vector<1x32xf32> to vector<16x32xf32>
    %18 = arith.addf %15, %17 : vector<16x32xf32>
    %19 = vector.shape_cast %13 : vector<16x32xf32> to vector<2x8x32xf32>
    %c0_15 = arith.constant 0 : index
    %c0_16 = arith.constant 0 : index
    %c0_17 = arith.constant 0 : index
    %20 = vector.load %arg8[%c0_15, %c0_16, %c0_17] : memref<2x8x32xf32, #tpu.memory_space<vmem>>, vector<2x8x32xf32>
    tpu.vector_store %arg8[%c0_15, %c0_16, %c0_17], %19 {strides = array<i32>} : memref<2x8x32xf32, #tpu.memory_space<vmem>>, vector<2x8x32xf32>,
    %21 = vector.shape_cast %18 : vector<16x32xf32> to vector<2x8x32xf32>
    %c0_18 = arith.constant 0 : index
    %c0_19 = arith.constant 0 : index
    %c0_20 = arith.constant 0 : index
    %22 = vector.load %arg9[%c0_18, %c0_19, %c0_20] : memref<2x8x32xf32, #tpu.memory_space<vmem>>, vector<2x8x32xf32>
    tpu.vector_store %arg9[%c0_18, %c0_19, %c0_20], %21 {strides = array<i32>} : memref<2x8x32xf32, #tpu.memory_space<vmem>>, vector<2x8x32xf32>,
    return
  }
  func.func @transform_0(%arg0: i32) -> (i32, i32, i32) {
    %c0_i32 = arith.constant 0 : i32
    %c0_i32_0 = arith.constant 0 : i32
    %c0_i32_1 = arith.constant 0 : i32
    return %c0_i32, %arg0, %c0_i32_0 : i32, i32, i32
  }
  func.func @transform_1(%arg0: i32) -> (i32, i32) {
    %c0_i32 = arith.constant 0 : i32
    %c0_i32_0 = arith.constant 0 : i32
    %c0_i32_1 = arith.constant 0 : i32
    return %c0_i32, %c0_i32_0 : i32, i32
  }
  func.func @transform_2(%arg0: i32) -> (i32, i32) {
    %c0_i32 = arith.constant 0 : i32
    %c0_i32_0 = arith.constant 0 : i32
    %c0_i32_1 = arith.constant 0 : i32
    return %c0_i32, %c0_i32_0 : i32, i32
  }
  func.func @transform_3(%arg0: i32) -> (i32, i32) {
    %c0_i32 = arith.constant 0 : i32
    %c0_i32_0 = arith.constant 0 : i32
    %c0_i32_1 = arith.constant 0 : i32
    return %c0_i32, %c0_i32_0 : i32, i32
  }
  func.func @transform_4(%arg0: i32) -> (i32, i32) {
    %c0_i32 = arith.constant 0 : i32
    %c0_i32_0 = arith.constant 0 : i32
    %c0_i32_1 = arith.constant 0 : i32
    return %c0_i32, %c0_i32_0 : i32, i32
  }
  func.func @transform_5(%arg0: i32) -> (i32, i32) {
    %c0_i32 = arith.constant 0 : i32
    %c0_i32_0 = arith.constant 0 : i32
    %c0_i32_1 = arith.constant 0 : i32
    return %c0_i32, %c0_i32_0 : i32, i32
  }
  func.func @transform_6(%arg0: i32) -> (i32, i32) {
    %c0_i32 = arith.constant 0 : i32
    %c0_i32_0 = arith.constant 0 : i32
    %c0_i32_1 = arith.constant 0 : i32
    return %c0_i32, %c0_i32_0 : i32, i32
  }
  func.func @transform_7(%arg0: i32) -> (i32, i32, i32) {
    %c0_i32 = arith.constant 0 : i32
    %c0_i32_0 = arith.constant 0 : i32
    %c0_i32_1 = arith.constant 0 : i32
    return %c0_i32, %arg0, %c0_i32_0 : i32, i32, i32
  }
  func.func @transform_8(%arg0: i32) -> (i32, i32, i32) {
    %c0_i32 = arith.constant 0 : i32
    %c0_i32_0 = arith.constant 0 : i32
    %c0_i32_1 = arith.constant 0 : i32
    return %c0_i32, %arg0, %c0_i32_0 : i32, i32, i32
  }
}

module attributes {stable_mosaic.version = 11 : i64} {
  func.func @_bn_stats_kernel(%arg0: i32, %arg1: memref<2x8x8xf32, #tpu.memory_space<vmem>>, %arg2: memref<1x8xf32, #tpu.memory_space<vmem>>, %arg3: memref<1x8xf32, #tpu.memory_space<vmem>>, %arg4: memref<1x8xf32, #tpu.memory_space<vmem>>, %arg5: memref<1x8xf32, #tpu.memory_space<vmem>>) attributes {dimension_semantics = [#tpu.dimension_semantics<arbitrary>], iteration_bounds = array<i64: 2>, scalar_prefetch = 0 : i64, scratch_operands = 2 : i64, tpu.core_type = #tpu.core_type<tc>, window_params = [{transform_indices = @transform_0, window_bounds = array<i64: 2, 8, 8>}, {pipeline_mode = #tpu.pipeline_mode<synchronous>, transform_indices = @transform_1, window_bounds = array<i64: 1, 8>}, {pipeline_mode = #tpu.pipeline_mode<synchronous>, transform_indices = @transform_2, window_bounds = array<i64: 1, 8>}]} {
    %c0_i32 = arith.constant 0 : i32
    %0 = arith.cmpi eq, %arg0, %c0_i32 : i32
    %1 = arith.extui %0 : i1 to i32
    %c0_i32_0 = arith.constant 0 : i32
    %2 = arith.cmpi ne, %1, %c0_i32_0 : i32
    scf.if %2 {
      %cst_13 = arith.constant 0.000000e+00 : f32
      %19 = vector.broadcast %cst_13 : f32 to vector<1x8xf32>
      %c0_14 = arith.constant 0 : index
      %c0_15 = arith.constant 0 : index
      %20 = vector.load %arg4[%c0_14, %c0_15] : memref<1x8xf32, #tpu.memory_space<vmem>>, vector<1x8xf32>
      tpu.vector_store %arg4[%c0_14, %c0_15], %19 {strides = array<i32>} : memref<1x8xf32, #tpu.memory_space<vmem>>, vector<1x8xf32>,
      %cst_16 = arith.constant 0.000000e+00 : f32
      %21 = vector.broadcast %cst_16 : f32 to vector<1x8xf32>
      %c0_17 = arith.constant 0 : index
      %c0_18 = arith.constant 0 : index
      %22 = vector.load %arg5[%c0_17, %c0_18] : memref<1x8xf32, #tpu.memory_space<vmem>>, vector<1x8xf32>
      tpu.vector_store %arg5[%c0_17, %c0_18], %21 {strides = array<i32>} : memref<1x8xf32, #tpu.memory_space<vmem>>, vector<1x8xf32>,
    } else {
    }
    %c0 = arith.constant 0 : index
    %c0_1 = arith.constant 0 : index
    %c0_2 = arith.constant 0 : index
    %3 = vector.load %arg1[%c0, %c0_1, %c0_2] : memref<2x8x8xf32, #tpu.memory_space<vmem>>, vector<2x8x8xf32>
    %4 = vector.shape_cast %3 : vector<2x8x8xf32> to vector<16x8xf32>
    %c0_3 = arith.constant 0 : index
    %c0_4 = arith.constant 0 : index
    %5 = vector.load %arg4[%c0_3, %c0_4] : memref<1x8xf32, #tpu.memory_space<vmem>>, vector<1x8xf32>
    %cst = arith.constant dense<0.000000e+00> : vector<8xf32>
    %6 = vector.multi_reduction <add>, %4, %cst [0] : vector<16x8xf32> to vector<8xf32>
    %7 = vector.shape_cast %6 : vector<8xf32> to vector<1x8xf32>
    %8 = arith.addf %5, %7 : vector<1x8xf32>
    %c0_5 = arith.constant 0 : index
    %c0_6 = arith.constant 0 : index
    %9 = vector.load %arg4[%c0_5, %c0_6] : memref<1x8xf32, #tpu.memory_space<vmem>>, vector<1x8xf32>
    tpu.vector_store %arg4[%c0_5, %c0_6], %8 {strides = array<i32>} : memref<1x8xf32, #tpu.memory_space<vmem>>, vector<1x8xf32>,
    %c0_7 = arith.constant 0 : index
    %c0_8 = arith.constant 0 : index
    %10 = vector.load %arg5[%c0_7, %c0_8] : memref<1x8xf32, #tpu.memory_space<vmem>>, vector<1x8xf32>
    %11 = arith.mulf %4, %4 : vector<16x8xf32>
    %cst_9 = arith.constant dense<0.000000e+00> : vector<8xf32>
    %12 = vector.multi_reduction <add>, %11, %cst_9 [0] : vector<16x8xf32> to vector<8xf32>
    %13 = vector.shape_cast %12 : vector<8xf32> to vector<1x8xf32>
    %14 = arith.addf %10, %13 : vector<1x8xf32>
    %c0_10 = arith.constant 0 : index
    %c0_11 = arith.constant 0 : index
    %15 = vector.load %arg5[%c0_10, %c0_11] : memref<1x8xf32, #tpu.memory_space<vmem>>, vector<1x8xf32>
    tpu.vector_store %arg5[%c0_10, %c0_11], %14 {strides = array<i32>} : memref<1x8xf32, #tpu.memory_space<vmem>>, vector<1x8xf32>,
    %c1_i32 = arith.constant 1 : i32
    %16 = arith.cmpi eq, %arg0, %c1_i32 : i32
    %17 = arith.extui %16 : i1 to i32
    %c0_i32_12 = arith.constant 0 : i32
    %18 = arith.cmpi ne, %17, %c0_i32_12 : i32
    scf.if %18 {
      %c0_13 = arith.constant 0 : index
      %c0_14 = arith.constant 0 : index
      %19 = vector.load %arg4[%c0_13, %c0_14] : memref<1x8xf32, #tpu.memory_space<vmem>>, vector<1x8xf32>
      %cst_15 = arith.constant 3.125000e-02 : f32
      %20 = vector.broadcast %cst_15 : f32 to vector<1x8xf32>
      %21 = arith.mulf %19, %20 : vector<1x8xf32>
      %c0_16 = arith.constant 0 : index
      %c0_17 = arith.constant 0 : index
      %22 = vector.load %arg5[%c0_16, %c0_17] : memref<1x8xf32, #tpu.memory_space<vmem>>, vector<1x8xf32>
      %cst_18 = arith.constant 3.125000e-02 : f32
      %23 = vector.broadcast %cst_18 : f32 to vector<1x8xf32>
      %24 = arith.mulf %22, %23 : vector<1x8xf32>
      %25 = arith.mulf %21, %21 : vector<1x8xf32>
      %26 = arith.subf %24, %25 : vector<1x8xf32>
      %cst_19 = arith.constant 0.000000e+00 : f32
      %27 = vector.broadcast %cst_19 : f32 to vector<1x8xf32>
      %28 = arith.maximumf %26, %27 : vector<1x8xf32>
      %cst_20 = arith.constant 9.99999974E-6 : f32
      %29 = vector.broadcast %cst_20 : f32 to vector<1x8xf32>
      %30 = arith.addf %28, %29 : vector<1x8xf32>
      %31 = math.rsqrt %30 : vector<1x8xf32>
      %c0_21 = arith.constant 0 : index
      %c0_22 = arith.constant 0 : index
      %32 = vector.load %arg2[%c0_21, %c0_22] : memref<1x8xf32, #tpu.memory_space<vmem>>, vector<1x8xf32>
      tpu.vector_store %arg2[%c0_21, %c0_22], %31 {strides = array<i32>} : memref<1x8xf32, #tpu.memory_space<vmem>>, vector<1x8xf32>,
      %cst_23 = arith.constant 0.000000e+00 : f32
      %33 = vector.broadcast %cst_23 : f32 to vector<1x8xf32>
      %34 = arith.subf %33, %21 : vector<1x8xf32>
      %35 = arith.mulf %34, %31 : vector<1x8xf32>
      %c0_24 = arith.constant 0 : index
      %c0_25 = arith.constant 0 : index
      %36 = vector.load %arg3[%c0_24, %c0_25] : memref<1x8xf32, #tpu.memory_space<vmem>>, vector<1x8xf32>
      tpu.vector_store %arg3[%c0_24, %c0_25], %35 {strides = array<i32>} : memref<1x8xf32, #tpu.memory_space<vmem>>, vector<1x8xf32>,
    } else {
    }
    return
  }
  func.func @transform_0(%arg0: i32) -> (i32, i32, i32) {
    %c0_i32 = arith.constant 0 : i32
    %c0_i32_0 = arith.constant 0 : i32
    %c0_i32_1 = arith.constant 0 : i32
    return %c0_i32, %arg0, %c0_i32_0 : i32, i32, i32
  }
  func.func @transform_1(%arg0: i32) -> (i32, i32) {
    %c0_i32 = arith.constant 0 : i32
    %c0_i32_0 = arith.constant 0 : i32
    %c0_i32_1 = arith.constant 0 : i32
    return %c0_i32, %c0_i32_0 : i32, i32
  }
  func.func @transform_2(%arg0: i32) -> (i32, i32) {
    %c0_i32 = arith.constant 0 : i32
    %c0_i32_0 = arith.constant 0 : i32
    %c0_i32_1 = arith.constant 0 : i32
    return %c0_i32, %c0_i32_0 : i32, i32
  }
}

module attributes {stable_mosaic.version = 11 : i64} {
  func.func @_block_kernel(%arg0: i32, %arg1: memref<2x8x32xf32, #tpu.memory_space<vmem>>, %arg2: memref<1x32xf32, #tpu.memory_space<vmem>>, %arg3: memref<1x32xf32, #tpu.memory_space<vmem>>, %arg4: memref<32x96xbf16, #tpu.memory_space<vmem>>, %arg5: memref<1x96xf32, #tpu.memory_space<vmem>>, %arg6: memref<96x32xbf16, #tpu.memory_space<vmem>>, %arg7: memref<1x32xf32, #tpu.memory_space<vmem>>, %arg8: memref<96x32xbf16, #tpu.memory_space<vmem>>, %arg9: memref<1x32xf32, #tpu.memory_space<vmem>>, %arg10: memref<96x32xbf16, #tpu.memory_space<vmem>>, %arg11: memref<1x32xf32, #tpu.memory_space<vmem>>, %arg12: memref<32x32xbf16, #tpu.memory_space<vmem>>, %arg13: memref<1x32xf32, #tpu.memory_space<vmem>>, %arg14: memref<32x8xf32, #tpu.memory_space<vmem>>, %arg15: memref<8x32xf32, #tpu.memory_space<vmem>>, %arg16: memref<1x32xf32, #tpu.memory_space<vmem>>, %arg17: memref<1x32xf32, #tpu.memory_space<vmem>>, %arg18: memref<32x64xbf16, #tpu.memory_space<vmem>>, %arg19: memref<1x64xf32, #tpu.memory_space<vmem>>, %arg20: memref<64x32xbf16, #tpu.memory_space<vmem>>, %arg21: memref<1x32xf32, #tpu.memory_space<vmem>>, %arg22: memref<2x8x32xf32, #tpu.memory_space<vmem>>) attributes {dimension_semantics = [#tpu.dimension_semantics<parallel>], iteration_bounds = array<i64: 2>, scalar_prefetch = 0 : i64, scratch_operands = 0 : i64, tpu.core_type = #tpu.core_type<tc>, window_params = [{transform_indices = @transform_0, window_bounds = array<i64: 2, 8, 32>}, {pipeline_mode = #tpu.pipeline_mode<synchronous>, transform_indices = @transform_1, window_bounds = array<i64: 1, 32>}, {pipeline_mode = #tpu.pipeline_mode<synchronous>, transform_indices = @transform_2, window_bounds = array<i64: 1, 32>}, {pipeline_mode = #tpu.pipeline_mode<synchronous>, transform_indices = @transform_3, window_bounds = array<i64: 32, 96>}, {pipeline_mode = #tpu.pipeline_mode<synchronous>, transform_indices = @transform_4, window_bounds = array<i64: 1, 96>}, {pipeline_mode = #tpu.pipeline_mode<synchronous>, transform_indices = @transform_5, window_bounds = array<i64: 96, 32>}, {pipeline_mode = #tpu.pipeline_mode<synchronous>, transform_indices = @transform_6, window_bounds = array<i64: 1, 32>}, {pipeline_mode = #tpu.pipeline_mode<synchronous>, transform_indices = @transform_7, window_bounds = array<i64: 96, 32>}, {pipeline_mode = #tpu.pipeline_mode<synchronous>, transform_indices = @transform_8, window_bounds = array<i64: 1, 32>}, {pipeline_mode = #tpu.pipeline_mode<synchronous>, transform_indices = @transform_9, window_bounds = array<i64: 96, 32>}, {pipeline_mode = #tpu.pipeline_mode<synchronous>, transform_indices = @transform_10, window_bounds = array<i64: 1, 32>}, {pipeline_mode = #tpu.pipeline_mode<synchronous>, transform_indices = @transform_11, window_bounds = array<i64: 32, 32>}, {pipeline_mode = #tpu.pipeline_mode<synchronous>, transform_indices = @transform_12, window_bounds = array<i64: 1, 32>}, {pipeline_mode = #tpu.pipeline_mode<synchronous>, transform_indices = @transform_13, window_bounds = array<i64: 32, 8>}, {pipeline_mode = #tpu.pipeline_mode<synchronous>, transform_indices = @transform_14, window_bounds = array<i64: 8, 32>}, {pipeline_mode = #tpu.pipeline_mode<synchronous>, transform_indices = @transform_15, window_bounds = array<i64: 1, 32>}, {pipeline_mode = #tpu.pipeline_mode<synchronous>, transform_indices = @transform_16, window_bounds = array<i64: 1, 32>}, {pipeline_mode = #tpu.pipeline_mode<synchronous>, transform_indices = @transform_17, window_bounds = array<i64: 32, 64>}, {pipeline_mode = #tpu.pipeline_mode<synchronous>, transform_indices = @transform_18, window_bounds = array<i64: 1, 64>}, {pipeline_mode = #tpu.pipeline_mode<synchronous>, transform_indices = @transform_19, window_bounds = array<i64: 64, 32>}, {pipeline_mode = #tpu.pipeline_mode<synchronous>, transform_indices = @transform_20, window_bounds = array<i64: 1, 32>}, {transform_indices = @transform_21, window_bounds = array<i64: 2, 8, 32>}]} {
    %c0 = arith.constant 0 : index
    %c0_0 = arith.constant 0 : index
    %c0_1 = arith.constant 0 : index
    %0 = vector.load %arg1[%c0, %c0_0, %c0_1] : memref<2x8x32xf32, #tpu.memory_space<vmem>>, vector<2x8x32xf32>
    %1 = vector.shape_cast %0 : vector<2x8x32xf32> to vector<16x32xf32>
    %c0_2 = arith.constant 0 : index
    %c0_3 = arith.constant 0 : index
    %2 = vector.load %arg2[%c0_2, %c0_3] : memref<1x32xf32, #tpu.memory_space<vmem>>, vector<1x32xf32>
    %c0_4 = arith.constant 0 : index
    %c0_5 = arith.constant 0 : index
    %3 = vector.load %arg3[%c0_4, %c0_5] : memref<1x32xf32, #tpu.memory_space<vmem>>, vector<1x32xf32>
    %cst = arith.constant dense<0.000000e+00> : vector<16xf32>
    %4 = vector.multi_reduction <add>, %1, %cst [1] : vector<16x32xf32> to vector<16xf32>
    %5 = vector.shape_cast %4 : vector<16xf32> to vector<16x1xf32>
    %cst_6 = arith.constant 3.200000e+01 : f32
    %6 = vector.broadcast %cst_6 : f32 to vector<16x1xf32>
    %7 = arith.divf %5, %6 : vector<16x1xf32>
    %8 = vector.broadcast %7 : vector<16x1xf32> to vector<16x32xf32>
    %9 = arith.subf %1, %8 : vector<16x32xf32>
    %10 = arith.mulf %9, %9 : vector<16x32xf32>
    %cst_7 = arith.constant dense<0.000000e+00> : vector<16xf32>
    %11 = vector.multi_reduction <add>, %10, %cst_7 [1] : vector<16x32xf32> to vector<16xf32>
    %12 = vector.shape_cast %11 : vector<16xf32> to vector<16x1xf32>
    %cst_8 = arith.constant 3.200000e+01 : f32
    %13 = vector.broadcast %cst_8 : f32 to vector<16x1xf32>
    %14 = arith.divf %12, %13 : vector<16x1xf32>
    %cst_9 = arith.constant 9.99999974E-6 : f32
    %15 = vector.broadcast %cst_9 : f32 to vector<16x1xf32>
    %16 = arith.addf %14, %15 : vector<16x1xf32>
    %17 = math.rsqrt %16 : vector<16x1xf32>
    %18 = vector.broadcast %17 : vector<16x1xf32> to vector<16x32xf32>
    %19 = arith.mulf %9, %18 : vector<16x32xf32>
    %20 = vector.broadcast %2 : vector<1x32xf32> to vector<16x32xf32>
    %21 = arith.mulf %19, %20 : vector<16x32xf32>
    %22 = vector.broadcast %3 : vector<1x32xf32> to vector<16x32xf32>
    %23 = arith.addf %21, %22 : vector<16x32xf32>
    %24 = arith.truncf %23 : vector<16x32xf32> to vector<16x32xbf16>
    %c0_10 = arith.constant 0 : index
    %c0_11 = arith.constant 0 : index
    %25 = vector.load %arg4[%c0_10, %c0_11] : memref<32x96xbf16, #tpu.memory_space<vmem>>, vector<32x96xbf16>
    %cst_12 = arith.constant dense<0.000000e+00> : vector<16x96xf32>
    %26 = tpu.matmul %24, %25, %cst_12 {dimension_numbers = #tpu.dot_dimension_numbers<[1], [0], [0], [1], [0, 0, 1, 1], [], []>} : vector<16x32xbf16>, vector<32x96xbf16>, vector<16x96xf32> -> vector<16x96xf32>
    %c0_13 = arith.constant 0 : index
    %c0_14 = arith.constant 0 : index
    %27 = vector.load %arg5[%c0_13, %c0_14] : memref<1x96xf32, #tpu.memory_space<vmem>>, vector<1x96xf32>
    %28 = vector.broadcast %27 : vector<1x96xf32> to vector<16x96xf32>
    %29 = arith.addf %26, %28 : vector<16x96xf32>
    %cst_15 = arith.constant 0.000000e+00 : f32
    %30 = vector.broadcast %cst_15 : f32 to vector<16x96xf32>
    %31 = arith.maximumf %29, %30 : vector<16x96xf32>
    %32 = arith.truncf %31 : vector<16x96xf32> to vector<16x96xbf16>
    %c0_16 = arith.constant 0 : index
    %c0_17 = arith.constant 0 : index
    %33 = vector.load %arg6[%c0_16, %c0_17] : memref<96x32xbf16, #tpu.memory_space<vmem>>, vector<96x32xbf16>
    %cst_18 = arith.constant dense<0.000000e+00> : vector<16x32xf32>
    %34 = tpu.matmul %32, %33, %cst_18 {dimension_numbers = #tpu.dot_dimension_numbers<[1], [0], [0], [1], [0, 0, 1, 1], [], []>} : vector<16x96xbf16>, vector<96x32xbf16>, vector<16x32xf32> -> vector<16x32xf32>
    %c0_19 = arith.constant 0 : index
    %c0_20 = arith.constant 0 : index
    %35 = vector.load %arg7[%c0_19, %c0_20] : memref<1x32xf32, #tpu.memory_space<vmem>>, vector<1x32xf32>
    %36 = vector.broadcast %35 : vector<1x32xf32> to vector<16x32xf32>
    %37 = arith.addf %34, %36 : vector<16x32xf32>
    %c0_21 = arith.constant 0 : index
    %c0_22 = arith.constant 0 : index
    %38 = vector.load %arg8[%c0_21, %c0_22] : memref<96x32xbf16, #tpu.memory_space<vmem>>, vector<96x32xbf16>
    %cst_23 = arith.constant dense<0.000000e+00> : vector<16x32xf32>
    %39 = tpu.matmul %32, %38, %cst_23 {dimension_numbers = #tpu.dot_dimension_numbers<[1], [0], [0], [1], [0, 0, 1, 1], [], []>} : vector<16x96xbf16>, vector<96x32xbf16>, vector<16x32xf32> -> vector<16x32xf32>
    %c0_24 = arith.constant 0 : index
    %c0_25 = arith.constant 0 : index
    %40 = vector.load %arg9[%c0_24, %c0_25] : memref<1x32xf32, #tpu.memory_space<vmem>>, vector<1x32xf32>
    %41 = vector.broadcast %40 : vector<1x32xf32> to vector<16x32xf32>
    %42 = arith.addf %39, %41 : vector<16x32xf32>
    %c0_26 = arith.constant 0 : index
    %c0_27 = arith.constant 0 : index
    %43 = vector.load %arg10[%c0_26, %c0_27] : memref<96x32xbf16, #tpu.memory_space<vmem>>, vector<96x32xbf16>
    %cst_28 = arith.constant dense<0.000000e+00> : vector<16x32xf32>
    %44 = tpu.matmul %32, %43, %cst_28 {dimension_numbers = #tpu.dot_dimension_numbers<[1], [0], [0], [1], [0, 0, 1, 1], [], []>} : vector<16x96xbf16>, vector<96x32xbf16>, vector<16x32xf32> -> vector<16x32xf32>
    %c0_29 = arith.constant 0 : index
    %c0_30 = arith.constant 0 : index
    %45 = vector.load %arg11[%c0_29, %c0_30] : memref<1x32xf32, #tpu.memory_space<vmem>>, vector<1x32xf32>
    %46 = vector.broadcast %45 : vector<1x32xf32> to vector<16x32xf32>
    %47 = arith.addf %44, %46 : vector<16x32xf32>
    %c0_31 = arith.constant 0 : index
    %c0_32 = arith.constant 0 : index
    %48 = vector.load %arg14[%c0_31, %c0_32] : memref<32x8xf32, #tpu.memory_space<vmem>>, vector<32x8xf32>
    %c0_33 = arith.constant 0 : index
    %c0_34 = arith.constant 0 : index
    %49 = vector.load %arg15[%c0_33, %c0_34] : memref<8x32xf32, #tpu.memory_space<vmem>>, vector<8x32xf32>
    %50 = vector.extract_strided_slice %37 {offsets = [0, 0], sizes = [8, 32], strides = [1, 1]} : vector<16x32xf32> to vector<8x32xf32>
    %51 = vector.extract_strided_slice %37 {offsets = [8, 0], sizes = [8, 32], strides = [1, 1]} : vector<16x32xf32> to vector<8x32xf32>
    %52 = vector.extract_strided_slice %42 {offsets = [0, 0], sizes = [8, 32], strides = [1, 1]} : vector<16x32xf32> to vector<8x32xf32>
    %53 = vector.extract_strided_slice %42 {offsets = [8, 0], sizes = [8, 32], strides = [1, 1]} : vector<16x32xf32> to vector<8x32xf32>
    %54 = vector.extract_strided_slice %47 {offsets = [0, 0], sizes = [8, 32], strides = [1, 1]} : vector<16x32xf32> to vector<8x32xf32>
    %55 = vector.extract_strided_slice %47 {offsets = [8, 0], sizes = [8, 32], strides = [1, 1]} : vector<16x32xf32> to vector<8x32xf32>
    %56 = arith.mulf %50, %52 : vector<8x32xf32>
    %cst_35 = arith.constant dense<0.000000e+00> : vector<8x8xf32>
    %57 = tpu.matmul %56, %48, %cst_35 {dimension_numbers = #tpu.dot_dimension_numbers<[1], [0], [0], [1], [0, 0, 1, 1], [], []>} : vector<8x32xf32>, vector<32x8xf32>, vector<8x8xf32> -> vector<8x8xf32>
    %cst_36 = arith.constant 5.000000e-01 : f32
    %58 = vector.broadcast %cst_36 : f32 to vector<8x8xf32>
    %59 = arith.mulf %57, %58 : vector<8x8xf32>
    %60 = arith.mulf %50, %53 : vector<8x32xf32>
    %cst_37 = arith.constant dense<0.000000e+00> : vector<8x8xf32>
    %61 = tpu.matmul %60, %48, %cst_37 {dimension_numbers = #tpu.dot_dimension_numbers<[1], [0], [0], [1], [0, 0, 1, 1], [], []>} : vector<8x32xf32>, vector<32x8xf32>, vector<8x8xf32> -> vector<8x8xf32>
    %cst_38 = arith.constant 5.000000e-01 : f32
    %62 = vector.broadcast %cst_38 : f32 to vector<8x8xf32>
    %63 = arith.mulf %61, %62 : vector<8x8xf32>
    %64 = arith.maximumf %59, %63 : vector<8x8xf32>
    %65 = arith.subf %59, %64 : vector<8x8xf32>
    %66 = math.exp %65 : vector<8x8xf32>
    %67 = arith.subf %63, %64 : vector<8x8xf32>
    %68 = math.exp %67 : vector<8x8xf32>
    %69 = arith.addf %66, %68 : vector<8x8xf32>
    %70 = tpu.reciprocal %69 {approx = true} : vector<8x8xf32> -> vector<8x8xf32>
    %cst_39 = arith.constant 0.000000e+00 : f32
    %71 = vector.broadcast %cst_39 : f32 to vector<8x32xf32>
    %72 = arith.mulf %66, %70 : vector<8x8xf32>
    %cst_40 = arith.constant dense<0.000000e+00> : vector<8x32xf32>
    %73 = tpu.matmul %72, %49, %cst_40 {dimension_numbers = #tpu.dot_dimension_numbers<[1], [0], [0], [1], [0, 0, 1, 1], [], []>} : vector<8x8xf32>, vector<8x32xf32>, vector<8x32xf32> -> vector<8x32xf32>
    %74 = arith.mulf %73, %54 : vector<8x32xf32>
    %75 = arith.addf %71, %74 : vector<8x32xf32>
    %76 = arith.mulf %68, %70 : vector<8x8xf32>
    %cst_41 = arith.constant dense<0.000000e+00> : vector<8x32xf32>
    %77 = tpu.matmul %76, %49, %cst_41 {dimension_numbers = #tpu.dot_dimension_numbers<[1], [0], [0], [1], [0, 0, 1, 1], [], []>} : vector<8x8xf32>, vector<8x32xf32>, vector<8x32xf32> -> vector<8x32xf32>
    %78 = arith.mulf %77, %55 : vector<8x32xf32>
    %79 = arith.addf %75, %78 : vector<8x32xf32>
    %80 = arith.mulf %51, %52 : vector<8x32xf32>
    %cst_42 = arith.constant dense<0.000000e+00> : vector<8x8xf32>
    %81 = tpu.matmul %80, %48, %cst_42 {dimension_numbers = #tpu.dot_dimension_numbers<[1], [0], [0], [1], [0, 0, 1, 1], [], []>} : vector<8x32xf32>, vector<32x8xf32>, vector<8x8xf32> -> vector<8x8xf32>
    %cst_43 = arith.constant 5.000000e-01 : f32
    %82 = vector.broadcast %cst_43 : f32 to vector<8x8xf32>
    %83 = arith.mulf %81, %82 : vector<8x8xf32>
    %84 = arith.mulf %51, %53 : vector<8x32xf32>
    %cst_44 = arith.constant dense<0.000000e+00> : vector<8x8xf32>
    %85 = tpu.matmul %84, %48, %cst_44 {dimension_numbers = #tpu.dot_dimension_numbers<[1], [0], [0], [1], [0, 0, 1, 1], [], []>} : vector<8x32xf32>, vector<32x8xf32>, vector<8x8xf32> -> vector<8x8xf32>
    %cst_45 = arith.constant 5.000000e-01 : f32
    %86 = vector.broadcast %cst_45 : f32 to vector<8x8xf32>
    %87 = arith.mulf %85, %86 : vector<8x8xf32>
    %88 = arith.maximumf %83, %87 : vector<8x8xf32>
    %89 = arith.subf %83, %88 : vector<8x8xf32>
    %90 = math.exp %89 : vector<8x8xf32>
    %91 = arith.subf %87, %88 : vector<8x8xf32>
    %92 = math.exp %91 : vector<8x8xf32>
    %93 = arith.addf %90, %92 : vector<8x8xf32>
    %94 = tpu.reciprocal %93 {approx = true} : vector<8x8xf32> -> vector<8x8xf32>
    %cst_46 = arith.constant 0.000000e+00 : f32
    %95 = vector.broadcast %cst_46 : f32 to vector<8x32xf32>
    %96 = arith.mulf %90, %94 : vector<8x8xf32>
    %cst_47 = arith.constant dense<0.000000e+00> : vector<8x32xf32>
    %97 = tpu.matmul %96, %49, %cst_47 {dimension_numbers = #tpu.dot_dimension_numbers<[1], [0], [0], [1], [0, 0, 1, 1], [], []>} : vector<8x8xf32>, vector<8x32xf32>, vector<8x32xf32> -> vector<8x32xf32>
    %98 = arith.mulf %97, %54 : vector<8x32xf32>
    %99 = arith.addf %95, %98 : vector<8x32xf32>
    %100 = arith.mulf %92, %94 : vector<8x8xf32>
    %cst_48 = arith.constant dense<0.000000e+00> : vector<8x32xf32>
    %101 = tpu.matmul %100, %49, %cst_48 {dimension_numbers = #tpu.dot_dimension_numbers<[1], [0], [0], [1], [0, 0, 1, 1], [], []>} : vector<8x8xf32>, vector<8x32xf32>, vector<8x32xf32> -> vector<8x32xf32>
    %102 = arith.mulf %101, %55 : vector<8x32xf32>
    %103 = arith.addf %99, %102 : vector<8x32xf32>
    %104 = tpu.concatenate %79, %103 in 0 : vector<8x32xf32>, vector<8x32xf32> -> vector<16x32xf32>
    %105 = arith.truncf %104 : vector<16x32xf32> to vector<16x32xbf16>
    %c0_49 = arith.constant 0 : index
    %c0_50 = arith.constant 0 : index
    %106 = vector.load %arg12[%c0_49, %c0_50] : memref<32x32xbf16, #tpu.memory_space<vmem>>, vector<32x32xbf16>
    %cst_51 = arith.constant dense<0.000000e+00> : vector<16x32xf32>
    %107 = tpu.matmul %105, %106, %cst_51 {dimension_numbers = #tpu.dot_dimension_numbers<[1], [0], [0], [1], [0, 0, 1, 1], [], []>} : vector<16x32xbf16>, vector<32x32xbf16>, vector<16x32xf32> -> vector<16x32xf32>
    %c0_52 = arith.constant 0 : index
    %c0_53 = arith.constant 0 : index
    %108 = vector.load %arg13[%c0_52, %c0_53] : memref<1x32xf32, #tpu.memory_space<vmem>>, vector<1x32xf32>
    %109 = vector.broadcast %108 : vector<1x32xf32> to vector<16x32xf32>
    %110 = arith.addf %107, %109 : vector<16x32xf32>
    %c0_54 = arith.constant 0 : index
    %c0_55 = arith.constant 0 : index
    %111 = vector.load %arg16[%c0_54, %c0_55] : memref<1x32xf32, #tpu.memory_space<vmem>>, vector<1x32xf32>
    %c0_56 = arith.constant 0 : index
    %c0_57 = arith.constant 0 : index
    %112 = vector.load %arg17[%c0_56, %c0_57] : memref<1x32xf32, #tpu.memory_space<vmem>>, vector<1x32xf32>
    %cst_58 = arith.constant dense<0.000000e+00> : vector<16xf32>
    %113 = vector.multi_reduction <add>, %110, %cst_58 [1] : vector<16x32xf32> to vector<16xf32>
    %114 = vector.shape_cast %113 : vector<16xf32> to vector<16x1xf32>
    %cst_59 = arith.constant 3.200000e+01 : f32
    %115 = vector.broadcast %cst_59 : f32 to vector<16x1xf32>
    %116 = arith.divf %114, %115 : vector<16x1xf32>
    %117 = vector.broadcast %116 : vector<16x1xf32> to vector<16x32xf32>
    %118 = arith.subf %110, %117 : vector<16x32xf32>
    %119 = arith.mulf %118, %118 : vector<16x32xf32>
    %cst_60 = arith.constant dense<0.000000e+00> : vector<16xf32>
    %120 = vector.multi_reduction <add>, %119, %cst_60 [1] : vector<16x32xf32> to vector<16xf32>
    %121 = vector.shape_cast %120 : vector<16xf32> to vector<16x1xf32>
    %cst_61 = arith.constant 3.200000e+01 : f32
    %122 = vector.broadcast %cst_61 : f32 to vector<16x1xf32>
    %123 = arith.divf %121, %122 : vector<16x1xf32>
    %cst_62 = arith.constant 9.99999974E-6 : f32
    %124 = vector.broadcast %cst_62 : f32 to vector<16x1xf32>
    %125 = arith.addf %123, %124 : vector<16x1xf32>
    %126 = math.rsqrt %125 : vector<16x1xf32>
    %127 = vector.broadcast %126 : vector<16x1xf32> to vector<16x32xf32>
    %128 = arith.mulf %118, %127 : vector<16x32xf32>
    %129 = vector.broadcast %111 : vector<1x32xf32> to vector<16x32xf32>
    %130 = arith.mulf %128, %129 : vector<16x32xf32>
    %131 = vector.broadcast %112 : vector<1x32xf32> to vector<16x32xf32>
    %132 = arith.addf %130, %131 : vector<16x32xf32>
    %133 = arith.truncf %132 : vector<16x32xf32> to vector<16x32xbf16>
    %c0_63 = arith.constant 0 : index
    %c0_64 = arith.constant 0 : index
    %134 = vector.load %arg18[%c0_63, %c0_64] : memref<32x64xbf16, #tpu.memory_space<vmem>>, vector<32x64xbf16>
    %cst_65 = arith.constant dense<0.000000e+00> : vector<16x64xf32>
    %135 = tpu.matmul %133, %134, %cst_65 {dimension_numbers = #tpu.dot_dimension_numbers<[1], [0], [0], [1], [0, 0, 1, 1], [], []>} : vector<16x32xbf16>, vector<32x64xbf16>, vector<16x64xf32> -> vector<16x64xf32>
    %c0_66 = arith.constant 0 : index
    %c0_67 = arith.constant 0 : index
    %136 = vector.load %arg19[%c0_66, %c0_67] : memref<1x64xf32, #tpu.memory_space<vmem>>, vector<1x64xf32>
    %137 = vector.broadcast %136 : vector<1x64xf32> to vector<16x64xf32>
    %138 = arith.addf %135, %137 : vector<16x64xf32>
    %cst_68 = arith.constant 0.000000e+00 : f32
    %139 = vector.broadcast %cst_68 : f32 to vector<16x64xf32>
    %140 = arith.maximumf %138, %139 : vector<16x64xf32>
    %141 = arith.truncf %140 : vector<16x64xf32> to vector<16x64xbf16>
    %c0_69 = arith.constant 0 : index
    %c0_70 = arith.constant 0 : index
    %142 = vector.load %arg20[%c0_69, %c0_70] : memref<64x32xbf16, #tpu.memory_space<vmem>>, vector<64x32xbf16>
    %cst_71 = arith.constant dense<0.000000e+00> : vector<16x32xf32>
    %143 = tpu.matmul %141, %142, %cst_71 {dimension_numbers = #tpu.dot_dimension_numbers<[1], [0], [0], [1], [0, 0, 1, 1], [], []>} : vector<16x64xbf16>, vector<64x32xbf16>, vector<16x32xf32> -> vector<16x32xf32>
    %c0_72 = arith.constant 0 : index
    %c0_73 = arith.constant 0 : index
    %144 = vector.load %arg21[%c0_72, %c0_73] : memref<1x32xf32, #tpu.memory_space<vmem>>, vector<1x32xf32>
    %145 = vector.broadcast %144 : vector<1x32xf32> to vector<16x32xf32>
    %146 = arith.addf %143, %145 : vector<16x32xf32>
    %147 = vector.shape_cast %146 : vector<16x32xf32> to vector<2x8x32xf32>
    %c0_74 = arith.constant 0 : index
    %c0_75 = arith.constant 0 : index
    %c0_76 = arith.constant 0 : index
    %148 = vector.load %arg22[%c0_74, %c0_75, %c0_76] : memref<2x8x32xf32, #tpu.memory_space<vmem>>, vector<2x8x32xf32>
    tpu.vector_store %arg22[%c0_74, %c0_75, %c0_76], %147 {strides = array<i32>} : memref<2x8x32xf32, #tpu.memory_space<vmem>>, vector<2x8x32xf32>,
    return
  }
  func.func @transform_0(%arg0: i32) -> (i32, i32, i32) {
    %c0_i32 = arith.constant 0 : i32
    %c0_i32_0 = arith.constant 0 : i32
    %c0_i32_1 = arith.constant 0 : i32
    return %c0_i32, %arg0, %c0_i32_0 : i32, i32, i32
  }
  func.func @transform_1(%arg0: i32) -> (i32, i32) {
    %c0_i32 = arith.constant 0 : i32
    %c0_i32_0 = arith.constant 0 : i32
    %c0_i32_1 = arith.constant 0 : i32
    return %c0_i32, %c0_i32_0 : i32, i32
  }
  func.func @transform_2(%arg0: i32) -> (i32, i32) {
    %c0_i32 = arith.constant 0 : i32
    %c0_i32_0 = arith.constant 0 : i32
    %c0_i32_1 = arith.constant 0 : i32
    return %c0_i32, %c0_i32_0 : i32, i32
  }
  func.func @transform_3(%arg0: i32) -> (i32, i32) {
    %c0_i32 = arith.constant 0 : i32
    %c0_i32_0 = arith.constant 0 : i32
    %c0_i32_1 = arith.constant 0 : i32
    return %c0_i32, %c0_i32_0 : i32, i32
  }
  func.func @transform_4(%arg0: i32) -> (i32, i32) {
    %c0_i32 = arith.constant 0 : i32
    %c0_i32_0 = arith.constant 0 : i32
    %c0_i32_1 = arith.constant 0 : i32
    return %c0_i32, %c0_i32_0 : i32, i32
  }
  func.func @transform_5(%arg0: i32) -> (i32, i32) {
    %c0_i32 = arith.constant 0 : i32
    %c0_i32_0 = arith.constant 0 : i32
    %c0_i32_1 = arith.constant 0 : i32
    return %c0_i32, %c0_i32_0 : i32, i32
  }
  func.func @transform_6(%arg0: i32) -> (i32, i32) {
    %c0_i32 = arith.constant 0 : i32
    %c0_i32_0 = arith.constant 0 : i32
    %c0_i32_1 = arith.constant 0 : i32
    return %c0_i32, %c0_i32_0 : i32, i32
  }
  func.func @transform_7(%arg0: i32) -> (i32, i32) {
    %c0_i32 = arith.constant 0 : i32
    %c0_i32_0 = arith.constant 0 : i32
    %c0_i32_1 = arith.constant 0 : i32
    return %c0_i32, %c0_i32_0 : i32, i32
  }
  func.func @transform_8(%arg0: i32) -> (i32, i32) {
    %c0_i32 = arith.constant 0 : i32
    %c0_i32_0 = arith.constant 0 : i32
    %c0_i32_1 = arith.constant 0 : i32
    return %c0_i32, %c0_i32_0 : i32, i32
  }
  func.func @transform_9(%arg0: i32) -> (i32, i32) {
    %c0_i32 = arith.constant 0 : i32
    %c0_i32_0 = arith.constant 0 : i32
    %c0_i32_1 = arith.constant 0 : i32
    return %c0_i32, %c0_i32_0 : i32, i32
  }
  func.func @transform_10(%arg0: i32) -> (i32, i32) {
    %c0_i32 = arith.constant 0 : i32
    %c0_i32_0 = arith.constant 0 : i32
    %c0_i32_1 = arith.constant 0 : i32
    return %c0_i32, %c0_i32_0 : i32, i32
  }
  func.func @transform_11(%arg0: i32) -> (i32, i32) {
    %c0_i32 = arith.constant 0 : i32
    %c0_i32_0 = arith.constant 0 : i32
    %c0_i32_1 = arith.constant 0 : i32
    return %c0_i32, %c0_i32_0 : i32, i32
  }
  func.func @transform_12(%arg0: i32) -> (i32, i32) {
    %c0_i32 = arith.constant 0 : i32
    %c0_i32_0 = arith.constant 0 : i32
    %c0_i32_1 = arith.constant 0 : i32
    return %c0_i32, %c0_i32_0 : i32, i32
  }
  func.func @transform_13(%arg0: i32) -> (i32, i32) {
    %c0_i32 = arith.constant 0 : i32
    %c0_i32_0 = arith.constant 0 : i32
    %c0_i32_1 = arith.constant 0 : i32
    return %c0_i32, %c0_i32_0 : i32, i32
  }
  func.func @transform_14(%arg0: i32) -> (i32, i32) {
    %c0_i32 = arith.constant 0 : i32
    %c0_i32_0 = arith.constant 0 : i32
    %c0_i32_1 = arith.constant 0 : i32
    return %c0_i32, %c0_i32_0 : i32, i32
  }
  func.func @transform_15(%arg0: i32) -> (i32, i32) {
    %c0_i32 = arith.constant 0 : i32
    %c0_i32_0 = arith.constant 0 : i32
    %c0_i32_1 = arith.constant 0 : i32
    return %c0_i32, %c0_i32_0 : i32, i32
  }
  func.func @transform_16(%arg0: i32) -> (i32, i32) {
    %c0_i32 = arith.constant 0 : i32
    %c0_i32_0 = arith.constant 0 : i32
    %c0_i32_1 = arith.constant 0 : i32
    return %c0_i32, %c0_i32_0 : i32, i32
  }
  func.func @transform_17(%arg0: i32) -> (i32, i32) {
    %c0_i32 = arith.constant 0 : i32
    %c0_i32_0 = arith.constant 0 : i32
    %c0_i32_1 = arith.constant 0 : i32
    return %c0_i32, %c0_i32_0 : i32, i32
  }
  func.func @transform_18(%arg0: i32) -> (i32, i32) {
    %c0_i32 = arith.constant 0 : i32
    %c0_i32_0 = arith.constant 0 : i32
    %c0_i32_1 = arith.constant 0 : i32
    return %c0_i32, %c0_i32_0 : i32, i32
  }
  func.func @transform_19(%arg0: i32) -> (i32, i32) {
    %c0_i32 = arith.constant 0 : i32
    %c0_i32_0 = arith.constant 0 : i32
    %c0_i32_1 = arith.constant 0 : i32
    return %c0_i32, %c0_i32_0 : i32, i32
  }
  func.func @transform_20(%arg0: i32) -> (i32, i32) {
    %c0_i32 = arith.constant 0 : i32
    %c0_i32_0 = arith.constant 0 : i32
    %c0_i32_1 = arith.constant 0 : i32
    return %c0_i32, %c0_i32_0 : i32, i32
  }
  func.func @transform_21(%arg0: i32) -> (i32, i32, i32) {
    %c0_i32 = arith.constant 0 : i32
    %c0_i32_0 = arith.constant 0 : i32
    %c0_i32_1 = arith.constant 0 : i32
    return %c0_i32, %arg0, %c0_i32_0 : i32, i32, i32
  }
}

module attributes {stable_mosaic.version = 11 : i64} {
  func.func @_pred_kernel(%arg0: i32, %arg1: memref<2x8x32xf32, #tpu.memory_space<vmem>>, %arg2: memref<2x8x32xf32, #tpu.memory_space<vmem>>, %arg3: memref<32x128xbf16, #tpu.memory_space<vmem>>, %arg4: memref<32x128xbf16, #tpu.memory_space<vmem>>, %arg5: memref<1x128xf32, #tpu.memory_space<vmem>>, %arg6: memref<128x64xbf16, #tpu.memory_space<vmem>>, %arg7: memref<1x64xf32, #tpu.memory_space<vmem>>, %arg8: memref<64x128xbf16, #tpu.memory_space<vmem>>, %arg9: memref<1x128xf32, #tpu.memory_space<vmem>>, %arg10: memref<2x8x128xf32, #tpu.memory_space<vmem>>) attributes {dimension_semantics = [#tpu.dimension_semantics<parallel>], iteration_bounds = array<i64: 2>, scalar_prefetch = 0 : i64, scratch_operands = 0 : i64, tpu.core_type = #tpu.core_type<tc>, window_params = [{transform_indices = @transform_0, window_bounds = array<i64: 2, 8, 32>}, {transform_indices = @transform_1, window_bounds = array<i64: 2, 8, 32>}, {pipeline_mode = #tpu.pipeline_mode<synchronous>, transform_indices = @transform_2, window_bounds = array<i64: 32, 128>}, {pipeline_mode = #tpu.pipeline_mode<synchronous>, transform_indices = @transform_3, window_bounds = array<i64: 32, 128>}, {pipeline_mode = #tpu.pipeline_mode<synchronous>, transform_indices = @transform_4, window_bounds = array<i64: 1, 128>}, {pipeline_mode = #tpu.pipeline_mode<synchronous>, transform_indices = @transform_5, window_bounds = array<i64: 128, 64>}, {pipeline_mode = #tpu.pipeline_mode<synchronous>, transform_indices = @transform_6, window_bounds = array<i64: 1, 64>}, {pipeline_mode = #tpu.pipeline_mode<synchronous>, transform_indices = @transform_7, window_bounds = array<i64: 64, 128>}, {pipeline_mode = #tpu.pipeline_mode<synchronous>, transform_indices = @transform_8, window_bounds = array<i64: 1, 128>}, {transform_indices = @transform_9, window_bounds = array<i64: 2, 8, 128>}]} {
    %c0 = arith.constant 0 : index
    %c0_0 = arith.constant 0 : index
    %c0_1 = arith.constant 0 : index
    %0 = vector.load %arg1[%c0, %c0_0, %c0_1] : memref<2x8x32xf32, #tpu.memory_space<vmem>>, vector<2x8x32xf32>
    %1 = vector.shape_cast %0 : vector<2x8x32xf32> to vector<16x32xf32>
    %2 = arith.truncf %1 : vector<16x32xf32> to vector<16x32xbf16>
    %c0_2 = arith.constant 0 : index
    %c0_3 = arith.constant 0 : index
    %c0_4 = arith.constant 0 : index
    %3 = vector.load %arg2[%c0_2, %c0_3, %c0_4] : memref<2x8x32xf32, #tpu.memory_space<vmem>>, vector<2x8x32xf32>
    %4 = vector.shape_cast %3 : vector<2x8x32xf32> to vector<16x32xf32>
    %5 = arith.truncf %4 : vector<16x32xf32> to vector<16x32xbf16>
    %c0_5 = arith.constant 0 : index
    %c0_6 = arith.constant 0 : index
    %6 = vector.load %arg3[%c0_5, %c0_6] : memref<32x128xbf16, #tpu.memory_space<vmem>>, vector<32x128xbf16>
    %cst = arith.constant dense<0.000000e+00> : vector<16x128xf32>
    %7 = tpu.matmul %2, %6, %cst {dimension_numbers = #tpu.dot_dimension_numbers<[1], [0], [0], [1], [0, 0, 1, 1], [], []>} : vector<16x32xbf16>, vector<32x128xbf16>, vector<16x128xf32> -> vector<16x128xf32>
    %c0_7 = arith.constant 0 : index
    %c0_8 = arith.constant 0 : index
    %8 = vector.load %arg4[%c0_7, %c0_8] : memref<32x128xbf16, #tpu.memory_space<vmem>>, vector<32x128xbf16>
    %cst_9 = arith.constant dense<0.000000e+00> : vector<16x128xf32>
    %9 = tpu.matmul %5, %8, %cst_9 {dimension_numbers = #tpu.dot_dimension_numbers<[1], [0], [0], [1], [0, 0, 1, 1], [], []>} : vector<16x32xbf16>, vector<32x128xbf16>, vector<16x128xf32> -> vector<16x128xf32>
    %10 = arith.addf %7, %9 : vector<16x128xf32>
    %c0_10 = arith.constant 0 : index
    %c0_11 = arith.constant 0 : index
    %11 = vector.load %arg5[%c0_10, %c0_11] : memref<1x128xf32, #tpu.memory_space<vmem>>, vector<1x128xf32>
    %12 = vector.broadcast %11 : vector<1x128xf32> to vector<16x128xf32>
    %13 = arith.addf %10, %12 : vector<16x128xf32>
    %cst_12 = arith.constant 0.000000e+00 : f32
    %14 = vector.broadcast %cst_12 : f32 to vector<16x128xf32>
    %15 = arith.maximumf %13, %14 : vector<16x128xf32>
    %16 = arith.truncf %15 : vector<16x128xf32> to vector<16x128xbf16>
    %c0_13 = arith.constant 0 : index
    %c0_14 = arith.constant 0 : index
    %17 = vector.load %arg6[%c0_13, %c0_14] : memref<128x64xbf16, #tpu.memory_space<vmem>>, vector<128x64xbf16>
    %cst_15 = arith.constant dense<0.000000e+00> : vector<16x64xf32>
    %18 = tpu.matmul %16, %17, %cst_15 {dimension_numbers = #tpu.dot_dimension_numbers<[1], [0], [0], [1], [0, 0, 1, 1], [], []>} : vector<16x128xbf16>, vector<128x64xbf16>, vector<16x64xf32> -> vector<16x64xf32>
    %c0_16 = arith.constant 0 : index
    %c0_17 = arith.constant 0 : index
    %19 = vector.load %arg7[%c0_16, %c0_17] : memref<1x64xf32, #tpu.memory_space<vmem>>, vector<1x64xf32>
    %20 = vector.broadcast %19 : vector<1x64xf32> to vector<16x64xf32>
    %21 = arith.addf %18, %20 : vector<16x64xf32>
    %cst_18 = arith.constant 0.000000e+00 : f32
    %22 = vector.broadcast %cst_18 : f32 to vector<16x64xf32>
    %23 = arith.maximumf %21, %22 : vector<16x64xf32>
    %24 = arith.truncf %23 : vector<16x64xf32> to vector<16x64xbf16>
    %c0_19 = arith.constant 0 : index
    %c0_20 = arith.constant 0 : index
    %25 = vector.load %arg8[%c0_19, %c0_20] : memref<64x128xbf16, #tpu.memory_space<vmem>>, vector<64x128xbf16>
    %cst_21 = arith.constant dense<0.000000e+00> : vector<16x128xf32>
    %26 = tpu.matmul %24, %25, %cst_21 {dimension_numbers = #tpu.dot_dimension_numbers<[1], [0], [0], [1], [0, 0, 1, 1], [], []>} : vector<16x64xbf16>, vector<64x128xbf16>, vector<16x128xf32> -> vector<16x128xf32>
    %c0_22 = arith.constant 0 : index
    %c0_23 = arith.constant 0 : index
    %27 = vector.load %arg9[%c0_22, %c0_23] : memref<1x128xf32, #tpu.memory_space<vmem>>, vector<1x128xf32>
    %28 = vector.broadcast %27 : vector<1x128xf32> to vector<16x128xf32>
    %29 = arith.addf %26, %28 : vector<16x128xf32>
    %30 = vector.shape_cast %29 : vector<16x128xf32> to vector<2x8x128xf32>
    %c0_24 = arith.constant 0 : index
    %c0_25 = arith.constant 0 : index
    %c0_26 = arith.constant 0 : index
    %31 = vector.load %arg10[%c0_24, %c0_25, %c0_26] : memref<2x8x128xf32, #tpu.memory_space<vmem>>, vector<2x8x128xf32>
    tpu.vector_store %arg10[%c0_24, %c0_25, %c0_26], %30 {strides = array<i32>} : memref<2x8x128xf32, #tpu.memory_space<vmem>>, vector<2x8x128xf32>,
    return
  }
  func.func @transform_0(%arg0: i32) -> (i32, i32, i32) {
    %c0_i32 = arith.constant 0 : i32
    %c0_i32_0 = arith.constant 0 : i32
    %c0_i32_1 = arith.constant 0 : i32
    return %c0_i32, %arg0, %c0_i32_0 : i32, i32, i32
  }
  func.func @transform_1(%arg0: i32) -> (i32, i32, i32) {
    %c0_i32 = arith.constant 0 : i32
    %c0_i32_0 = arith.constant 0 : i32
    %c0_i32_1 = arith.constant 0 : i32
    return %c0_i32, %arg0, %c0_i32_0 : i32, i32, i32
  }
  func.func @transform_2(%arg0: i32) -> (i32, i32) {
    %c0_i32 = arith.constant 0 : i32
    %c0_i32_0 = arith.constant 0 : i32
    %c0_i32_1 = arith.constant 0 : i32
    return %c0_i32, %c0_i32_0 : i32, i32
  }
  func.func @transform_3(%arg0: i32) -> (i32, i32) {
    %c0_i32 = arith.constant 0 : i32
    %c0_i32_0 = arith.constant 0 : i32
    %c0_i32_1 = arith.constant 0 : i32
    return %c0_i32, %c0_i32_0 : i32, i32
  }
  func.func @transform_4(%arg0: i32) -> (i32, i32) {
    %c0_i32 = arith.constant 0 : i32
    %c0_i32_0 = arith.constant 0 : i32
    %c0_i32_1 = arith.constant 0 : i32
    return %c0_i32, %c0_i32_0 : i32, i32
  }
  func.func @transform_5(%arg0: i32) -> (i32, i32) {
    %c0_i32 = arith.constant 0 : i32
    %c0_i32_0 = arith.constant 0 : i32
    %c0_i32_1 = arith.constant 0 : i32
    return %c0_i32, %c0_i32_0 : i32, i32
  }
  func.func @transform_6(%arg0: i32) -> (i32, i32) {
    %c0_i32 = arith.constant 0 : i32
    %c0_i32_0 = arith.constant 0 : i32
    %c0_i32_1 = arith.constant 0 : i32
    return %c0_i32, %c0_i32_0 : i32, i32
  }
  func.func @transform_7(%arg0: i32) -> (i32, i32) {
    %c0_i32 = arith.constant 0 : i32
    %c0_i32_0 = arith.constant 0 : i32
    %c0_i32_1 = arith.constant 0 : i32
    return %c0_i32, %c0_i32_0 : i32, i32
  }
  func.func @transform_8(%arg0: i32) -> (i32, i32) {
    %c0_i32 = arith.constant 0 : i32
    %c0_i32_0 = arith.constant 0 : i32
    %c0_i32_1 = arith.constant 0 : i32
    return %c0_i32, %c0_i32_0 : i32, i32
  }
  func.func @transform_9(%arg0: i32) -> (i32, i32, i32) {
    %c0_i32 = arith.constant 0 : i32
    %c0_i32_0 = arith.constant 0 : i32
    %c0_i32_1 = arith.constant 0 : i32
    return %c0_i32, %arg0, %c0_i32_0 : i32, i32, i32
  }
}

</mosaic_0001>

<llo_original>
// kernel: transformer_forward.6
$region0: #{transformer_forward.6}
  #allocation0 [shape = 'u32[]', space=smem, size = 0x4, offset = 0x4, fixed_abs, tag = 'smem constant byte address 0x4 - core index']
  #allocation1 [shape = 'u32[144,128]{1,0:T(1,128)}', space=vmem, size = 0x12000, scoped, tag = 'internal scratch']
  #allocation2 [shape = 'f32[1,8]{1,0:T(1,128)}', space=vmem, size = 0x200, scoped, tag = 'scratch operand']
  #allocation3 [shape = 'f32[1,8]{1,0:T(1,128)}', space=vmem, size = 0x200, scoped, tag = 'scratch operand']
  %s0 = inlined_call_operand.vmem [shape: f32[2,16,8], index: 0, kind: input, shape index: {}]
  %s1 = inlined_call_operand.vmem [shape: f32[1,8], index: 1, kind: output, shape index: {0}]
  %s2 = inlined_call_operand.vmem [shape: f32[1,8], index: 2, kind: output, shape index: {1}]
  %3 = xla_tuple %s1, %s2
  %s4 = sld [smem:[#allocation0]]
  $region91: #{transformer_forward.6} parent=0
    _
  %s6 = ssub.s32 1, %s4
  %s7 = scalar_select 0, %s6, %s4
  $region1: #{transformer_forward.6} parent=0
    #allocation4 [shape = 'u8[16384]{0}', space=vmem, size = 0x4000, scoped, tag = 'input window, operand 0']
    loop: start=0, step=1, limit=4
    $region2: #{transformer_forward.6} parent=1 // loop_pre_header
      _
    $region3: #{transformer_forward.6} parent=1 // loop_header
      %s9 = sphi 0, %s13
      %p10 = scmp.ge.s32.totalorder %s9, 4
      %s19 = sphi 0, %s21
      %s22 = sphi 0, %s19
      %s23 = sphi 0, %s22
      %s39 = sphi 0, %s23
      %s43 = sphi 0, %s43
      %s45 = sphi 0, %s43
      %s46 = sphi 0, %s45
      %s60 = sphi 0, %s46
      %s64 = sphi 0, %s64
      %s66 = sphi 0, %s64
      %s67 = sphi 0, %s66
      %s81 = sphi 0, %s67
    $region4: #{transformer_forward.6} parent=1 // loop_header_branch
      %12 = sbr.rel (%p10) target = $region8
    $region5: #{transformer_forward.6} parent=1 // loop_body
      %s14 = ssub.s32 %s9, 1
      %s15 = ssub.s32 %s9, 2
      %s16 = sadd.s32 %s9, 1
      %s17 = ssub.s32 %s9, %s16
      %p18 = scmp.eq.s32.totalorder %s17, 0
      %s20 = sadd.s32 %s19, 1
      %s21 = scalar_select %p18, %s19, %s20
      %p24 = pneg %p18
      %p25 = scmp.eq.s32.totalorder %s9, 1
      %p26 = por %p24, %p25
      %p27 = scmp.ne.s32.totalorder %s19, %s22
      %p28 = scmp.eq.s32.totalorder %s9, 0
      %p29 = por %p27, %p28
      %p30 = scmp.ne.s32.totalorder %s19, %s22
      %p31 = scmp.eq.s32.totalorder %s14, 1
      %p32 = por %p30, %p31
      %p33 = scmp.ne.s32.totalorder %s22, %s23
      %p34 = scmp.eq.s32.totalorder %s14, 0
      %p35 = por %p33, %p34
      %p36 = scmp.ne.s32.totalorder %s22, %s23
      %p37 = scmp.eq.s32.totalorder %s15, 1
      %p38 = por %p36, %p37
      %p40 = scmp.ne.s32.totalorder %s23, %s39
      %p41 = scmp.eq.s32.totalorder %s15, 0
      %p42 = por %p40, %p41
      %s44 = sadd.s32 %s43, 1
      %p47 = scmp.eq.s32.totalorder %s9, 1
      %p48 = scmp.ne.s32.totalorder %s43, %s45
      %p49 = scmp.eq.s32.totalorder %s9, 0
      %p50 = por %p48, %p49
      %p51 = scmp.ne.s32.totalorder %s43, %s45
      %p52 = scmp.eq.s32.totalorder %s14, 1
      %p53 = por %p51, %p52
      %p54 = scmp.ne.s32.totalorder %s45, %s46
      %p55 = scmp.eq.s32.totalorder %s14, 0
      %p56 = por %p54, %p55
      %p57 = scmp.ne.s32.totalorder %s45, %s46
      %p58 = scmp.eq.s32.totalorder %s15, 1
      %p59 = por %p57, %p58
      %p61 = scmp.ne.s32.totalorder %s46, %s60
      %p62 = scmp.eq.s32.totalorder %s15, 0
      %p63 = por %p61, %p62
      %s65 = sadd.s32 %s64, 1
      %p68 = scmp.eq.s32.totalorder %s9, 1
      %p69 = scmp.ne.s32.totalorder %s64, %s66
      %p70 = scmp.eq.s32.totalorder %s9, 0
      %p71 = por %p69, %p70
      %p72 = scmp.ne.s32.totalorder %s64, %s66
      %p73 = scmp.eq.s32.totalorder %s14, 1
      %p74 = por %p72, %p73
      %p75 = scmp.ne.s32.totalorder %s66, %s67
      %p76 = scmp.eq.s32.totalorder %s14, 0
      %p77 = por %p75, %p76
      %p78 = scmp.ne.s32.totalorder %s66, %s67
      %p79 = scmp.eq.s32.totalorder %s15, 1
      %p80 = por %p78, %p79
      %p82 = scmp.ne.s32.totalorder %s67, %s81
      %p83 = scmp.eq.s32.totalorder %s15, 0
      %p84 = por %p82, %p83
      %p85 = scmp.le.s32.totalorder 1, %s9
      %p86 = scmp.lt.s32.totalorder %s9, 3
      %p87 = pnand %p85, %p86
      %p88 = pneg %p87
      // Predicated region
      $region9: #{transformer_forward.6} parent=5 // pred_check
        _
      $region10: #{transformer_forward.6} parent=5 // pred_check_branch
        %90 = sbr.rel (%p87) target = $region12
      $region11: #{transformer_forward.6} parent=5 // pred_region
        %s91 = ssub.s32 %s9, 1
      $region12: #{transformer_forward.6} parent=5 // pred_fallthru
        _
      %p92 = scmp.lt.s32.totalorder %s9, 2
      // Predicated region
      $region13: #{transformer_forward.6} parent=5 // pred_check
        %p93 = pneg %p92
      $region14: #{transformer_forward.6} parent=5 // pred_check_branch
        %95 = sbr.rel (%p93) target = $region16
      $region15: #{transformer_forward.6} parent=5 // pred_region
        // Predicated region
        $region17: #{transformer_forward.6} parent=15 // pred_check
          %p96 = pneg %p29
        $region18: #{transformer_forward.6} parent=15 // pred_check_branch
          %98 = sbr.rel (%p96) target = $region20
        $region19: #{transformer_forward.6} parent=15 // pred_region
          %s99 = sand.u32 %s19, 1
          %s100 = sand.u32 %s19, 1
          %s101 = smul.addr %s100, 16
          %s102 = scalar_lea.vmem [#allocation4], %s101
          %s103 = smul.addr %s9, 8
          %s104 = scalar_lea.vmem %s0, %s103
          // Predicated region
          $region21: #{transformer_forward.6} parent=19 // pred_check
            _
          $region22: #{transformer_forward.6} parent=19 // pred_check_branch
            %106 = sbr.rel (0) target = $region24
          $region23: #{transformer_forward.6} parent=19 // pred_region
            // Predicated region
            $region25: #{transformer_forward.6} parent=23 // pred_check
              _
            $region26: #{transformer_forward.6} parent=23 // pred_check_branch
              %108 = sbr.rel (0) target = $region28
            $region27: #{transformer_forward.6} parent=23 // pred_region
              // Predicated region
              $region40: #{transformer_forward.6} parent=27 // pred_check
                _
              $region41: #{transformer_forward.6} parent=27 // pred_check_branch
                %125 = sbr.rel (0) target = $region43
              $region42: #{transformer_forward.6} parent=27 // pred_region
                loop: start=0, step=1, limit=1
                $region44: #{transformer_forward.6} parent=42 // loop_pre_header
                  _
                $region45: #{transformer_forward.6} parent=42 // loop_header
                  %s127 = sphi 0, %s131
                  %p128 = scmp.ge.s32.totalorder %s127, 1
                  %s132 = sphi %s104, %s104
                  %s133 = sphi %s102, %s102
                $region46: #{transformer_forward.6} parent=42 // loop_header_branch
                  %130 = sbr.rel (%p128) target = $region50
                $region47: #{transformer_forward.6} parent=42 // loop_body
                  %v134 = vld [vmem:[%s132] sm:$0xff]
                  %135 = vst [vmem:[%s133] sm:$0xff] %v134
                  %v136 = vld [vmem:[%s132 + $0x10] sm:$0xff]
                  %137 = vst [vmem:[%s133 + $0x8] sm:$0xff] %v136
                $region48: #{transformer_forward.6} parent=42 // loop_footer
                  %s131 = sadd.s32 1, %s127
                $region49: #{transformer_forward.6} parent=42 // loop_footer_branch
                  %126 = sbr.rel target = $region45
                $region50: #{transformer_forward.6} parent=42 // loop_exit
                  _
              $region43: #{transformer_forward.6} parent=27 // pred_fallthru
                _
              // Predicated region
              $region51: #{transformer_forward.6} parent=27 // pred_check
                _
              $region52: #{transformer_forward.6} parent=27 // pred_check_branch
                %139 = sbr.rel target = $region54
              $region53: #{transformer_forward.6} parent=27 // pred_region
                _
              $region54: #{transformer_forward.6} parent=27 // pred_fallthru
                _
            $region28: #{transformer_forward.6} parent=23 // pred_fallthru
              _
            // Predicated region
            $region29: #{transformer_forward.6} parent=23 // pred_check
              _
            $region30: #{transformer_forward.6} parent=23 // pred_check_branch
              %110 = sbr.rel target = $region32
            $region31: #{transformer_forward.6} parent=23 // pred_region
              loop: start=0, step=1, limit=1
              $region33: #{transformer_forward.6} parent=31 // loop_pre_header
                _
              $region34: #{transformer_forward.6} parent=31 // loop_header
                %s113 = sphi 0, %s117
                %p114 = scmp.ge.s32.totalorder %s113, 1
                %s118 = sphi %s104, %s104
                %s119 = sphi %s102, %s102
              $region35: #{transformer_forward.6} parent=31 // loop_header_branch
                %116 = sbr.rel (%p114) target = $region39
              $region36: #{transformer_forward.6} parent=31 // loop_body
                %v120 = vld [vmem:[%s118] sm:$0xff]
                %121 = vst [vmem:[%s119] sm:$0xff] %v120
                %v122 = vld [vmem:[%s118 + $0x10] sm:$0xff]
                %123 = vst [vmem:[%s119 + $0x8] sm:$0xff] %v122
              $region37: #{transformer_forward.6} parent=31 // loop_footer
                %s117 = sadd.s32 1, %s113
              $region38: #{transformer_forward.6} parent=31 // loop_footer_branch
                %112 = sbr.rel target = $region34
              $region39: #{transformer_forward.6} parent=31 // loop_exit
                _
            $region32: #{transformer_forward.6} parent=23 // pred_fallthru
              _
          $region24: #{transformer_forward.6} parent=19 // pred_fallthru
            _
          %140 = vnop
        $region20: #{transformer_forward.6} parent=15 // pred_fallthru
          _
      $region16: #{transformer_forward.6} parent=5 // pred_fallthru
        _
      %p141 = scmp.le.s32.totalorder 1, %s9
      %p142 = scmp.lt.s32.totalorder %s9, 3
      %p143 = pnand %p141, %p142
      %p144 = pneg %p143
      // Predicated region
      $region55: #{transformer_forward.6} parent=5 // pred_check
        _
      $region56: #{transformer_forward.6} parent=5 // pred_check_branch
        %146 = sbr.rel (%p143) target = $region58
      $region57: #{transformer_forward.6} parent=5 // pred_region
        %s147 = ssub.s32 %s9, 1
        %s148 = sand.u32 %s22, 1
        %s149 = sand.u32 %s22, 1
        %s150 = smul.addr %s149, 16
        %s151 = scalar_lea.vmem [#allocation4], %s150
        // Predicated region
        $region59: #{transformer_forward.6} parent=57 // pred_check
          %p152 = pneg %p35
        $region60: #{transformer_forward.6} parent=57 // pred_check_branch
          %154 = sbr.rel (%p152) target = $region62
        $region61: #{transformer_forward.6} parent=57 // pred_region
          _
        $region62: #{transformer_forward.6} parent=57 // pred_fallthru
          _
        %s155 = sand.u32 %s22, 1
        %s156 = sand.u32 %s22, 1
        %s157 = smul.addr %s156, 16
        %s158 = scalar_lea.vmem [#allocation4], %s157
        %p159 = pneg %p35
        %p160 = pneg %p32
        %p161 = pneg %p56
        %p162 = pneg %p53
        %p163 = pneg %p77
        %p164 = pneg %p74
        %p165 = scmp.eq.s32.totalorder %s14, 0
        // Predicated region
        $region63: #{transformer_forward.6} parent=57 // pred_check
          %p166 = pneg %p165
        $region64: #{transformer_forward.6} parent=57 // pred_check_branch
          %168 = sbr.rel (%p166) target = $region66
        $region65: #{transformer_forward.6} parent=57 // pred_region
          %vm169 = vcmask 57344
          %170 = vst.msk [vmem:[#allocation2] sm:$0x1] %vm169, 0.0
          %171 = vst.msk [vmem:[#allocation3] sm:$0x1] %vm169, 0.0
        $region66: #{transformer_forward.6} parent=57 // pred_fallthru
          _
        %v172 = vld [vmem:[%s151] sm:$0xff]
        %v173 = vld [vmem:[%s151 + $0x8] sm:$0xff]
        %v174 = vld [vmem:[#allocation2] sm:$0x1]
        %vm175 = vcmask 64512
        %v176 = vsel %vm175, %v172, 0.0
        %v177 = vsel %vm175, %v173, 0.0
        %v178 = vadd.f32 %v176, %v177
        %v179 = vrot.slane %v178, 4
        %v180 = vadd.f32 %v178, %v179
        %v181 = vrot.slane %v180, 2
        %v182 = vadd.f32 %v180, %v181
        %v183 = vrot.slane %v182, 1
        %v184 = vadd.f32 %v182, %v183
        %v185 = vadd.f32 %v174, %v184
        %vm186 = vcmask 57344
        %187 = vst.msk [vmem:[#allocation2] sm:$0x1] %vm186, %v185
        %v188 = vld [vmem:[#allocation3] sm:$0x1]
        %v189 = vmul.f32 %v172, %v172
        %v190 = vmul.f32 %v173, %v173
        %v191 = vsel %vm175, %v189, 0.0
        %v192 = vsel %vm175, %v190, 0.0
        %v193 = vadd.f32 %v191, %v192
        %v194 = vrot.slane %v193, 4
        %v195 = vadd.f32 %v193, %v194
        %v196 = vrot.slane %v195, 2
        %v197 = vadd.f32 %v195, %v196
        %v198 = vrot.slane %v197, 1
        %v199 = vadd.f32 %v197, %v198
        %v200 = vadd.f32 %v188, %v199
        %201 = vst.msk [vmem:[#allocation3] sm:$0x1] %vm186, %v200
        %p202 = scmp.eq.s32.totalorder %s14, 1
        // Predicated region
        $region67: #{transformer_forward.6} parent=57 // pred_check
          %p203 = pneg %p202
        $region68: #{transformer_forward.6} parent=57 // pred_check_branch
          %205 = sbr.rel (%p203) target = $region70
        $region69: #{transformer_forward.6} parent=57 // pred_region
          %v206 = vld [vmem:[#allocation2] sm:$0x1]
          %v207 = vmul.f32 %v206, 0.03125
          %v208 = vld [vmem:[#allocation3] sm:$0x1]
          %v209 = vmul.f32 %v208, 0.03125
          %v210 = vmul.f32 %v207, %v207
          %v211 = vsub.f32 %v209, %v210
          %v212 = vmax.f32 %v211, 0.0
          %v213 = vadd.f32 %v212, 1e-05
          %v214 = vrsqrt.pop %v213
          %215 = vst.msk [vmem:[%s1] sm:$0x1] %vm186, %v214
          %v216 = vsub.f32 0.0, %v207
          %v217 = vmul.f32 %v216, %v214
          %218 = vst.msk [vmem:[%s2] sm:$0x1] %vm186, %v217
        $region70: #{transformer_forward.6} parent=57 // pred_fallthru
          _
        // Predicated region
        $region71: #{transformer_forward.6} parent=57 // pred_check
          %p219 = pneg %p53
        $region72: #{transformer_forward.6} parent=57 // pred_check_branch
          %221 = sbr.rel (%p219) target = $region74
        $region73: #{transformer_forward.6} parent=57 // pred_region
          _
        $region74: #{transformer_forward.6} parent=57 // pred_fallthru
          _
        // Predicated region
        $region75: #{transformer_forward.6} parent=57 // pred_check
          %p222 = pneg %p74
        $region76: #{transformer_forward.6} parent=57 // pred_check_branch
          %224 = sbr.rel (%p222) target = $region78
        $region77: #{transformer_forward.6} parent=57 // pred_region
          _
        $region78: #{transformer_forward.6} parent=57 // pred_fallthru
          _
        // Predicated region
        $region79: #{transformer_forward.6} parent=57 // pred_check
          %p225 = pneg %p53
        $region80: #{transformer_forward.6} parent=57 // pred_check_branch
          %227 = sbr.rel (%p225) target = $region82
        $region81: #{transformer_forward.6} parent=57 // pred_region
          _
        $region82: #{transformer_forward.6} parent=57 // pred_fallthru
          _
        // Predicated region
        $region83: #{transformer_forward.6} parent=57 // pred_check
          %p228 = pneg %p74
        $region84: #{transformer_forward.6} parent=57 // pred_check_branch
          %230 = sbr.rel (%p228) target = $region86
        $region85: #{transformer_forward.6} parent=57 // pred_region
          _
        $region86: #{transformer_forward.6} parent=57 // pred_fallthru
          _
      $region58: #{transformer_forward.6} parent=5 // pred_fallthru
        _
      %p231 = scmp.le.s32.totalorder 2, %s9
      // Predicated region
      $region87: #{transformer_forward.6} parent=5 // pred_check
        %p232 = pneg %p231
      $region88: #{transformer_forward.6} parent=5 // pred_check_branch
        %234 = sbr.rel (%p232) target = $region90
      $region89: #{transformer_forward.6} parent=5 // pred_region
        %s235 = ssub.s32 %s9, 2
      $region90: #{transformer_forward.6} parent=5 // pred_fallthru
        _
    $region6: #{transformer_forward.6} parent=1 // loop_footer
      %s13 = sadd.s32 1, %s9
    $region7: #{transformer_forward.6} parent=1 // loop_footer_branch
      %8 = sbr.rel target = $region3
    $region8: #{transformer_forward.6} parent=1 // loop_exit
      _

// kernel: transformer_forward.7
$region0: #{transformer_forward.7}
  #allocation0 [shape = 'u32[]', space=smem, size = 0x4, offset = 0x4, fixed_abs, tag = 'smem constant byte address 0x4 - core index']
  #allocation1 [shape = 'u32[144,128]{1,0:T(1,128)}', space=vmem, size = 0x12000, scoped, tag = 'internal scratch']
  %s0 = inlined_call_operand.vmem [shape: f32[2,16,8], index: 0, kind: input, shape index: {}]
  %s1 = inlined_call_operand.vmem [shape: f32[1,8], index: 1, kind: input, shape index: {}]
  %s2 = inlined_call_operand.vmem [shape: f32[1,8], index: 2, kind: input, shape index: {}]
  %s3 = inlined_call_operand.vmem [shape: bf16[8,32], index: 3, kind: input, shape index: {}]
  %s4 = inlined_call_operand.vmem [shape: f32[1,32], index: 4, kind: input, shape index: {}]
  %s5 = inlined_call_operand.vmem [shape: bf16[8,32], index: 5, kind: input, shape index: {}]
  %s6 = inlined_call_operand.vmem [shape: f32[1,32], index: 6, kind: input, shape index: {}]
  %s7 = inlined_call_operand.vmem [shape: f32[2,16,32], index: 7, kind: output, shape index: {0}]
  %s8 = inlined_call_operand.vmem [shape: f32[2,16,32], index: 8, kind: output, shape index: {1}]
  %9 = xla_tuple %s7, %s8
  %s10 = sld [smem:[#allocation0]]
  $region175: #{transformer_forward.7} parent=0
    _
  %s12 = ssub.s32 1, %s10
  %s13 = scalar_select 0, %s12, %s10
  $region1: #{transformer_forward.7} parent=0
    #allocation2 [shape = 'u8[16384]{0}', space=vmem, size = 0x4000, scoped, tag = 'input window, operand 0']
    #allocation3 [shape = 'u8[16384]{0}', space=vmem, size = 0x4000, scoped, tag = 'output window, operand 0']
    #allocation4 [shape = 'u8[16384]{0}', space=vmem, size = 0x4000, scoped, tag = 'output window, operand 1']
    loop: start=0, step=1, limit=4
    $region2: #{transformer_forward.7} parent=1 // loop_pre_header
      _
    $region3: #{transformer_forward.7} parent=1 // loop_header
      %s15 = sphi 0, %s19
      %p16 = scmp.ge.s32.totalorder %s15, 4
      %s25 = sphi 0, %s27
      %s28 = sphi 0, %s25
      %s29 = sphi 0, %s28
      %s45 = sphi 0, %s29
      %s49 = sphi 0, %s49
      %s51 = sphi 0, %s49
      %s52 = sphi 0, %s51
      %s66 = sphi 0, %s52
      %s70 = sphi 0, %s70
      %s72 = sphi 0, %s70
      %s73 = sphi 0, %s72
      %s87 = sphi 0, %s73
      %s91 = sphi 0, %s91
      %s93 = sphi 0, %s91
      %s94 = sphi 0, %s93
      %s108 = sphi 0, %s94
      %s112 = sphi 0, %s112
      %s114 = sphi 0, %s112
      %s115 = sphi 0, %s114
      %s129 = sphi 0, %s115
      %s133 = sphi 0, %s133
      %s135 = sphi 0, %s133
      %s136 = sphi 0, %s135
      %s150 = sphi 0, %s136
      %s154 = sphi 0, %s154
      %s156 = sphi 0, %s154
      %s157 = sphi 0, %s156
      %s171 = sphi 0, %s157
      %s177 = sphi 0, %s179
      %s180 = sphi 0, %s177
      %s181 = sphi 0, %s180
      %s197 = sphi 0, %s181
      %s203 = sphi 0, %s205
      %s206 = sphi 0, %s203
      %s207 = sphi 0, %s206
      %s223 = sphi 0, %s207
    $region4: #{transformer_forward.7} parent=1 // loop_header_branch
      %18 = sbr.rel (%p16) target = $region8
    $region5: #{transformer_forward.7} parent=1 // loop_body
      %s20 = ssub.s32 %s15, 1
      %s21 = ssub.s32 %s15, 2
      %s22 = sadd.s32 %s15, 1
      %s23 = ssub.s32 %s15, %s22
      %p24 = scmp.eq.s32.totalorder %s23, 0
      %s26 = sadd.s32 %s25, 1
      %s27 = scalar_select %p24, %s25, %s26
      %p30 = pneg %p24
      %p31 = scmp.eq.s32.totalorder %s15, 1
      %p32 = por %p30, %p31
      %p33 = scmp.ne.s32.totalorder %s25, %s28
      %p34 = scmp.eq.s32.totalorder %s15, 0
      %p35 = por %p33, %p34
      %p36 = scmp.ne.s32.totalorder %s25, %s28
      %p37 = scmp.eq.s32.totalorder %s20, 1
      %p38 = por %p36, %p37
      %p39 = scmp.ne.s32.totalorder %s28, %s29
      %p40 = scmp.eq.s32.totalorder %s20, 0
      %p41 = por %p39, %p40
      %p42 = scmp.ne.s32.totalorder %s28, %s29
      %p43 = scmp.eq.s32.totalorder %s21, 1
      %p44 = por %p42, %p43
      %p46 = scmp.ne.s32.totalorder %s29, %s45
      %p47 = scmp.eq.s32.totalorder %s21, 0
      %p48 = por %p46, %p47
      %s50 = sadd.s32 %s49, 1
      %p53 = scmp.eq.s32.totalorder %s15, 1
      %p54 = scmp.ne.s32.totalorder %s49, %s51
      %p55 = scmp.eq.s32.totalorder %s15, 0
      %p56 = por %p54, %p55
      %p57 = scmp.ne.s32.totalorder %s49, %s51
      %p58 = scmp.eq.s32.totalorder %s20, 1
      %p59 = por %p57, %p58
      %p60 = scmp.ne.s32.totalorder %s51, %s52
      %p61 = scmp.eq.s32.totalorder %s20, 0
      %p62 = por %p60, %p61
      %p63 = scmp.ne.s32.totalorder %s51, %s52
      %p64 = scmp.eq.s32.totalorder %s21, 1
      %p65 = por %p63, %p64
      %p67 = scmp.ne.s32.totalorder %s52, %s66
      %p68 = scmp.eq.s32.totalorder %s21, 0
      %p69 = por %p67, %p68
      %s71 = sadd.s32 %s70, 1
      %p74 = scmp.eq.s32.totalorder %s15, 1
      %p75 = scmp.ne.s32.totalorder %s70, %s72
      %p76 = scmp.eq.s32.totalorder %s15, 0
      %p77 = por %p75, %p76
      %p78 = scmp.ne.s32.totalorder %s70, %s72
      %p79 = scmp.eq.s32.totalorder %s20, 1
      %p80 = por %p78, %p79
      %p81 = scmp.ne.s32.totalorder %s72, %s73
      %p82 = scmp.eq.s32.totalorder %s20, 0
      %p83 = por %p81, %p82
      %p84 = scmp.ne.s32.totalorder %s72, %s73
      %p85 = scmp.eq.s32.totalorder %s21, 1
      %p86 = por %p84, %p85
      %p88 = scmp.ne.s32.totalorder %s73, %s87
      %p89 = scmp.eq.s32.totalorder %s21, 0
      %p90 = por %p88, %p89
      %s92 = sadd.s32 %s91, 1
      %p95 = scmp.eq.s32.totalorder %s15, 1
      %p96 = scmp.ne.s32.totalorder %s91, %s93
      %p97 = scmp.eq.s32.totalorder %s15, 0
      %p98 = por %p96, %p97
      %p99 = scmp.ne.s32.totalorder %s91, %s93
      %p100 = scmp.eq.s32.totalorder %s20, 1
      %p101 = por %p99, %p100
      %p102 = scmp.ne.s32.totalorder %s93, %s94
      %p103 = scmp.eq.s32.totalorder %s20, 0
      %p104 = por %p102, %p103
      %p105 = scmp.ne.s32.totalorder %s93, %s94
      %p106 = scmp.eq.s32.totalorder %s21, 1
      %p107 = por %p105, %p106
      %p109 = scmp.ne.s32.totalorder %s94, %s108
      %p110 = scmp.eq.s32.totalorder %s21, 0
      %p111 = por %p109, %p110
      %s113 = sadd.s32 %s112, 1
      %p116 = scmp.eq.s32.totalorder %s15, 1
      %p117 = scmp.ne.s32.totalorder %s112, %s114
      %p118 = scmp.eq.s32.totalorder %s15, 0
      %p119 = por %p117, %p118
      %p120 = scmp.ne.s32.totalorder %s112, %s114
      %p121 = scmp.eq.s32.totalorder %s20, 1
      %p122 = por %p120, %p121
      %p123 = scmp.ne.s32.totalorder %s114, %s115
      %p124 = scmp.eq.s32.totalorder %s20, 0
      %p125 = por %p123, %p124
      %p126 = scmp.ne.s32.totalorder %s114, %s115
      %p127 = scmp.eq.s32.totalorder %s21, 1
      %p128 = por %p126, %p127
      %p130 = scmp.ne.s32.totalorder %s115, %s129
      %p131 = scmp.eq.s32.totalorder %s21, 0
      %p132 = por %p130, %p131
      %s134 = sadd.s32 %s133, 1
      %p137 = scmp.eq.s32.totalorder %s15, 1
      %p138 = scmp.ne.s32.totalorder %s133, %s135
      %p139 = scmp.eq.s32.totalorder %s15, 0
      %p140 = por %p138, %p139
      %p141 = scmp.ne.s32.totalorder %s133, %s135
      %p142 = scmp.eq.s32.totalorder %s20, 1
      %p143 = por %p141, %p142
      %p144 = scmp.ne.s32.totalorder %s135, %s136
      %p145 = scmp.eq.s32.totalorder %s20, 0
      %p146 = por %p144, %p145
      %p147 = scmp.ne.s32.totalorder %s135, %s136
      %p148 = scmp.eq.s32.totalorder %s21, 1
      %p149 = por %p147, %p148
      %p151 = scmp.ne.s32.totalorder %s136, %s150
      %p152 = scmp.eq.s32.totalorder %s21, 0
      %p153 = por %p151, %p152
      %s155 = sadd.s32 %s154, 1
      %p158 = scmp.eq.s32.totalorder %s15, 1
      %p159 = scmp.ne.s32.totalorder %s154, %s156
      %p160 = scmp.eq.s32.totalorder %s15, 0
      %p161 = por %p159, %p160
      %p162 = scmp.ne.s32.totalorder %s154, %s156
      %p163 = scmp.eq.s32.totalorder %s20, 1
      %p164 = por %p162, %p163
      %p165 = scmp.ne.s32.totalorder %s156, %s157
      %p166 = scmp.eq.s32.totalorder %s20, 0
      %p167 = por %p165, %p166
      %p168 = scmp.ne.s32.totalorder %s156, %s157
      %p169 = scmp.eq.s32.totalorder %s21, 1
      %p170 = por %p168, %p169
      %p172 = scmp.ne.s32.totalorder %s157, %s171
      %p173 = scmp.eq.s32.totalorder %s21, 0
      %p174 = por %p172, %p173
      %s175 = ssub.s32 %s15, %s22
      %p176 = scmp.eq.s32.totalorder %s175, 0
      %s178 = sadd.s32 %s177, 1
      %s179 = scalar_select %p176, %s177, %s178
      %p182 = pneg %p176
      %p183 = scmp.eq.s32.totalorder %s15, 1
      %p184 = por %p182, %p183
      %p185 = scmp.ne.s32.totalorder %s177, %s180
      %p186 = scmp.eq.s32.totalorder %s15, 0
      %p187 = por %p185, %p186
      %p188 = scmp.ne.s32.totalorder %s177, %s180
      %p189 = scmp.eq.s32.totalorder %s20, 1
      %p190 = por %p188, %p189
      %p191 = scmp.ne.s32.totalorder %s180, %s181
      %p192 = scmp.eq.s32.totalorder %s20, 0
      %p193 = por %p191, %p192
      %p194 = scmp.ne.s32.totalorder %s180, %s181
      %p195 = scmp.eq.s32.totalorder %s21, 1
      %p196 = por %p194, %p195
      %p198 = scmp.ne.s32.totalorder %s181, %s197
      %p199 = scmp.eq.s32.totalorder %s21, 0
      %p200 = por %p198, %p199
      %s201 = ssub.s32 %s15, %s22
      %p202 = scmp.eq.s32.totalorder %s201, 0
      %s204 = sadd.s32 %s203, 1
      %s205 = scalar_select %p202, %s203, %s204
      %p208 = pneg %p202
      %p209 = scmp.eq.s32.totalorder %s15, 1
      %p210 = por %p208, %p209
      %p211 = scmp.ne.s32.totalorder %s203, %s206
      %p212 = scmp.eq.s32.totalorder %s15, 0
      %p213 = por %p211, %p212
      %p214 = scmp.ne.s32.totalorder %s203, %s206
      %p215 = scmp.eq.s32.totalorder %s20, 1
      %p216 = por %p214, %p215
      %p217 = scmp.ne.s32.totalorder %s206, %s207
      %p218 = scmp.eq.s32.totalorder %s20, 0
      %p219 = por %p217, %p218
      %p220 = scmp.ne.s32.totalorder %s206, %s207
      %p221 = scmp.eq.s32.totalorder %s21, 1
      %p222 = por %p220, %p221
      %p224 = scmp.ne.s32.totalorder %s207, %s223
      %p225 = scmp.eq.s32.totalorder %s21, 0
      %p226 = por %p224, %p225
      %p227 = scmp.le.s32.totalorder 1, %s15
      %p228 = scmp.lt.s32.totalorder %s15, 3
      %p229 = pnand %p227, %p228
      %p230 = pneg %p229
      // Predicated region
      $region9: #{transformer_forward.7} parent=5 // pred_check
        _
      $region10: #{transformer_forward.7} parent=5 // pred_check_branch
        %232 = sbr.rel (%p229) target = $region12
      $region11: #{transformer_forward.7} parent=5 // pred_region
        %s233 = ssub.s32 %s15, 1
        // Predicated region
        $region13: #{transformer_forward.7} parent=11 // pred_check
          %p234 = pneg %p62
        $region14: #{transformer_forward.7} parent=11 // pred_check_branch
          %236 = sbr.rel (%p234) target = $region16
        $region15: #{transformer_forward.7} parent=11 // pred_region
          _
        $region16: #{transformer_forward.7} parent=11 // pred_fallthru
          _
        // Predicated region
        $region17: #{transformer_forward.7} parent=11 // pred_check
          %p237 = pneg %p83
        $region18: #{transformer_forward.7} parent=11 // pred_check_branch
          %239 = sbr.rel (%p237) target = $region20
        $region19: #{transformer_forward.7} parent=11 // pred_region
          _
        $region20: #{transformer_forward.7} parent=11 // pred_fallthru
          _
        // Predicated region
        $region21: #{transformer_forward.7} parent=11 // pred_check
          %p240 = pneg %p104
        $region22: #{transformer_forward.7} parent=11 // pred_check_branch
          %242 = sbr.rel (%p240) target = $region24
        $region23: #{transformer_forward.7} parent=11 // pred_region
          _
        $region24: #{transformer_forward.7} parent=11 // pred_fallthru
          _
        // Predicated region
        $region25: #{transformer_forward.7} parent=11 // pred_check
          %p243 = pneg %p125
        $region26: #{transformer_forward.7} parent=11 // pred_check_branch
          %245 = sbr.rel (%p243) target = $region28
        $region27: #{transformer_forward.7} parent=11 // pred_region
          _
        $region28: #{transformer_forward.7} parent=11 // pred_fallthru
          _
        // Predicated region
        $region29: #{transformer_forward.7} parent=11 // pred_check
          %p246 = pneg %p146
        $region30: #{transformer_forward.7} parent=11 // pred_check_branch
          %248 = sbr.rel (%p246) target = $region32
        $region31: #{transformer_forward.7} parent=11 // pred_region
          _
        $region32: #{transformer_forward.7} parent=11 // pred_fallthru
          _
        // Predicated region
        $region33: #{transformer_forward.7} parent=11 // pred_check
          %p249 = pneg %p167
        $region34: #{transformer_forward.7} parent=11 // pred_check_branch
          %251 = sbr.rel (%p249) target = $region36
        $region35: #{transformer_forward.7} parent=11 // pred_region
          _
        $region36: #{transformer_forward.7} parent=11 // pred_fallthru
          _
      $region12: #{transformer_forward.7} parent=5 // pred_fallthru
        _
      %p252 = scmp.lt.s32.totalorder %s15, 2
      // Predicated region
      $region37: #{transformer_forward.7} parent=5 // pred_check
        %p253 = pneg %p252
      $region38: #{transformer_forward.7} parent=5 // pred_check_branch
        %255 = sbr.rel (%p253) target = $region40
      $region39: #{transformer_forward.7} parent=5 // pred_region
        // Predicated region
        $region41: #{transformer_forward.7} parent=39 // pred_check
          %p256 = pneg %p35
        $region42: #{transformer_forward.7} parent=39 // pred_check_branch
          %258 = sbr.rel (%p256) target = $region44
        $region43: #{transformer_forward.7} parent=39 // pred_region
          %s259 = sand.u32 %s25, 1
          %s260 = sand.u32 %s25, 1
          %s261 = smul.addr %s260, 16
          %s262 = scalar_lea.vmem [#allocation2], %s261
          %s263 = smul.addr %s15, 8
          %s264 = scalar_lea.vmem %s0, %s263
          // Predicated region
          $region45: #{transformer_forward.7} parent=43 // pred_check
            _
          $region46: #{transformer_forward.7} parent=43 // pred_check_branch
            %266 = sbr.rel (0) target = $region48
          $region47: #{transformer_forward.7} parent=43 // pred_region
            // Predicated region
            $region49: #{transformer_forward.7} parent=47 // pred_check
              _
            $region50: #{transformer_forward.7} parent=47 // pred_check_branch
              %268 = sbr.rel (0) target = $region52
            $region51: #{transformer_forward.7} parent=47 // pred_region
              // Predicated region
              $region64: #{transformer_forward.7} parent=51 // pred_check
                _
              $region65: #{transformer_forward.7} parent=51 // pred_check_branch
                %285 = sbr.rel (0) target = $region67
              $region66: #{transformer_forward.7} parent=51 // pred_region
                loop: start=0, step=1, limit=1
                $region68: #{transformer_forward.7} parent=66 // loop_pre_header
                  _
                $region69: #{transformer_forward.7} parent=66 // loop_header
                  %s287 = sphi 0, %s291
                  %p288 = scmp.ge.s32.totalorder %s287, 1
                  %s292 = sphi %s264, %s264
                  %s293 = sphi %s262, %s262
                $region70: #{transformer_forward.7} parent=66 // loop_header_branch
                  %290 = sbr.rel (%p288) target = $region74
                $region71: #{transformer_forward.7} parent=66 // loop_body
                  %v294 = vld [vmem:[%s292] sm:$0xff]
                  %295 = vst [vmem:[%s293] sm:$0xff] %v294
                  %v296 = vld [vmem:[%s292 + $0x10] sm:$0xff]
                  %297 = vst [vmem:[%s293 + $0x8] sm:$0xff] %v296
                $region72: #{transformer_forward.7} parent=66 // loop_footer
                  %s291 = sadd.s32 1, %s287
                $region73: #{transformer_forward.7} parent=66 // loop_footer_branch
                  %286 = sbr.rel target = $region69
                $region74: #{transformer_forward.7} parent=66 // loop_exit
                  _
              $region67: #{transformer_forward.7} parent=51 // pred_fallthru
                _
              // Predicated region
              $region75: #{transformer_forward.7} parent=51 // pred_check
                _
              $region76: #{transformer_forward.7} parent=51 // pred_check_branch
                %299 = sbr.rel target = $region78
              $region77: #{transformer_forward.7} parent=51 // pred_region
                _
              $region78: #{transformer_forward.7} parent=51 // pred_fallthru
                _
            $region52: #{transformer_forward.7} parent=47 // pred_fallthru
              _
            // Predicated region
            $region53: #{transformer_forward.7} parent=47 // pred_check
              _
            $region54: #{transformer_forward.7} parent=47 // pred_check_branch
              %270 = sbr.rel target = $region56
            $region55: #{transformer_forward.7} parent=47 // pred_region
              loop: start=0, step=1, limit=1
              $region57: #{transformer_forward.7} parent=55 // loop_pre_header
                _
              $region58: #{transformer_forward.7} parent=55 // loop_header
                %s273 = sphi 0, %s277
                %p274 = scmp.ge.s32.totalorder %s273, 1
                %s278 = sphi %s264, %s264
                %s279 = sphi %s262, %s262
              $region59: #{transformer_forward.7} parent=55 // loop_header_branch
                %276 = sbr.rel (%p274) target = $region63
              $region60: #{transformer_forward.7} parent=55 // loop_body
                %v280 = vld [vmem:[%s278] sm:$0xff]
                %281 = vst [vmem:[%s279] sm:$0xff] %v280
                %v282 = vld [vmem:[%s278 + $0x10] sm:$0xff]
                %283 = vst [vmem:[%s279 + $0x8] sm:$0xff] %v282
              $region61: #{transformer_forward.7} parent=55 // loop_footer
                %s277 = sadd.s32 1, %s273
              $region62: #{transformer_forward.7} parent=55 // loop_footer_branch
                %272 = sbr.rel target = $region58
              $region63: #{transformer_forward.7} parent=55 // loop_exit
                _
            $region56: #{transformer_forward.7} parent=47 // pred_fallthru
              _
          $region48: #{transformer_forward.7} parent=43 // pred_fallthru
            _
          %300 = vnop
        $region44: #{transformer_forward.7} parent=39 // pred_fallthru
          _
      $region40: #{transformer_forward.7} parent=5 // pred_fallthru
        _
      %p301 = scmp.le.s32.totalorder 1, %s15
      %p302 = scmp.lt.s32.totalorder %s15, 3
      %p303 = pnand %p301, %p302
      %p304 = pneg %p303
      // Predicated region
      $region79: #{transformer_forward.7} parent=5 // pred_check
        _
      $region80: #{transformer_forward.7} parent=5 // pred_check_branch
        %306 = sbr.rel (%p303) target = $region82
      $region81: #{transformer_forward.7} parent=5 // pred_region
        %s307 = ssub.s32 %s15, 1
        %s308 = sand.u32 %s28, 1
        %s309 = sand.u32 %s28, 1
        %s310 = smul.addr %s309, 16
        %s311 = scalar_lea.vmem [#allocation2], %s310
        // Predicated region
        $region83: #{transformer_forward.7} parent=81 // pred_check
          %p312 = pneg %p41
        $region84: #{transformer_forward.7} parent=81 // pred_check_branch
          %314 = sbr.rel (%p312) target = $region86
        $region85: #{transformer_forward.7} parent=81 // pred_region
          _
        $region86: #{transformer_forward.7} parent=81 // pred_fallthru
          _
        %s315 = sand.u32 %s28, 1
        %s316 = sand.u32 %s28, 1
        %s317 = smul.addr %s316, 16
        %s318 = scalar_lea.vmem [#allocation2], %s317
        %p319 = pneg %p41
        %p320 = pneg %p38
        %p321 = pneg %p62
        %p322 = pneg %p59
        %p323 = pneg %p83
        %p324 = pneg %p80
        %p325 = pneg %p104
        %p326 = pneg %p101
        %p327 = pneg %p125
        %p328 = pneg %p122
        %p329 = pneg %p146
        %p330 = pneg %p143
        %p331 = pneg %p167
        %p332 = pneg %p164
        %p333 = pneg %p193
        %p334 = pneg %p190
        %s335 = sand.u32 %s180, 1
        %s336 = sand.u32 %s180, 1
        %s337 = smul.addr %s336, 16
        %s338 = scalar_lea.vmem [#allocation3], %s337
        %p339 = pneg %p219
        %p340 = pneg %p216
        %s341 = sand.u32 %s206, 1
        %s342 = sand.u32 %s206, 1
        %s343 = smul.addr %s342, 16
        %s344 = scalar_lea.vmem [#allocation4], %s343
        %v346 = vld [vmem:[%s311] sm:$0xff]
        %v347 = vld [vmem:[%s311 + $0x8] sm:$0xff]
        %v348 = vld [vmem:[%s1] sm:$0x1]
        %v350 = vlaneseq
        %v351 = vshrl.u32 %v350, 7
        %v352 = vsub.s32 0, %v351
        %v353 = vrot.slane %v348, %v352
        %v355 = vmul.f32 %v346, %v353
        %v356 = vmul.f32 %v347, %v353
        %v357 = vld [vmem:[%s2] sm:$0x1]
        %v359 = vlaneseq
        %v360 = vshrl.u32 %v359, 7
        %v361 = vsub.s32 0, %v360
        %v362 = vrot.slane %v357, %v361
        %v364 = vadd.f32 %v355, %v362
        %v365 = vadd.f32 %v356, %v362
        %v366 = vpack.c.bf16 %v365, %v364
        %v367 = vld [vmem:[%s3] sm:$0xf]
        %v368 = vld [vmem:[%s4] sm:$0x1]
        %v370 = vlaneseq
        %v371 = vshrl.u32 %v370, 7
        %v372 = vsub.s32 0, %v371
        %v373 = vrot.slane %v368, %v372
        %vm375 = vcmask 64512
        %v377 = vsel %vm375, %v366, 0
        %vm379 = vcmask 1043456
        %v381 = vsel %vm379, %v367, 0
        %383 = vmatprep.subr.bf16.mxu0 0
        %384 = vmatpush1.bf16.msra.mxu0 %v381
        %385 = vmatprep.subr.bf16.mxu0 0
        %386 = vmatpush1.bf16.msra.mxu0 0
        %387 = vmatprep.subr.bf16.mxu0 0
        %388 = vmatpush1.bf16.msra.mxu0 0
        %389 = vmatprep.subr.bf16.mxu0 0
        %390 = vmatpush1.bf16.msra.mxu0 0
        %391 = vmatprep.subr.bf16.mxu0 0
        %392 = vmatpush1.bf16.msra.mxu0 0
        %393 = vmatprep.subr.bf16.mxu0 0
        %394 = vmatpush1.bf16.msra.mxu0 0
        %395 = vmatprep.subr.bf16.mxu0 0
        %396 = vmatpush1.bf16.msra.mxu0 0
        %397 = vmatprep.subr.bf16.mxu0 0
        %398 = vmatpush1.bf16.msra.mxu0 0
        %399 = vmatprep.subr.bf16.mxu0 0
        %400 = vmatpush1.bf16.msra.mxu0 0
        %401 = vmatprep.subr.bf16.mxu0 0
        %402 = vmatpush1.bf16.msra.mxu0 0
        %403 = vmatprep.subr.bf16.mxu0 0
        %404 = vmatpush1.bf16.msra.mxu0 0
        %405 = vmatprep.subr.bf16.mxu0 0
        %406 = vmatpush1.bf16.msra.mxu0 0
        %407 = vmatprep.subr.bf16.mxu0 0
        %408 = vmatpush1.bf16.msra.mxu0 0
        %409 = vmatprep.subr.bf16.mxu0 0
        %410 = vmatpush1.bf16.msra.mxu0 0
        %411 = vmatprep.subr.bf16.mxu0 0
        %412 = vmatpush1.bf16.msra.mxu0 0
        %413 = vmatprep.subr.bf16.mxu0 0
        %414 = vmatpush1.bf16.msra.mxu0 0
        %415 = vmatprep.mubr.bf16.mxu0 0
        %416 = vmatmul.mubr.bf16.gmra.mrb[0].mxu0 %v377
        %v417 = vpop.f32.mrb[0].mxu0
        %v418 = vadd.f32 %v373, %v417
        %v419 = vpop.f32.mrb[0].mxu0
        %v420 = vpop.f32.mrb[0].mxu0
        %v421 = vadd.f32 %v373, %v420
        %v422 = vpop.f32.mrb[0].mxu0
        %423 = vdwg.mxu0
        %v424 = vld [vmem:[%s5] sm:$0xf]
        %v425 = vld [vmem:[%s6] sm:$0x1]
        %v427 = vlaneseq
        %v428 = vshrl.u32 %v427, 7
        %v429 = vsub.s32 0, %v428
        %v430 = vrot.slane %v425, %v429
        %v433 = vsel %vm379, %v424, 0
        %435 = vmatprep.subr.bf16.mxu0 0
        %436 = vmatpush1.bf16.msra.mxu0 %v433
        %437 = vmatprep.subr.bf16.mxu0 0
        %438 = vmatpush1.bf16.msra.mxu0 0
        %439 = vmatprep.subr.bf16.mxu0 0
        %440 = vmatpush1.bf16.msra.mxu0 0
        %441 = vmatprep.subr.bf16.mxu0 0
        %442 = vmatpush1.bf16.msra.mxu0 0
        %443 = vmatprep.subr.bf16.mxu0 0
        %444 = vmatpush1.bf16.msra.mxu0 0
        %445 = vmatprep.subr.bf16.mxu0 0
        %446 = vmatpush1.bf16.msra.mxu0 0
        %447 = vmatprep.subr.bf16.mxu0 0
        %448 = vmatpush1.bf16.msra.mxu0 0
        %449 = vmatprep.subr.bf16.mxu0 0
        %450 = vmatpush1.bf16.msra.mxu0 0
        %451 = vmatprep.subr.bf16.mxu0 0
        %452 = vmatpush1.bf16.msra.mxu0 0
        %453 = vmatprep.subr.bf16.mxu0 0
        %454 = vmatpush1.bf16.msra.mxu0 0
        %455 = vmatprep.subr.bf16.mxu0 0
        %456 = vmatpush1.bf16.msra.mxu0 0
        %457 = vmatprep.subr.bf16.mxu0 0
        %458 = vmatpush1.bf16.msra.mxu0 0
        %459 = vmatprep.subr.bf16.mxu0 0
        %460 = vmatpush1.bf16.msra.mxu0 0
        %461 = vmatprep.subr.bf16.mxu0 0
        %462 = vmatpush1.bf16.msra.mxu0 0
        %463 = vmatprep.subr.bf16.mxu0 0
        %464 = vmatpush1.bf16.msra.mxu0 0
        %465 = vmatprep.subr.bf16.mxu0 0
        %466 = vmatpush1.bf16.msra.mxu0 0
        %467 = vmatprep.mubr.bf16.mxu0 0
        %468 = vmatmul.mubr.bf16.gmra.mrb[0].mxu0 %v377
        %v469 = vpop.f32.mrb[0].mxu0
        %v470 = vadd.f32 %v430, %v469
        %v471 = vpop.f32.mrb[0].mxu0
        %v472 = vpop.f32.mrb[0].mxu0
        %v473 = vadd.f32 %v430, %v472
        %v474 = vpop.f32.mrb[0].mxu0
        %475 = vdwg.mxu0
        %vm476 = vcmask 261120
        %477 = vst.msk [vmem:[%s338] sm:$0xff] %vm476, %v418
        %478 = vst.msk [vmem:[%s338 + $0x8] sm:$0xff] %vm476, %v421
        %479 = vst.msk [vmem:[%s344] sm:$0xff] %vm476, %v470
        %480 = vst.msk [vmem:[%s344 + $0x8] sm:$0xff] %vm476, %v473
        %s481 = sand.u32 %s180, 1
        %s482 = sand.u32 %s180, 1
        %s483 = smul.addr %s482, 16
        %s484 = scalar_lea.vmem [#allocation3], %s483
        %s485 = sand.u32 %s206, 1
        %s486 = sand.u32 %s206, 1
        %s487 = smul.addr %s486, 16
        %s488 = scalar_lea.vmem [#allocation4], %s487
        // Predicated region
        $region87: #{transformer_forward.7} parent=81 // pred_check
          %p489 = pneg %p190
        $region88: #{transformer_forward.7} parent=81 // pred_check_branch
          %491 = sbr.rel (%p489) target = $region90
        $region89: #{transformer_forward.7} parent=81 // pred_region
          %s492 = smul.addr %s20, 8
          %s493 = scalar_lea.vmem %s7, %s492
          // Predicated region
          $region91: #{transformer_forward.7} parent=89 // pred_check
            _
          $region92: #{transformer_forward.7} parent=89 // pred_check_branch
            %495 = sbr.rel (0) target = $region94
          $region93: #{transformer_forward.7} parent=89 // pred_region
            // Predicated region
            $region95: #{transformer_forward.7} parent=93 // pred_check
              _
            $region96: #{transformer_forward.7} parent=93 // pred_check_branch
              %497 = sbr.rel (0) target = $region98
            $region97: #{transformer_forward.7} parent=93 // pred_region
              // Predicated region
              $region110: #{transformer_forward.7} parent=97 // pred_check
                _
              $region111: #{transformer_forward.7} parent=97 // pred_check_branch
                %514 = sbr.rel (0) target = $region113
              $region112: #{transformer_forward.7} parent=97 // pred_region
                loop: start=0, step=1, limit=1
                $region114: #{transformer_forward.7} parent=112 // loop_pre_header
                  _
                $region115: #{transformer_forward.7} parent=112 // loop_header
                  %s516 = sphi 0, %s520
                  %p517 = scmp.ge.s32.totalorder %s516, 1
                  %s521 = sphi %s484, %s484
                  %s522 = sphi %s493, %s493
                $region116: #{transformer_forward.7} parent=112 // loop_header_branch
                  %519 = sbr.rel (%p517) target = $region120
                $region117: #{transformer_forward.7} parent=112 // loop_body
                  %v523 = vld [vmem:[%s521] sm:$0xff]
                  %524 = vst [vmem:[%s522] sm:$0xff] %v523
                  %v525 = vld [vmem:[%s521 + $0x8] sm:$0xff]
                  %526 = vst [vmem:[%s522 + $0x10] sm:$0xff] %v525
                $region118: #{transformer_forward.7} parent=112 // loop_footer
                  %s520 = sadd.s32 1, %s516
                $region119: #{transformer_forward.7} parent=112 // loop_footer_branch
                  %515 = sbr.rel target = $region115
                $region120: #{transformer_forward.7} parent=112 // loop_exit
                  _
              $region113: #{transformer_forward.7} parent=97 // pred_fallthru
                _
              // Predicated region
              $region121: #{transformer_forward.7} parent=97 // pred_check
                _
              $region122: #{transformer_forward.7} parent=97 // pred_check_branch
                %528 = sbr.rel target = $region124
              $region123: #{transformer_forward.7} parent=97 // pred_region
                _
              $region124: #{transformer_forward.7} parent=97 // pred_fallthru
                _
            $region98: #{transformer_forward.7} parent=93 // pred_fallthru
              _
            // Predicated region
            $region99: #{transformer_forward.7} parent=93 // pred_check
              _
            $region100: #{transformer_forward.7} parent=93 // pred_check_branch
              %499 = sbr.rel target = $region102
            $region101: #{transformer_forward.7} parent=93 // pred_region
              loop: start=0, step=1, limit=1
              $region103: #{transformer_forward.7} parent=101 // loop_pre_header
                _
              $region104: #{transformer_forward.7} parent=101 // loop_header
                %s502 = sphi 0, %s506
                %p503 = scmp.ge.s32.totalorder %s502, 1
                %s507 = sphi %s484, %s484
                %s508 = sphi %s493, %s493
              $region105: #{transformer_forward.7} parent=101 // loop_header_branch
                %505 = sbr.rel (%p503) target = $region109
              $region106: #{transformer_forward.7} parent=101 // loop_body
                %v509 = vld [vmem:[%s507] sm:$0xff]
                %510 = vst [vmem:[%s508] sm:$0xff] %v509
                %v511 = vld [vmem:[%s507 + $0x8] sm:$0xff]
                %512 = vst [vmem:[%s508 + $0x10] sm:$0xff] %v511
              $region107: #{transformer_forward.7} parent=101 // loop_footer
                %s506 = sadd.s32 1, %s502
              $region108: #{transformer_forward.7} parent=101 // loop_footer_branch
                %501 = sbr.rel target = $region104
              $region109: #{transformer_forward.7} parent=101 // loop_exit
                _
            $region102: #{transformer_forward.7} parent=93 // pred_fallthru
              _
          $region94: #{transformer_forward.7} parent=89 // pred_fallthru
            _
          %529 = vnop
        $region90: #{transformer_forward.7} parent=81 // pred_fallthru
          _
        // Predicated region
        $region125: #{transformer_forward.7} parent=81 // pred_check
          %p530 = pneg %p216
        $region126: #{transformer_forward.7} parent=81 // pred_check_branch
          %532 = sbr.rel (%p530) target = $region128
        $region127: #{transformer_forward.7} parent=81 // pred_region
          %s533 = smul.addr %s20, 8
          %s534 = scalar_lea.vmem %s8, %s533
          // Predicated region
          $region129: #{transformer_forward.7} parent=127 // pred_check
            _
          $region130: #{transformer_forward.7} parent=127 // pred_check_branch
            %536 = sbr.rel (0) target = $region132
          $region131: #{transformer_forward.7} parent=127 // pred_region
            // Predicated region
            $region133: #{transformer_forward.7} parent=131 // pred_check
              _
            $region134: #{transformer_forward.7} parent=131 // pred_check_branch
              %538 = sbr.rel (0) target = $region136
            $region135: #{transformer_forward.7} parent=131 // pred_region
              // Predicated region
              $region148: #{transformer_forward.7} parent=135 // pred_check
                _
              $region149: #{transformer_forward.7} parent=135 // pred_check_branch
                %555 = sbr.rel (0) target = $region151
              $region150: #{transformer_forward.7} parent=135 // pred_region
                loop: start=0, step=1, limit=1
                $region152: #{transformer_forward.7} parent=150 // loop_pre_header
                  _
                $region153: #{transformer_forward.7} parent=150 // loop_header
                  %s557 = sphi 0, %s561
                  %p558 = scmp.ge.s32.totalorder %s557, 1
                  %s562 = sphi %s488, %s488
                  %s563 = sphi %s534, %s534
                $region154: #{transformer_forward.7} parent=150 // loop_header_branch
                  %560 = sbr.rel (%p558) target = $region158
                $region155: #{transformer_forward.7} parent=150 // loop_body
                  %v564 = vld [vmem:[%s562] sm:$0xff]
                  %565 = vst [vmem:[%s563] sm:$0xff] %v564
                  %v566 = vld [vmem:[%s562 + $0x8] sm:$0xff]
                  %567 = vst [vmem:[%s563 + $0x10] sm:$0xff] %v566
                $region156: #{transformer_forward.7} parent=150 // loop_footer
                  %s561 = sadd.s32 1, %s557
                $region157: #{transformer_forward.7} parent=150 // loop_footer_branch
                  %556 = sbr.rel target = $region153
                $region158: #{transformer_forward.7} parent=150 // loop_exit
                  _
              $region151: #{transformer_forward.7} parent=135 // pred_fallthru
                _
              // Predicated region
              $region159: #{transformer_forward.7} parent=135 // pred_check
                _
              $region160: #{transformer_forward.7} parent=135 // pred_check_branch
                %569 = sbr.rel target = $region162
              $region161: #{transformer_forward.7} parent=135 // pred_region
                _
              $region162: #{transformer_forward.7} parent=135 // pred_fallthru
                _
            $region136: #{transformer_forward.7} parent=131 // pred_fallthru
              _
            // Predicated region
            $region137: #{transformer_forward.7} parent=131 // pred_check
              _
            $region138: #{transformer_forward.7} parent=131 // pred_check_branch
              %540 = sbr.rel target = $region140
            $region139: #{transformer_forward.7} parent=131 // pred_region
              loop: start=0, step=1, limit=1
              $region141: #{transformer_forward.7} parent=139 // loop_pre_header
                _
              $region142: #{transformer_forward.7} parent=139 // loop_header
                %s543 = sphi 0, %s547
                %p544 = scmp.ge.s32.totalorder %s543, 1
                %s548 = sphi %s488, %s488
                %s549 = sphi %s534, %s534
              $region143: #{transformer_forward.7} parent=139 // loop_header_branch
                %546 = sbr.rel (%p544) target = $region147
              $region144: #{transformer_forward.7} parent=139 // loop_body
                %v550 = vld [vmem:[%s548] sm:$0xff]
                %551 = vst [vmem:[%s549] sm:$0xff] %v550
                %v552 = vld [vmem:[%s548 + $0x8] sm:$0xff]
                %553 = vst [vmem:[%s549 + $0x10] sm:$0xff] %v552
              $region145: #{transformer_forward.7} parent=139 // loop_footer
                %s547 = sadd.s32 1, %s543
              $region146: #{transformer_forward.7} parent=139 // loop_footer_branch
                %542 = sbr.rel target = $region142
              $region147: #{transformer_forward.7} parent=139 // loop_exit
                _
            $region140: #{transformer_forward.7} parent=131 // pred_fallthru
              _
          $region132: #{transformer_forward.7} parent=127 // pred_fallthru
            _
          %570 = vnop
        $region128: #{transformer_forward.7} parent=81 // pred_fallthru
          _
      $region82: #{transformer_forward.7} parent=5 // pred_fallthru
        _
      %p571 = scmp.le.s32.totalorder 2, %s15
      // Predicated region
      $region163: #{transformer_forward.7} parent=5 // pred_check
        %p572 = pneg %p571
      $region164: #{transformer_forward.7} parent=5 // pred_check_branch
        %574 = sbr.rel (%p572) target = $region166
      $region165: #{transformer_forward.7} parent=5 // pred_region
        %s575 = ssub.s32 %s15, 2
        // Predicated region
        $region167: #{transformer_forward.7} parent=165 // pred_check
          %p576 = pneg %p196
        $region168: #{transformer_forward.7} parent=165 // pred_check_branch
          %578 = sbr.rel (%p576) target = $region170
        $region169: #{transformer_forward.7} parent=165 // pred_region
          %s579 = sand.u32 %s181, 1
          %s580 = sand.u32 %s181, 1
          %s581 = smul.addr %s580, 16
          %s582 = scalar_lea.vmem [#allocation3], %s581
        $region170: #{transformer_forward.7} parent=165 // pred_fallthru
          _
        // Predicated region
        $region171: #{transformer_forward.7} parent=165 // pred_check
          %p583 = pneg %p222
        $region172: #{transformer_forward.7} parent=165 // pred_check_branch
          %585 = sbr.rel (%p583) target = $region174
        $region173: #{transformer_forward.7} parent=165 // pred_region
          %s586 = sand.u32 %s207, 1
          %s587 = sand.u32 %s207, 1
          %s588 = smul.addr %s587, 16
          %s589 = scalar_lea.vmem [#allocation4], %s588
        $region174: #{transformer_forward.7} parent=165 // pred_fallthru
          _
      $region166: #{transformer_forward.7} parent=5 // pred_fallthru
        _
    $region6: #{transformer_forward.7} parent=1 // loop_footer
      %s19 = sadd.s32 1, %s15
    $region7: #{transformer_forward.7} parent=1 // loop_footer_branch
      %14 = sbr.rel target = $region3
    $region8: #{transformer_forward.7} parent=1 // loop_exit
      _

// kernel: transformer_forward.11
$region0: #{transformer_forward.11}
  #allocation0 [shape = 'u32[]', space=smem, size = 0x4, offset = 0x4, fixed_abs, tag = 'smem constant byte address 0x4 - core index']
  #allocation1 [shape = 'u32[144,128]{1,0:T(1,128)}', space=vmem, size = 0x12000, scoped, tag = 'internal scratch']
  %s0 = inlined_call_operand.vmem [shape: f32[2,16,32], index: 0, kind: input, shape index: {}]
  %s1 = inlined_call_operand.vmem [shape: f32[2,16,32], index: 1, kind: input, shape index: {}]
  %s2 = inlined_call_operand.vmem [shape: bf16[32,128], index: 2, kind: input, shape index: {}]
  %s3 = inlined_call_operand.vmem [shape: bf16[32,128], index: 3, kind: input, shape index: {}]
  %s4 = inlined_call_operand.vmem [shape: f32[1,128], index: 4, kind: input, shape index: {}]
  %s5 = inlined_call_operand.vmem [shape: bf16[128,64], index: 5, kind: input, shape index: {}]
  %s6 = inlined_call_operand.vmem [shape: f32[1,64], index: 6, kind: input, shape index: {}]
  %s7 = inlined_call_operand.vmem [shape: bf16[64,128], index: 7, kind: input, shape index: {}]
  %s8 = inlined_call_operand.vmem [shape: f32[1,128], index: 8, kind: input, shape index: {}]
  %s9 = inlined_call_operand.vmem [shape: f32[2,16,128], index: 9, kind: output, shape index: {}]
  %s10 = sld [smem:[#allocation0]]
  $region179: #{transformer_forward.11} parent=0
    _
  %s12 = ssub.s32 1, %s10
  %s13 = scalar_select 0, %s12, %s10
  $region1: #{transformer_forward.11} parent=0
    #allocation2 [shape = 'u8[16384]{0}', space=vmem, size = 0x4000, scoped, tag = 'input window, operand 0']
    #allocation3 [shape = 'u8[16384]{0}', space=vmem, size = 0x4000, scoped, tag = 'input window, operand 1']
    #allocation4 [shape = 'u8[16384]{0}', space=vmem, size = 0x4000, scoped, tag = 'output window, operand 0']
    loop: start=0, step=1, limit=4
    $region2: #{transformer_forward.11} parent=1 // loop_pre_header
      _
    $region3: #{transformer_forward.11} parent=1 // loop_header
      %s15 = sphi 0, %s19
      %p16 = scmp.ge.s32.totalorder %s15, 4
      %s25 = sphi 0, %s27
      %s28 = sphi 0, %s25
      %s29 = sphi 0, %s28
      %s45 = sphi 0, %s29
      %s51 = sphi 0, %s53
      %s54 = sphi 0, %s51
      %s55 = sphi 0, %s54
      %s71 = sphi 0, %s55
      %s75 = sphi 0, %s75
      %s77 = sphi 0, %s75
      %s78 = sphi 0, %s77
      %s92 = sphi 0, %s78
      %s96 = sphi 0, %s96
      %s98 = sphi 0, %s96
      %s99 = sphi 0, %s98
      %s113 = sphi 0, %s99
      %s117 = sphi 0, %s117
      %s119 = sphi 0, %s117
      %s120 = sphi 0, %s119
      %s134 = sphi 0, %s120
      %s138 = sphi 0, %s138
      %s140 = sphi 0, %s138
      %s141 = sphi 0, %s140
      %s155 = sphi 0, %s141
      %s159 = sphi 0, %s159
      %s161 = sphi 0, %s159
      %s162 = sphi 0, %s161
      %s176 = sphi 0, %s162
      %s180 = sphi 0, %s180
      %s182 = sphi 0, %s180
      %s183 = sphi 0, %s182
      %s197 = sphi 0, %s183
      %s201 = sphi 0, %s201
      %s203 = sphi 0, %s201
      %s204 = sphi 0, %s203
      %s218 = sphi 0, %s204
      %s224 = sphi 0, %s226
      %s227 = sphi 0, %s224
      %s228 = sphi 0, %s227
      %s244 = sphi 0, %s228
    $region4: #{transformer_forward.11} parent=1 // loop_header_branch
      %18 = sbr.rel (%p16) target = $region8
    $region5: #{transformer_forward.11} parent=1 // loop_body
      %s20 = ssub.s32 %s15, 1
      %s21 = ssub.s32 %s15, 2
      %s22 = sadd.s32 %s15, 1
      %s23 = ssub.s32 %s15, %s22
      %p24 = scmp.eq.s32.totalorder %s23, 0
      %s26 = sadd.s32 %s25, 1
      %s27 = scalar_select %p24, %s25, %s26
      %p30 = pneg %p24
      %p31 = scmp.eq.s32.totalorder %s15, 1
      %p32 = por %p30, %p31
      %p33 = scmp.ne.s32.totalorder %s25, %s28
      %p34 = scmp.eq.s32.totalorder %s15, 0
      %p35 = por %p33, %p34
      %p36 = scmp.ne.s32.totalorder %s25, %s28
      %p37 = scmp.eq.s32.totalorder %s20, 1
      %p38 = por %p36, %p37
      %p39 = scmp.ne.s32.totalorder %s28, %s29
      %p40 = scmp.eq.s32.totalorder %s20, 0
      %p41 = por %p39, %p40
      %p42 = scmp.ne.s32.totalorder %s28, %s29
      %p43 = scmp.eq.s32.totalorder %s21, 1
      %p44 = por %p42, %p43
      %p46 = scmp.ne.s32.totalorder %s29, %s45
      %p47 = scmp.eq.s32.totalorder %s21, 0
      %p48 = por %p46, %p47
      %s49 = ssub.s32 %s15, %s22
      %p50 = scmp.eq.s32.totalorder %s49, 0
      %s52 = sadd.s32 %s51, 1
      %s53 = scalar_select %p50, %s51, %s52
      %p56 = pneg %p50
      %p57 = scmp.eq.s32.totalorder %s15, 1
      %p58 = por %p56, %p57
      %p59 = scmp.ne.s32.totalorder %s51, %s54
      %p60 = scmp.eq.s32.totalorder %s15, 0
      %p61 = por %p59, %p60
      %p62 = scmp.ne.s32.totalorder %s51, %s54
      %p63 = scmp.eq.s32.totalorder %s20, 1
      %p64 = por %p62, %p63
      %p65 = scmp.ne.s32.totalorder %s54, %s55
      %p66 = scmp.eq.s32.totalorder %s20, 0
      %p67 = por %p65, %p66
      %p68 = scmp.ne.s32.totalorder %s54, %s55
      %p69 = scmp.eq.s32.totalorder %s21, 1
      %p70 = por %p68, %p69
      %p72 = scmp.ne.s32.totalorder %s55, %s71
      %p73 = scmp.eq.s32.totalorder %s21, 0
      %p74 = por %p72, %p73
      %s76 = sadd.s32 %s75, 1
      %p79 = scmp.eq.s32.totalorder %s15, 1
      %p80 = scmp.ne.s32.totalorder %s75, %s77
      %p81 = scmp.eq.s32.totalorder %s15, 0
      %p82 = por %p80, %p81
      %p83 = scmp.ne.s32.totalorder %s75, %s77
      %p84 = scmp.eq.s32.totalorder %s20, 1
      %p85 = por %p83, %p84
      %p86 = scmp.ne.s32.totalorder %s77, %s78
      %p87 = scmp.eq.s32.totalorder %s20, 0
      %p88 = por %p86, %p87
      %p89 = scmp.ne.s32.totalorder %s77, %s78
      %p90 = scmp.eq.s32.totalorder %s21, 1
      %p91 = por %p89, %p90
      %p93 = scmp.ne.s32.totalorder %s78, %s92
      %p94 = scmp.eq.s32.totalorder %s21, 0
      %p95 = por %p93, %p94
      %s97 = sadd.s32 %s96, 1
      %p100 = scmp.eq.s32.totalorder %s15, 1
      %p101 = scmp.ne.s32.totalorder %s96, %s98
      %p102 = scmp.eq.s32.totalorder %s15, 0
      %p103 = por %p101, %p102
      %p104 = scmp.ne.s32.totalorder %s96, %s98
      %p105 = scmp.eq.s32.totalorder %s20, 1
      %p106 = por %p104, %p105
      %p107 = scmp.ne.s32.totalorder %s98, %s99
      %p108 = scmp.eq.s32.totalorder %s20, 0
      %p109 = por %p107, %p108
      %p110 = scmp.ne.s32.totalorder %s98, %s99
      %p111 = scmp.eq.s32.totalorder %s21, 1
      %p112 = por %p110, %p111
      %p114 = scmp.ne.s32.totalorder %s99, %s113
      %p115 = scmp.eq.s32.totalorder %s21, 0
      %p116 = por %p114, %p115
      %s118 = sadd.s32 %s117, 1
      %p121 = scmp.eq.s32.totalorder %s15, 1
      %p122 = scmp.ne.s32.totalorder %s117, %s119
      %p123 = scmp.eq.s32.totalorder %s15, 0
      %p124 = por %p122, %p123
      %p125 = scmp.ne.s32.totalorder %s117, %s119
      %p126 = scmp.eq.s32.totalorder %s20, 1
      %p127 = por %p125, %p126
      %p128 = scmp.ne.s32.totalorder %s119, %s120
      %p129 = scmp.eq.s32.totalorder %s20, 0
      %p130 = por %p128, %p129
      %p131 = scmp.ne.s32.totalorder %s119, %s120
      %p132 = scmp.eq.s32.totalorder %s21, 1
      %p133 = por %p131, %p132
      %p135 = scmp.ne.s32.totalorder %s120, %s134
      %p136 = scmp.eq.s32.totalorder %s21, 0
      %p137 = por %p135, %p136
      %s139 = sadd.s32 %s138, 1
      %p142 = scmp.eq.s32.totalorder %s15, 1
      %p143 = scmp.ne.s32.totalorder %s138, %s140
      %p144 = scmp.eq.s32.totalorder %s15, 0
      %p145 = por %p143, %p144
      %p146 = scmp.ne.s32.totalorder %s138, %s140
      %p147 = scmp.eq.s32.totalorder %s20, 1
      %p148 = por %p146, %p147
      %p149 = scmp.ne.s32.totalorder %s140, %s141
      %p150 = scmp.eq.s32.totalorder %s20, 0
      %p151 = por %p149, %p150
      %p152 = scmp.ne.s32.totalorder %s140, %s141
      %p153 = scmp.eq.s32.totalorder %s21, 1
      %p154 = por %p152, %p153
      %p156 = scmp.ne.s32.totalorder %s141, %s155
      %p157 = scmp.eq.s32.totalorder %s21, 0
      %p158 = por %p156, %p157
      %s160 = sadd.s32 %s159, 1
      %p163 = scmp.eq.s32.totalorder %s15, 1
      %p164 = scmp.ne.s32.totalorder %s159, %s161
      %p165 = scmp.eq.s32.totalorder %s15, 0
      %p166 = por %p164, %p165
      %p167 = scmp.ne.s32.totalorder %s159, %s161
      %p168 = scmp.eq.s32.totalorder %s20, 1
      %p169 = por %p167, %p168
      %p170 = scmp.ne.s32.totalorder %s161, %s162
      %p171 = scmp.eq.s32.totalorder %s20, 0
      %p172 = por %p170, %p171
      %p173 = scmp.ne.s32.totalorder %s161, %s162
      %p174 = scmp.eq.s32.totalorder %s21, 1
      %p175 = por %p173, %p174
      %p177 = scmp.ne.s32.totalorder %s162, %s176
      %p178 = scmp.eq.s32.totalorder %s21, 0
      %p179 = por %p177, %p178
      %s181 = sadd.s32 %s180, 1
      %p184 = scmp.eq.s32.totalorder %s15, 1
      %p185 = scmp.ne.s32.totalorder %s180, %s182
      %p186 = scmp.eq.s32.totalorder %s15, 0
      %p187 = por %p185, %p186
      %p188 = scmp.ne.s32.totalorder %s180, %s182
      %p189 = scmp.eq.s32.totalorder %s20, 1
      %p190 = por %p188, %p189
      %p191 = scmp.ne.s32.totalorder %s182, %s183
      %p192 = scmp.eq.s32.totalorder %s20, 0
      %p193 = por %p191, %p192
      %p194 = scmp.ne.s32.totalorder %s182, %s183
      %p195 = scmp.eq.s32.totalorder %s21, 1
      %p196 = por %p194, %p195
      %p198 = scmp.ne.s32.totalorder %s183, %s197
      %p199 = scmp.eq.s32.totalorder %s21, 0
      %p200 = por %p198, %p199
      %s202 = sadd.s32 %s201, 1
      %p205 = scmp.eq.s32.totalorder %s15, 1
      %p206 = scmp.ne.s32.totalorder %s201, %s203
      %p207 = scmp.eq.s32.totalorder %s15, 0
      %p208 = por %p206, %p207
      %p209 = scmp.ne.s32.totalorder %s201, %s203
      %p210 = scmp.eq.s32.totalorder %s20, 1
      %p211 = por %p209, %p210
      %p212 = scmp.ne.s32.totalorder %s203, %s204
      %p213 = scmp.eq.s32.totalorder %s20, 0
      %p214 = por %p212, %p213
      %p215 = scmp.ne.s32.totalorder %s203, %s204
      %p216 = scmp.eq.s32.totalorder %s21, 1
      %p217 = por %p215, %p216
      %p219 = scmp.ne.s32.totalorder %s204, %s218
      %p220 = scmp.eq.s32.totalorder %s21, 0
      %p221 = por %p219, %p220
      %s222 = ssub.s32 %s15, %s22
      %p223 = scmp.eq.s32.totalorder %s222, 0
      %s225 = sadd.s32 %s224, 1
      %s226 = scalar_select %p223, %s224, %s225
      %p229 = pneg %p223
      %p230 = scmp.eq.s32.totalorder %s15, 1
      %p231 = por %p229, %p230
      %p232 = scmp.ne.s32.totalorder %s224, %s227
      %p233 = scmp.eq.s32.totalorder %s15, 0
      %p234 = por %p232, %p233
      %p235 = scmp.ne.s32.totalorder %s224, %s227
      %p236 = scmp.eq.s32.totalorder %s20, 1
      %p237 = por %p235, %p236
      %p238 = scmp.ne.s32.totalorder %s227, %s228
      %p239 = scmp.eq.s32.totalorder %s20, 0
      %p240 = por %p238, %p239
      %p241 = scmp.ne.s32.totalorder %s227, %s228
      %p242 = scmp.eq.s32.totalorder %s21, 1
      %p243 = por %p241, %p242
      %p245 = scmp.ne.s32.totalorder %s228, %s244
      %p246 = scmp.eq.s32.totalorder %s21, 0
      %p247 = por %p245, %p246
      %p248 = scmp.le.s32.totalorder 1, %s15
      %p249 = scmp.lt.s32.totalorder %s15, 3
      %p250 = pnand %p248, %p249
      %p251 = pneg %p250
      // Predicated region
      $region9: #{transformer_forward.11} parent=5 // pred_check
        _
      $region10: #{transformer_forward.11} parent=5 // pred_check_branch
        %253 = sbr.rel (%p250) target = $region12
      $region11: #{transformer_forward.11} parent=5 // pred_region
        %s254 = ssub.s32 %s15, 1
        // Predicated region
        $region13: #{transformer_forward.11} parent=11 // pred_check
          %p255 = pneg %p88
        $region14: #{transformer_forward.11} parent=11 // pred_check_branch
          %257 = sbr.rel (%p255) target = $region16
        $region15: #{transformer_forward.11} parent=11 // pred_region
          _
        $region16: #{transformer_forward.11} parent=11 // pred_fallthru
          _
        // Predicated region
        $region17: #{transformer_forward.11} parent=11 // pred_check
          %p258 = pneg %p109
        $region18: #{transformer_forward.11} parent=11 // pred_check_branch
          %260 = sbr.rel (%p258) target = $region20
        $region19: #{transformer_forward.11} parent=11 // pred_region
          _
        $region20: #{transformer_forward.11} parent=11 // pred_fallthru
          _
        // Predicated region
        $region21: #{transformer_forward.11} parent=11 // pred_check
          %p261 = pneg %p130
        $region22: #{transformer_forward.11} parent=11 // pred_check_branch
          %263 = sbr.rel (%p261) target = $region24
        $region23: #{transformer_forward.11} parent=11 // pred_region
          _
        $region24: #{transformer_forward.11} parent=11 // pred_fallthru
          _
        // Predicated region
        $region25: #{transformer_forward.11} parent=11 // pred_check
          %p264 = pneg %p151
        $region26: #{transformer_forward.11} parent=11 // pred_check_branch
          %266 = sbr.rel (%p264) target = $region28
        $region27: #{transformer_forward.11} parent=11 // pred_region
          _
        $region28: #{transformer_forward.11} parent=11 // pred_fallthru
          _
        // Predicated region
        $region29: #{transformer_forward.11} parent=11 // pred_check
          %p267 = pneg %p172
        $region30: #{transformer_forward.11} parent=11 // pred_check_branch
          %269 = sbr.rel (%p267) target = $region32
        $region31: #{transformer_forward.11} parent=11 // pred_region
          _
        $region32: #{transformer_forward.11} parent=11 // pred_fallthru
          _
        // Predicated region
        $region33: #{transformer_forward.11} parent=11 // pred_check
          %p270 = pneg %p193
        $region34: #{transformer_forward.11} parent=11 // pred_check_branch
          %272 = sbr.rel (%p270) target = $region36
        $region35: #{transformer_forward.11} parent=11 // pred_region
          _
        $region36: #{transformer_forward.11} parent=11 // pred_fallthru
          _
        // Predicated region
        $region37: #{transformer_forward.11} parent=11 // pred_check
          %p273 = pneg %p214
        $region38: #{transformer_forward.11} parent=11 // pred_check_branch
          %275 = sbr.rel (%p273) target = $region40
        $region39: #{transformer_forward.11} parent=11 // pred_region
          _
        $region40: #{transformer_forward.11} parent=11 // pred_fallthru
          _
      $region12: #{transformer_forward.11} parent=5 // pred_fallthru
        _
      %p276 = scmp.lt.s32.totalorder %s15, 2
      // Predicated region
      $region41: #{transformer_forward.11} parent=5 // pred_check
        %p277 = pneg %p276
      $region42: #{transformer_forward.11} parent=5 // pred_check_branch
        %279 = sbr.rel (%p277) target = $region44
      $region43: #{transformer_forward.11} parent=5 // pred_region
        // Predicated region
        $region45: #{transformer_forward.11} parent=43 // pred_check
          %p280 = pneg %p35
        $region46: #{transformer_forward.11} parent=43 // pred_check_branch
          %282 = sbr.rel (%p280) target = $region48
        $region47: #{transformer_forward.11} parent=43 // pred_region
          %s283 = sand.u32 %s25, 1
          %s284 = sand.u32 %s25, 1
          %s285 = smul.addr %s284, 16
          %s286 = scalar_lea.vmem [#allocation2], %s285
          %s287 = smul.addr %s15, 8
          %s288 = scalar_lea.vmem %s0, %s287
          // Predicated region
          $region49: #{transformer_forward.11} parent=47 // pred_check
            _
          $region50: #{transformer_forward.11} parent=47 // pred_check_branch
            %290 = sbr.rel (0) target = $region52
          $region51: #{transformer_forward.11} parent=47 // pred_region
            // Predicated region
            $region53: #{transformer_forward.11} parent=51 // pred_check
              _
            $region54: #{transformer_forward.11} parent=51 // pred_check_branch
              %292 = sbr.rel (0) target = $region56
            $region55: #{transformer_forward.11} parent=51 // pred_region
              // Predicated region
              $region68: #{transformer_forward.11} parent=55 // pred_check
                _
              $region69: #{transformer_forward.11} parent=55 // pred_check_branch
                %309 = sbr.rel (0) target = $region71
              $region70: #{transformer_forward.11} parent=55 // pred_region
                loop: start=0, step=1, limit=1
                $region72: #{transformer_forward.11} parent=70 // loop_pre_header
                  _
                $region73: #{transformer_forward.11} parent=70 // loop_header
                  %s311 = sphi 0, %s315
                  %p312 = scmp.ge.s32.totalorder %s311, 1
                  %s316 = sphi %s288, %s288
                  %s317 = sphi %s286, %s286
                $region74: #{transformer_forward.11} parent=70 // loop_header_branch
                  %314 = sbr.rel (%p312) target = $region78
                $region75: #{transformer_forward.11} parent=70 // loop_body
                  %v318 = vld [vmem:[%s316] sm:$0xff]
                  %319 = vst [vmem:[%s317] sm:$0xff] %v318
                  %v320 = vld [vmem:[%s316 + $0x10] sm:$0xff]
                  %321 = vst [vmem:[%s317 + $0x8] sm:$0xff] %v320
                $region76: #{transformer_forward.11} parent=70 // loop_footer
                  %s315 = sadd.s32 1, %s311
                $region77: #{transformer_forward.11} parent=70 // loop_footer_branch
                  %310 = sbr.rel target = $region73
                $region78: #{transformer_forward.11} parent=70 // loop_exit
                  _
              $region71: #{transformer_forward.11} parent=55 // pred_fallthru
                _
              // Predicated region
              $region79: #{transformer_forward.11} parent=55 // pred_check
                _
              $region80: #{transformer_forward.11} parent=55 // pred_check_branch
                %323 = sbr.rel target = $region82
              $region81: #{transformer_forward.11} parent=55 // pred_region
                _
              $region82: #{transformer_forward.11} parent=55 // pred_fallthru
                _
            $region56: #{transformer_forward.11} parent=51 // pred_fallthru
              _
            // Predicated region
            $region57: #{transformer_forward.11} parent=51 // pred_check
              _
            $region58: #{transformer_forward.11} parent=51 // pred_check_branch
              %294 = sbr.rel target = $region60
            $region59: #{transformer_forward.11} parent=51 // pred_region
              loop: start=0, step=1, limit=1
              $region61: #{transformer_forward.11} parent=59 // loop_pre_header
                _
              $region62: #{transformer_forward.11} parent=59 // loop_header
                %s297 = sphi 0, %s301
                %p298 = scmp.ge.s32.totalorder %s297, 1
                %s302 = sphi %s288, %s288
                %s303 = sphi %s286, %s286
              $region63: #{transformer_forward.11} parent=59 // loop_header_branch
                %300 = sbr.rel (%p298) target = $region67
              $region64: #{transformer_forward.11} parent=59 // loop_body
                %v304 = vld [vmem:[%s302] sm:$0xff]
                %305 = vst [vmem:[%s303] sm:$0xff] %v304
                %v306 = vld [vmem:[%s302 + $0x10] sm:$0xff]
                %307 = vst [vmem:[%s303 + $0x8] sm:$0xff] %v306
              $region65: #{transformer_forward.11} parent=59 // loop_footer
                %s301 = sadd.s32 1, %s297
              $region66: #{transformer_forward.11} parent=59 // loop_footer_branch
                %296 = sbr.rel target = $region62
              $region67: #{transformer_forward.11} parent=59 // loop_exit
                _
            $region60: #{transformer_forward.11} parent=51 // pred_fallthru
              _
          $region52: #{transformer_forward.11} parent=47 // pred_fallthru
            _
          %324 = vnop
        $region48: #{transformer_forward.11} parent=43 // pred_fallthru
          _
        // Predicated region
        $region83: #{transformer_forward.11} parent=43 // pred_check
          %p325 = pneg %p61
        $region84: #{transformer_forward.11} parent=43 // pred_check_branch
          %327 = sbr.rel (%p325) target = $region86
        $region85: #{transformer_forward.11} parent=43 // pred_region
          %s328 = sand.u32 %s51, 1
          %s329 = sand.u32 %s51, 1
          %s330 = smul.addr %s329, 16
          %s331 = scalar_lea.vmem [#allocation3], %s330
          %s332 = smul.addr %s15, 8
          %s333 = scalar_lea.vmem %s1, %s332
          // Predicated region
          $region87: #{transformer_forward.11} parent=85 // pred_check
            _
          $region88: #{transformer_forward.11} parent=85 // pred_check_branch
            %335 = sbr.rel (0) target = $region90
          $region89: #{transformer_forward.11} parent=85 // pred_region
            // Predicated region
            $region91: #{transformer_forward.11} parent=89 // pred_check
              _
            $region92: #{transformer_forward.11} parent=89 // pred_check_branch
              %337 = sbr.rel (0) target = $region94
            $region93: #{transformer_forward.11} parent=89 // pred_region
              // Predicated region
              $region106: #{transformer_forward.11} parent=93 // pred_check
                _
              $region107: #{transformer_forward.11} parent=93 // pred_check_branch
                %354 = sbr.rel (0) target = $region109
              $region108: #{transformer_forward.11} parent=93 // pred_region
                loop: start=0, step=1, limit=1
                $region110: #{transformer_forward.11} parent=108 // loop_pre_header
                  _
                $region111: #{transformer_forward.11} parent=108 // loop_header
                  %s356 = sphi 0, %s360
                  %p357 = scmp.ge.s32.totalorder %s356, 1
                  %s361 = sphi %s333, %s333
                  %s362 = sphi %s331, %s331
                $region112: #{transformer_forward.11} parent=108 // loop_header_branch
                  %359 = sbr.rel (%p357) target = $region116
                $region113: #{transformer_forward.11} parent=108 // loop_body
                  %v363 = vld [vmem:[%s361] sm:$0xff]
                  %364 = vst [vmem:[%s362] sm:$0xff] %v363
                  %v365 = vld [vmem:[%s361 + $0x10] sm:$0xff]
                  %366 = vst [vmem:[%s362 + $0x8] sm:$0xff] %v365
                $region114: #{transformer_forward.11} parent=108 // loop_footer
                  %s360 = sadd.s32 1, %s356
                $region115: #{transformer_forward.11} parent=108 // loop_footer_branch
                  %355 = sbr.rel target = $region111
                $region116: #{transformer_forward.11} parent=108 // loop_exit
                  _
              $region109: #{transformer_forward.11} parent=93 // pred_fallthru
                _
              // Predicated region
              $region117: #{transformer_forward.11} parent=93 // pred_check
                _
              $region118: #{transformer_forward.11} parent=93 // pred_check_branch
                %368 = sbr.rel target = $region120
              $region119: #{transformer_forward.11} parent=93 // pred_region
                _
              $region120: #{transformer_forward.11} parent=93 // pred_fallthru
                _
            $region94: #{transformer_forward.11} parent=89 // pred_fallthru
              _
            // Predicated region
            $region95: #{transformer_forward.11} parent=89 // pred_check
              _
            $region96: #{transformer_forward.11} parent=89 // pred_check_branch
              %339 = sbr.rel target = $region98
            $region97: #{transformer_forward.11} parent=89 // pred_region
              loop: start=0, step=1, limit=1
              $region99: #{transformer_forward.11} parent=97 // loop_pre_header
                _
              $region100: #{transformer_forward.11} parent=97 // loop_header
                %s342 = sphi 0, %s346
                %p343 = scmp.ge.s32.totalorder %s342, 1
                %s347 = sphi %s333, %s333
                %s348 = sphi %s331, %s331
              $region101: #{transformer_forward.11} parent=97 // loop_header_branch
                %345 = sbr.rel (%p343) target = $region105
              $region102: #{transformer_forward.11} parent=97 // loop_body
                %v349 = vld [vmem:[%s347] sm:$0xff]
                %350 = vst [vmem:[%s348] sm:$0xff] %v349
                %v351 = vld [vmem:[%s347 + $0x10] sm:$0xff]
                %352 = vst [vmem:[%s348 + $0x8] sm:$0xff] %v351
              $region103: #{transformer_forward.11} parent=97 // loop_footer
                %s346 = sadd.s32 1, %s342
              $region104: #{transformer_forward.11} parent=97 // loop_footer_branch
                %341 = sbr.rel target = $region100
              $region105: #{transformer_forward.11} parent=97 // loop_exit
                _
            $region98: #{transformer_forward.11} parent=89 // pred_fallthru
              _
          $region90: #{transformer_forward.11} parent=85 // pred_fallthru
            _
          %369 = vnop
        $region86: #{transformer_forward.11} parent=43 // pred_fallthru
          _
      $region44: #{transformer_forward.11} parent=5 // pred_fallthru
        _
      %p370 = scmp.le.s32.totalorder 1, %s15
      %p371 = scmp.lt.s32.totalorder %s15, 3
      %p372 = pnand %p370, %p371
      %p373 = pneg %p372
      // Predicated region
      $region121: #{transformer_forward.11} parent=5 // pred_check
        _
      $region122: #{transformer_forward.11} parent=5 // pred_check_branch
        %375 = sbr.rel (%p372) target = $region124
      $region123: #{transformer_forward.11} parent=5 // pred_region
        %s376 = ssub.s32 %s15, 1
        %s377 = sand.u32 %s28, 1
        %s378 = sand.u32 %s28, 1
        %s379 = smul.addr %s378, 16
        %s380 = scalar_lea.vmem [#allocation2], %s379
        // Predicated region
        $region125: #{transformer_forward.11} parent=123 // pred_check
          %p381 = pneg %p41
        $region126: #{transformer_forward.11} parent=123 // pred_check_branch
          %383 = sbr.rel (%p381) target = $region128
        $region127: #{transformer_forward.11} parent=123 // pred_region
          _
        $region128: #{transformer_forward.11} parent=123 // pred_fallthru
          _
        %s384 = sand.u32 %s54, 1
        %s385 = sand.u32 %s54, 1
        %s386 = smul.addr %s385, 16
        %s387 = scalar_lea.vmem [#allocation3], %s386
        // Predicated region
        $region129: #{transformer_forward.11} parent=123 // pred_check
          %p388 = pneg %p67
        $region130: #{transformer_forward.11} parent=123 // pred_check_branch
          %390 = sbr.rel (%p388) target = $region132
        $region131: #{transformer_forward.11} parent=123 // pred_region
          _
        $region132: #{transformer_forward.11} parent=123 // pred_fallthru
          _
        %s391 = sand.u32 %s28, 1
        %s392 = sand.u32 %s28, 1
        %s393 = smul.addr %s392, 16
        %s394 = scalar_lea.vmem [#allocation2], %s393
        %p395 = pneg %p41
        %p396 = pneg %p38
        %s397 = sand.u32 %s54, 1
        %s398 = sand.u32 %s54, 1
        %s399 = smul.addr %s398, 16
        %s400 = scalar_lea.vmem [#allocation3], %s399
        %p401 = pneg %p67
        %p402 = pneg %p64
        %p403 = pneg %p88
        %p404 = pneg %p85
        %p405 = pneg %p109
        %p406 = pneg %p106
        %p407 = pneg %p130
        %p408 = pneg %p127
        %p409 = pneg %p151
        %p410 = pneg %p148
        %p411 = pneg %p172
        %p412 = pneg %p169
        %p413 = pneg %p193
        %p414 = pneg %p190
        %p415 = pneg %p214
        %p416 = pneg %p211
        %p417 = pneg %p240
        %p418 = pneg %p237
        %s419 = sand.u32 %s227, 1
        %s420 = sand.u32 %s227, 1
        %s421 = smul.addr %s420, 16
        %s422 = scalar_lea.vmem [#allocation4], %s421
        %v424 = vld [vmem:[%s380] sm:$0xff]
        %v425 = vld [vmem:[%s380 + $0x8] sm:$0xff]
        %v426 = vpack.c.bf16 %v425, %v424
        %v427 = vld [vmem:[%s387] sm:$0xff]
        %v428 = vld [vmem:[%s387 + $0x8] sm:$0xff]
        %v429 = vpack.c.bf16 %v428, %v427
        %v430 = vld [vmem:[%s2] sm:$0xf]
        %v431 = vld [vmem:[%s2 + $0x4] sm:$0xf]
        %v432 = vld [vmem:[%s2 + $0x8] sm:$0xf]
        %v433 = vld [vmem:[%s2 + $0xc] sm:$0xf]
        %v434 = vld [vmem:[%s3] sm:$0xf]
        %v435 = vld [vmem:[%s3 + $0x4] sm:$0xf]
        %v436 = vld [vmem:[%s3 + $0x8] sm:$0xf]
        %v437 = vld [vmem:[%s3 + $0xc] sm:$0xf]
        %v442 = vunpack.c.l.b16 %v434
        %v443 = vunpack.c.l.b16 %v435
        %v444 = vunpack.c.l.b16 %v436
        %v445 = vunpack.c.l.b16 %v437
        %v446 = vpack.c.b16 %v443, %v442
        %v447 = vpack.c.b16 %v445, %v444
        %vm450 = vcmask 261120
        %v452 = vsel %vm450, %v429, 0
        %454 = vmatprep.subr.bf16.mxu0 0
        %455 = vmatpush1.bf16.msra.mxu0 %v446
        %456 = vmatprep.subr.bf16.mxu0 0
        %457 = vmatpush1.bf16.msra.mxu0 %v447
        %458 = vmatprep.subr.bf16.mxu0 0
        %459 = vmatpush1.bf16.msra.mxu0 0
        %460 = vmatprep.subr.bf16.mxu0 0
        %461 = vmatpush1.bf16.msra.mxu0 0
        %462 = vmatprep.subr.bf16.mxu0 0
        %463 = vmatpush1.bf16.msra.mxu0 0
        %464 = vmatprep.subr.bf16.mxu0 0
        %465 = vmatpush1.bf16.msra.mxu0 0
        %466 = vmatprep.subr.bf16.mxu0 0
        %467 = vmatpush1.bf16.msra.mxu0 0
        %468 = vmatprep.subr.bf16.mxu0 0
        %469 = vmatpush1.bf16.msra.mxu0 0
        %470 = vmatprep.subr.bf16.mxu0 0
        %471 = vmatpush1.bf16.msra.mxu0 0
        %472 = vmatprep.subr.bf16.mxu0 0
        %473 = vmatpush1.bf16.msra.mxu0 0
        %474 = vmatprep.subr.bf16.mxu0 0
        %475 = vmatpush1.bf16.msra.mxu0 0
        %476 = vmatprep.subr.bf16.mxu0 0
        %477 = vmatpush1.bf16.msra.mxu0 0
        %478 = vmatprep.subr.bf16.mxu0 0
        %479 = vmatpush1.bf16.msra.mxu0 0
        %480 = vmatprep.subr.bf16.mxu0 0
        %481 = vmatpush1.bf16.msra.mxu0 0
        %482 = vmatprep.subr.bf16.mxu0 0
        %483 = vmatpush1.bf16.msra.mxu0 0
        %484 = vmatprep.subr.bf16.mxu0 0
        %485 = vmatpush1.bf16.msra.mxu0 0
        %486 = vmatprep.mubr.bf16.mxu0 0
        %487 = vmatmul.mubr.bf16.gmra.mrb[0].mxu0 %v452
        %v488 = vpop.f32.mrb[0].mxu0
        %v489 = vadd.f32 0.0, %v488
        %v490 = vpop.f32.mrb[0].mxu0
        %v491 = vpop.f32.mrb[0].mxu0
        %v492 = vadd.f32 0.0, %v491
        %v493 = vpop.f32.mrb[0].mxu0
        %494 = vdwg.mxu0
        %v499 = vunpack.c.l.b16 %v430
        %v500 = vunpack.c.l.b16 %v431
        %v501 = vunpack.c.l.b16 %v432
        %v502 = vunpack.c.l.b16 %v433
        %v503 = vpack.c.b16 %v500, %v499
        %v504 = vpack.c.b16 %v502, %v501
        %v508 = vsel %vm450, %v426, 0
        %510 = vmatprep.subr.bf16.mxu0 0
        %511 = vmatpush1.bf16.msra.mxu0 %v503
        %512 = vmatprep.subr.bf16.mxu0 0
        %513 = vmatpush1.bf16.msra.mxu0 %v504
        %514 = vmatprep.subr.bf16.mxu0 0
        %515 = vmatpush1.bf16.msra.mxu0 0
        %516 = vmatprep.subr.bf16.mxu0 0
        %517 = vmatpush1.bf16.msra.mxu0 0
        %518 = vmatprep.subr.bf16.mxu0 0
        %519 = vmatpush1.bf16.msra.mxu0 0
        %520 = vmatprep.subr.bf16.mxu0 0
        %521 = vmatpush1.bf16.msra.mxu0 0
        %522 = vmatprep.subr.bf16.mxu0 0
        %523 = vmatpush1.bf16.msra.mxu0 0
        %524 = vmatprep.subr.bf16.mxu0 0
        %525 = vmatpush1.bf16.msra.mxu0 0
        %526 = vmatprep.subr.bf16.mxu0 0
        %527 = vmatpush1.bf16.msra.mxu0 0
        %528 = vmatprep.subr.bf16.mxu0 0
        %529 = vmatpush1.bf16.msra.mxu0 0
        %530 = vmatprep.subr.bf16.mxu0 0
        %531 = vmatpush1.bf16.msra.mxu0 0
        %532 = vmatprep.subr.bf16.mxu0 0
        %533 = vmatpush1.bf16.msra.mxu0 0
        %534 = vmatprep.subr.bf16.mxu0 0
        %535 = vmatpush1.bf16.msra.mxu0 0
        %536 = vmatprep.subr.bf16.mxu0 0
        %537 = vmatpush1.bf16.msra.mxu0 0
        %538 = vmatprep.subr.bf16.mxu0 0
        %539 = vmatpush1.bf16.msra.mxu0 0
        %540 = vmatprep.subr.bf16.mxu0 0
        %541 = vmatpush1.bf16.msra.mxu0 0
        %542 = vmatprep.mubr.bf16.mxu0 0
        %543 = vmatmul.mubr.bf16.gmra.mrb[0].mxu0 %v508
        %v544 = vpop.f32.mrb[0].mxu0
        %v545 = vadd.f32 %v489, %v544
        %v546 = vpop.f32.mrb[0].mxu0
        %v547 = vpop.f32.mrb[0].mxu0
        %v548 = vadd.f32 %v492, %v547
        %v549 = vpop.f32.mrb[0].mxu0
        %550 = vdwg.mxu0
        %v551 = vld [vmem:[%s4] sm:$0x1]
        %v553 = vlaneseq
        %v554 = vshrl.u32 %v553, 7
        %v555 = vsub.s32 0, %v554
        %v556 = vrot.slane %v551, %v555
        %v558 = vadd.f32 %v545, %v556
        %v559 = vadd.f32 %v548, %v556
        %v560 = vmax.f32 %v558, 0.0
        %v561 = vmax.f32 %v559, 0.0
        %v562 = vpack.c.bf16 %v561, %v560
        %v563 = vld [vmem:[%s5] sm:$0xf]
        %v564 = vld [vmem:[%s5 + $0x4] sm:$0xf]
        %v565 = vld [vmem:[%s5 + $0x8] sm:$0xf]
        %v566 = vld [vmem:[%s5 + $0xc] sm:$0xf]
        %v567 = vld [vmem:[%s5 + $0x10] sm:$0xf]
        %v568 = vld [vmem:[%s5 + $0x14] sm:$0xf]
        %v569 = vld [vmem:[%s5 + $0x18] sm:$0xf]
        %v570 = vld [vmem:[%s5 + $0x1c] sm:$0xf]
        %v571 = vld [vmem:[%s5 + $0x20] sm:$0xf]
        %v572 = vld [vmem:[%s5 + $0x24] sm:$0xf]
        %v573 = vld [vmem:[%s5 + $0x28] sm:$0xf]
        %v574 = vld [vmem:[%s5 + $0x2c] sm:$0xf]
        %v575 = vld [vmem:[%s5 + $0x30] sm:$0xf]
        %v576 = vld [vmem:[%s5 + $0x34] sm:$0xf]
        %v577 = vld [vmem:[%s5 + $0x38] sm:$0xf]
        %v578 = vld [vmem:[%s5 + $0x3c] sm:$0xf]
        %v579 = vld [vmem:[%s6] sm:$0x1]
        %v581 = vlaneseq
        %v582 = vshrl.u32 %v581, 7
        %v583 = vsub.s32 0, %v582
        %v584 = vrot.slane %v579, %v583
        %v602 = vunpack.c.l.b16 %v563
        %v603 = vunpack.c.l.b16 %v564
        %v604 = vunpack.c.l.b16 %v565
        %v605 = vunpack.c.l.b16 %v566
        %v606 = vunpack.c.l.b16 %v567
        %v607 = vunpack.c.l.b16 %v568
        %v608 = vunpack.c.l.b16 %v569
        %v609 = vunpack.c.l.b16 %v570
        %v610 = vunpack.c.l.b16 %v571
        %v611 = vunpack.c.l.b16 %v572
        %v612 = vunpack.c.l.b16 %v573
        %v613 = vunpack.c.l.b16 %v574
        %v614 = vunpack.c.l.b16 %v575
        %v615 = vunpack.c.l.b16 %v576
        %v616 = vunpack.c.l.b16 %v577
        %v617 = vunpack.c.l.b16 %v578
        %v618 = vpack.c.b16 %v603, %v602
        %v619 = vpack.c.b16 %v605, %v604
        %v620 = vpack.c.b16 %v607, %v606
        %v621 = vpack.c.b16 %v609, %v608
        %v622 = vpack.c.b16 %v611, %v610
        %v623 = vpack.c.b16 %v613, %v612
        %v624 = vpack.c.b16 %v615, %v614
        %v625 = vpack.c.b16 %v617, %v616
        %634 = vmatprep.subr.bf16.mxu0 0
        %635 = vmatpush1.bf16.msra.mxu0 %v618
        %636 = vmatprep.subr.bf16.mxu0 0
        %637 = vmatpush1.bf16.msra.mxu0 %v619
        %638 = vmatprep.subr.bf16.mxu0 0
        %639 = vmatpush1.bf16.msra.mxu0 %v620
        %640 = vmatprep.subr.bf16.mxu0 0
        %641 = vmatpush1.bf16.msra.mxu0 %v621
        %642 = vmatprep.subr.bf16.mxu0 0
        %643 = vmatpush1.bf16.msra.mxu0 %v622
        %644 = vmatprep.subr.bf16.mxu0 0
        %645 = vmatpush1.bf16.msra.mxu0 %v623
        %646 = vmatprep.subr.bf16.mxu0 0
        %647 = vmatpush1.bf16.msra.mxu0 %v624
        %648 = vmatprep.subr.bf16.mxu0 0
        %649 = vmatpush1.bf16.msra.mxu0 %v625
        %650 = vmatprep.subr.bf16.mxu0 0
        %651 = vmatpush1.bf16.msra.mxu0 0
        %652 = vmatprep.subr.bf16.mxu0 0
        %653 = vmatpush1.bf16.msra.mxu0 0
        %654 = vmatprep.subr.bf16.mxu0 0
        %655 = vmatpush1.bf16.msra.mxu0 0
        %656 = vmatprep.subr.bf16.mxu0 0
        %657 = vmatpush1.bf16.msra.mxu0 0
        %658 = vmatprep.subr.bf16.mxu0 0
        %659 = vmatpush1.bf16.msra.mxu0 0
        %660 = vmatprep.subr.bf16.mxu0 0
        %661 = vmatpush1.bf16.msra.mxu0 0
        %662 = vmatprep.subr.bf16.mxu0 0
        %663 = vmatpush1.bf16.msra.mxu0 0
        %664 = vmatprep.subr.bf16.mxu0 0
        %665 = vmatpush1.bf16.msra.mxu0 0
        %666 = vmatprep.mubr.bf16.mxu0 0
        %667 = vmatmul.mubr.bf16.gmra.mrb[0].mxu0 %v562
        %v668 = vpop.f32.mrb[0].mxu0
        %v669 = vadd.f32 %v584, %v668
        %v670 = vpop.f32.mrb[0].mxu0
        %v671 = vpop.f32.mrb[0].mxu0
        %v672 = vadd.f32 %v584, %v671
        %v673 = vpop.f32.mrb[0].mxu0
        %674 = vdwg.mxu0
        %v675 = vmax.f32 %v669, 0.0
        %v676 = vmax.f32 %v672, 0.0
        %v677 = vpack.c.bf16 %v676, %v675
        %v678 = vld [vmem:[%s7] sm:$0xf]
        %v679 = vld [vmem:[%s7 + $0x4] sm:$0xf]
        %v680 = vld [vmem:[%s7 + $0x8] sm:$0xf]
        %v681 = vld [vmem:[%s7 + $0xc] sm:$0xf]
        %v682 = vld [vmem:[%s7 + $0x10] sm:$0xf]
        %v683 = vld [vmem:[%s7 + $0x14] sm:$0xf]
        %v684 = vld [vmem:[%s7 + $0x18] sm:$0xf]
        %v685 = vld [vmem:[%s7 + $0x1c] sm:$0xf]
        %v686 = vld [vmem:[%s8] sm:$0x1]
        %v688 = vlaneseq
        %v689 = vshrl.u32 %v688, 7
        %v690 = vsub.s32 0, %v689
        %v691 = vrot.slane %v686, %v690
        %v701 = vunpack.c.l.b16 %v678
        %v702 = vunpack.c.l.b16 %v679
        %v703 = vunpack.c.l.b16 %v680
        %v704 = vunpack.c.l.b16 %v681
        %v705 = vunpack.c.l.b16 %v682
        %v706 = vunpack.c.l.b16 %v683
        %v707 = vunpack.c.l.b16 %v684
        %v708 = vunpack.c.l.b16 %v685
        %v709 = vpack.c.b16 %v702, %v701
        %v710 = vpack.c.b16 %v704, %v703
        %v711 = vpack.c.b16 %v706, %v705
        %v712 = vpack.c.b16 %v708, %v707
        %vm717 = vcmask 523264
        %v719 = vsel %vm717, %v677, 0
        %721 = vmatprep.subr.bf16.mxu0 0
        %722 = vmatpush1.bf16.msra.mxu0 %v709
        %723 = vmatprep.subr.bf16.mxu0 0
        %724 = vmatpush1.bf16.msra.mxu0 %v710
        %725 = vmatprep.subr.bf16.mxu0 0
        %726 = vmatpush1.bf16.msra.mxu0 %v711
        %727 = vmatprep.subr.bf16.mxu0 0
        %728 = vmatpush1.bf16.msra.mxu0 %v712
        %729 = vmatprep.subr.bf16.mxu0 0
        %730 = vmatpush1.bf16.msra.mxu0 0
        %731 = vmatprep.subr.bf16.mxu0 0
        %732 = vmatpush1.bf16.msra.mxu0 0
        %733 = vmatprep.subr.bf16.mxu0 0
        %734 = vmatpush1.bf16.msra.mxu0 0
        %735 = vmatprep.subr.bf16.mxu0 0
        %736 = vmatpush1.bf16.msra.mxu0 0
        %737 = vmatprep.subr.bf16.mxu0 0
        %738 = vmatpush1.bf16.msra.mxu0 0
        %739 = vmatprep.subr.bf16.mxu0 0
        %740 = vmatpush1.bf16.msra.mxu0 0
        %741 = vmatprep.subr.bf16.mxu0 0
        %742 = vmatpush1.bf16.msra.mxu0 0
        %743 = vmatprep.subr.bf16.mxu0 0
        %744 = vmatpush1.bf16.msra.mxu0 0
        %745 = vmatprep.subr.bf16.mxu0 0
        %746 = vmatpush1.bf16.msra.mxu0 0
        %747 = vmatprep.subr.bf16.mxu0 0
        %748 = vmatpush1.bf16.msra.mxu0 0
        %749 = vmatprep.subr.bf16.mxu0 0
        %750 = vmatpush1.bf16.msra.mxu0 0
        %751 = vmatprep.subr.bf16.mxu0 0
        %752 = vmatpush1.bf16.msra.mxu0 0
        %753 = vmatprep.mubr.bf16.mxu0 0
        %754 = vmatmul.mubr.bf16.gmra.mrb[0].mxu0 %v719
        %v755 = vpop.f32.mrb[0].mxu0
        %v756 = vadd.f32 %v691, %v755
        %v757 = vpop.f32.mrb[0].mxu0
        %v758 = vpop.f32.mrb[0].mxu0
        %v759 = vadd.f32 %v691, %v758
        %v760 = vpop.f32.mrb[0].mxu0
        %761 = vdwg.mxu0
        %762 = vst [vmem:[%s422] sm:$0xff] %v756
        %763 = vst [vmem:[%s422 + $0x8] sm:$0xff] %v759
        %s764 = sand.u32 %s227, 1
        %s765 = sand.u32 %s227, 1
        %s766 = smul.addr %s765, 16
        %s767 = scalar_lea.vmem [#allocation4], %s766
        // Predicated region
        $region133: #{transformer_forward.11} parent=123 // pred_check
          %p768 = pneg %p237
        $region134: #{transformer_forward.11} parent=123 // pred_check_branch
          %770 = sbr.rel (%p768) target = $region136
        $region135: #{transformer_forward.11} parent=123 // pred_region
          %s771 = smul.addr %s20, 8
          %s772 = scalar_lea.vmem %s9, %s771
          // Predicated region
          $region137: #{transformer_forward.11} parent=135 // pred_check
            _
          $region138: #{transformer_forward.11} parent=135 // pred_check_branch
            %774 = sbr.rel (0) target = $region140
          $region139: #{transformer_forward.11} parent=135 // pred_region
            // Predicated region
            $region141: #{transformer_forward.11} parent=139 // pred_check
              _
            $region142: #{transformer_forward.11} parent=139 // pred_check_branch
              %776 = sbr.rel (0) target = $region144
            $region143: #{transformer_forward.11} parent=139 // pred_region
              // Predicated region
              $region156: #{transformer_forward.11} parent=143 // pred_check
                _
              $region157: #{transformer_forward.11} parent=143 // pred_check_branch
                %793 = sbr.rel (0) target = $region159
              $region158: #{transformer_forward.11} parent=143 // pred_region
                loop: start=0, step=1, limit=1
                $region160: #{transformer_forward.11} parent=158 // loop_pre_header
                  _
                $region161: #{transformer_forward.11} parent=158 // loop_header
                  %s795 = sphi 0, %s799
                  %p796 = scmp.ge.s32.totalorder %s795, 1
                  %s800 = sphi %s767, %s767
                  %s801 = sphi %s772, %s772
                $region162: #{transformer_forward.11} parent=158 // loop_header_branch
                  %798 = sbr.rel (%p796) target = $region166
                $region163: #{transformer_forward.11} parent=158 // loop_body
                  %v802 = vld [vmem:[%s800] sm:$0xff]
                  %803 = vst [vmem:[%s801] sm:$0xff] %v802
                  %v804 = vld [vmem:[%s800 + $0x8] sm:$0xff]
                  %805 = vst [vmem:[%s801 + $0x10] sm:$0xff] %v804
                $region164: #{transformer_forward.11} parent=158 // loop_footer
                  %s799 = sadd.s32 1, %s795
                $region165: #{transformer_forward.11} parent=158 // loop_footer_branch
                  %794 = sbr.rel target = $region161
                $region166: #{transformer_forward.11} parent=158 // loop_exit
                  _
              $region159: #{transformer_forward.11} parent=143 // pred_fallthru
                _
              // Predicated region
              $region167: #{transformer_forward.11} parent=143 // pred_check
                _
              $region168: #{transformer_forward.11} parent=143 // pred_check_branch
                %807 = sbr.rel target = $region170
              $region169: #{transformer_forward.11} parent=143 // pred_region
                _
              $region170: #{transformer_forward.11} parent=143 // pred_fallthru
                _
            $region144: #{transformer_forward.11} parent=139 // pred_fallthru
              _
            // Predicated region
            $region145: #{transformer_forward.11} parent=139 // pred_check
              _
            $region146: #{transformer_forward.11} parent=139 // pred_check_branch
              %778 = sbr.rel target = $region148
            $region147: #{transformer_forward.11} parent=139 // pred_region
              loop: start=0, step=1, limit=1
              $region149: #{transformer_forward.11} parent=147 // loop_pre_header
                _
              $region150: #{transformer_forward.11} parent=147 // loop_header
                %s781 = sphi 0, %s785
                %p782 = scmp.ge.s32.totalorder %s781, 1
                %s786 = sphi %s767, %s767
                %s787 = sphi %s772, %s772
              $region151: #{transformer_forward.11} parent=147 // loop_header_branch
                %784 = sbr.rel (%p782) target = $region155
              $region152: #{transformer_forward.11} parent=147 // loop_body
                %v788 = vld [vmem:[%s786] sm:$0xff]
                %789 = vst [vmem:[%s787] sm:$0xff] %v788
                %v790 = vld [vmem:[%s786 + $0x8] sm:$0xff]
                %791 = vst [vmem:[%s787 + $0x10] sm:$0xff] %v790
              $region153: #{transformer_forward.11} parent=147 // loop_footer
                %s785 = sadd.s32 1, %s781
              $region154: #{transformer_forward.11} parent=147 // loop_footer_branch
                %780 = sbr.rel target = $region150
              $region155: #{transformer_forward.11} parent=147 // loop_exit
                _
            $region148: #{transformer_forward.11} parent=139 // pred_fallthru
              _
          $region140: #{transformer_forward.11} parent=135 // pred_fallthru
            _
          %808 = vnop
        $region136: #{transformer_forward.11} parent=123 // pred_fallthru
          _
      $region124: #{transformer_forward.11} parent=5 // pred_fallthru
        _
      %p809 = scmp.le.s32.totalorder 2, %s15
      // Predicated region
      $region171: #{transformer_forward.11} parent=5 // pred_check
        %p810 = pneg %p809
      $region172: #{transformer_forward.11} parent=5 // pred_check_branch
        %812 = sbr.rel (%p810) target = $region174
      $region173: #{transformer_forward.11} parent=5 // pred_region
        %s813 = ssub.s32 %s15, 2
        // Predicated region
        $region175: #{transformer_forward.11} parent=173 // pred_check
          %p814 = pneg %p243
        $region176: #{transformer_forward.11} parent=173 // pred_check_branch
          %816 = sbr.rel (%p814) target = $region178
        $region177: #{transformer_forward.11} parent=173 // pred_region
          %s817 = sand.u32 %s228, 1
          %s818 = sand.u32 %s228, 1
          %s819 = smul.addr %s818, 16
          %s820 = scalar_lea.vmem [#allocation4], %s819
        $region178: #{transformer_forward.11} parent=173 // pred_fallthru
          _
      $region174: #{transformer_forward.11} parent=5 // pred_fallthru
        _
    $region6: #{transformer_forward.11} parent=1 // loop_footer
      %s19 = sadd.s32 1, %s15
    $region7: #{transformer_forward.11} parent=1 // loop_footer_branch
      %14 = sbr.rel target = $region3
    $region8: #{transformer_forward.11} parent=1 // loop_exit
      _

// kernel: transformer_forward.8
$region0: #{transformer_forward.8}
  #allocation0 [shape = 'u32[]', space=smem, size = 0x4, offset = 0x4, fixed_abs, tag = 'smem constant byte address 0x4 - core index']
  #allocation1 [shape = 'u32[144,128]{1,0:T(1,128)}', space=vmem, size = 0x12000, scoped, tag = 'internal scratch']
  %s0 = inlined_call_operand.vmem [shape: f32[2,16,32], index: 0, kind: input, shape index: {}]
  %s1 = inlined_call_operand.vmem [shape: f32[1,32], index: 1, kind: input, shape index: {}]
  %s2 = inlined_call_operand.vmem [shape: f32[1,32], index: 2, kind: input, shape index: {}]
  %s3 = inlined_call_operand.vmem [shape: bf16[32,96], index: 3, kind: input, shape index: {}]
  %s4 = inlined_call_operand.vmem [shape: f32[1,96], index: 4, kind: input, shape index: {}]
  %s5 = inlined_call_operand.vmem [shape: bf16[96,32], index: 5, kind: input, shape index: {}]
  %s6 = inlined_call_operand.vmem [shape: f32[1,32], index: 6, kind: input, shape index: {}]
  %s7 = inlined_call_operand.vmem [shape: bf16[96,32], index: 7, kind: input, shape index: {}]
  %s8 = inlined_call_operand.vmem [shape: f32[1,32], index: 8, kind: input, shape index: {}]
  %s9 = inlined_call_operand.vmem [shape: bf16[96,32], index: 9, kind: input, shape index: {}]
  %s10 = inlined_call_operand.vmem [shape: f32[1,32], index: 10, kind: input, shape index: {}]
  %s11 = inlined_call_operand.vmem [shape: bf16[32,32], index: 11, kind: input, shape index: {}]
  %s12 = inlined_call_operand.vmem [shape: f32[1,32], index: 12, kind: input, shape index: {}]
  %s13 = inlined_call_operand.vmem [shape: f32[32,8], index: 13, kind: input, shape index: {}]
  %s14 = inlined_call_operand.vmem [shape: f32[8,32], index: 14, kind: input, shape index: {}]
  %s15 = inlined_call_operand.vmem [shape: f32[1,32], index: 15, kind: input, shape index: {}]
  %s16 = inlined_call_operand.vmem [shape: f32[1,32], index: 16, kind: input, shape index: {}]
  %s17 = inlined_call_operand.vmem [shape: bf16[32,64], index: 17, kind: input, shape index: {}]
  %s18 = inlined_call_operand.vmem [shape: f32[1,64], index: 18, kind: input, shape index: {}]
  %s19 = inlined_call_operand.vmem [shape: bf16[64,32], index: 19, kind: input, shape index: {}]
  %s20 = inlined_call_operand.vmem [shape: f32[1,32], index: 20, kind: input, shape index: {}]
  %s21 = inlined_call_operand.vmem [shape: f32[2,16,32], index: 21, kind: output, shape index: {}]
  %s22 = sld [smem:[#allocation0]]
  $region189: #{transformer_forward.8} parent=0
    _
  %s24 = ssub.s32 1, %s22
  %s25 = scalar_select 0, %s24, %s22
  $region1: #{transformer_forward.8} parent=0
    #allocation2 [shape = 'u8[16384]{0}', space=vmem, size = 0x4000, scoped, tag = 'input window, operand 0']
    #allocation3 [shape = 'u8[16384]{0}', space=vmem, size = 0x4000, scoped, tag = 'output window, operand 0']
    loop: start=0, step=1, limit=4
    $region2: #{transformer_forward.8} parent=1 // loop_pre_header
      _
    $region3: #{transformer_forward.8} parent=1 // loop_header
      %s27 = sphi 0, %s31
      %p28 = scmp.ge.s32.totalorder %s27, 4
      %s37 = sphi 0, %s39
      %s40 = sphi 0, %s37
      %s41 = sphi 0, %s40
      %s57 = sphi 0, %s41
      %s61 = sphi 0, %s61
      %s63 = sphi 0, %s61
      %s64 = sphi 0, %s63
      %s78 = sphi 0, %s64
      %s82 = sphi 0, %s82
      %s84 = sphi 0, %s82
      %s85 = sphi 0, %s84
      %s99 = sphi 0, %s85
      %s103 = sphi 0, %s103
      %s105 = sphi 0, %s103
      %s106 = sphi 0, %s105
      %s120 = sphi 0, %s106
      %s124 = sphi 0, %s124
      %s126 = sphi 0, %s124
      %s127 = sphi 0, %s126
      %s141 = sphi 0, %s127
      %s145 = sphi 0, %s145
      %s147 = sphi 0, %s145
      %s148 = sphi 0, %s147
      %s162 = sphi 0, %s148
      %s166 = sphi 0, %s166
      %s168 = sphi 0, %s166
      %s169 = sphi 0, %s168
      %s183 = sphi 0, %s169
      %s187 = sphi 0, %s187
      %s189 = sphi 0, %s187
      %s190 = sphi 0, %s189
      %s204 = sphi 0, %s190
      %s208 = sphi 0, %s208
      %s210 = sphi 0, %s208
      %s211 = sphi 0, %s210
      %s225 = sphi 0, %s211
      %s229 = sphi 0, %s229
      %s231 = sphi 0, %s229
      %s232 = sphi 0, %s231
      %s246 = sphi 0, %s232
      %s250 = sphi 0, %s250
      %s252 = sphi 0, %s250
      %s253 = sphi 0, %s252
      %s267 = sphi 0, %s253
      %s271 = sphi 0, %s271
      %s273 = sphi 0, %s271
      %s274 = sphi 0, %s273
      %s288 = sphi 0, %s274
      %s292 = sphi 0, %s292
      %s294 = sphi 0, %s292
      %s295 = sphi 0, %s294
      %s309 = sphi 0, %s295
      %s313 = sphi 0, %s313
      %s315 = sphi 0, %s313
      %s316 = sphi 0, %s315
      %s330 = sphi 0, %s316
      %s334 = sphi 0, %s334
      %s336 = sphi 0, %s334
      %s337 = sphi 0, %s336
      %s351 = sphi 0, %s337
      %s355 = sphi 0, %s355
      %s357 = sphi 0, %s355
      %s358 = sphi 0, %s357
      %s372 = sphi 0, %s358
      %s376 = sphi 0, %s376
      %s378 = sphi 0, %s376
      %s379 = sphi 0, %s378
      %s393 = sphi 0, %s379
      %s397 = sphi 0, %s397
      %s399 = sphi 0, %s397
      %s400 = sphi 0, %s399
      %s414 = sphi 0, %s400
      %s418 = sphi 0, %s418
      %s420 = sphi 0, %s418
      %s421 = sphi 0, %s420
      %s435 = sphi 0, %s421
      %s439 = sphi 0, %s439
      %s441 = sphi 0, %s439
      %s442 = sphi 0, %s441
      %s456 = sphi 0, %s442
      %s460 = sphi 0, %s460
      %s462 = sphi 0, %s460
      %s463 = sphi 0, %s462
      %s477 = sphi 0, %s463
      %s483 = sphi 0, %s485
      %s486 = sphi 0, %s483
      %s487 = sphi 0, %s486
      %s503 = sphi 0, %s487
    $region4: #{transformer_forward.8} parent=1 // loop_header_branch
      %30 = sbr.rel (%p28) target = $region8
    $region5: #{transformer_forward.8} parent=1 // loop_body
      %s32 = ssub.s32 %s27, 1
      %s33 = ssub.s32 %s27, 2
      %s34 = sadd.s32 %s27, 1
      %s35 = ssub.s32 %s27, %s34
      %p36 = scmp.eq.s32.totalorder %s35, 0
      %s38 = sadd.s32 %s37, 1
      %s39 = scalar_select %p36, %s37, %s38
      %p42 = pneg %p36
      %p43 = scmp.eq.s32.totalorder %s27, 1
      %p44 = por %p42, %p43
      %p45 = scmp.ne.s32.totalorder %s37, %s40
      %p46 = scmp.eq.s32.totalorder %s27, 0
      %p47 = por %p45, %p46
      %p48 = scmp.ne.s32.totalorder %s37, %s40
      %p49 = scmp.eq.s32.totalorder %s32, 1
      %p50 = por %p48, %p49
      %p51 = scmp.ne.s32.totalorder %s40, %s41
      %p52 = scmp.eq.s32.totalorder %s32, 0
      %p53 = por %p51, %p52
      %p54 = scmp.ne.s32.totalorder %s40, %s41
      %p55 = scmp.eq.s32.totalorder %s33, 1
      %p56 = por %p54, %p55
      %p58 = scmp.ne.s32.totalorder %s41, %s57
      %p59 = scmp.eq.s32.totalorder %s33, 0
      %p60 = por %p58, %p59
      %s62 = sadd.s32 %s61, 1
      %p65 = scmp.eq.s32.totalorder %s27, 1
      %p66 = scmp.ne.s32.totalorder %s61, %s63
      %p67 = scmp.eq.s32.totalorder %s27, 0
      %p68 = por %p66, %p67
      %p69 = scmp.ne.s32.totalorder %s61, %s63
      %p70 = scmp.eq.s32.totalorder %s32, 1
      %p71 = por %p69, %p70
      %p72 = scmp.ne.s32.totalorder %s63, %s64
      %p73 = scmp.eq.s32.totalorder %s32, 0
      %p74 = por %p72, %p73
      %p75 = scmp.ne.s32.totalorder %s63, %s64
      %p76 = scmp.eq.s32.totalorder %s33, 1
      %p77 = por %p75, %p76
      %p79 = scmp.ne.s32.totalorder %s64, %s78
      %p80 = scmp.eq.s32.totalorder %s33, 0
      %p81 = por %p79, %p80
      %s83 = sadd.s32 %s82, 1
      %p86 = scmp.eq.s32.totalorder %s27, 1
      %p87 = scmp.ne.s32.totalorder %s82, %s84
      %p88 = scmp.eq.s32.totalorder %s27, 0
      %p89 = por %p87, %p88
      %p90 = scmp.ne.s32.totalorder %s82, %s84
      %p91 = scmp.eq.s32.totalorder %s32, 1
      %p92 = por %p90, %p91
      %p93 = scmp.ne.s32.totalorder %s84, %s85
      %p94 = scmp.eq.s32.totalorder %s32, 0
      %p95 = por %p93, %p94
      %p96 = scmp.ne.s32.totalorder %s84, %s85
      %p97 = scmp.eq.s32.totalorder %s33, 1
      %p98 = por %p96, %p97
      %p100 = scmp.ne.s32.totalorder %s85, %s99
      %p101 = scmp.eq.s32.totalorder %s33, 0
      %p102 = por %p100, %p101
      %s104 = sadd.s32 %s103, 1
      %p107 = scmp.eq.s32.totalorder %s27, 1
      %p108 = scmp.ne.s32.totalorder %s103, %s105
      %p109 = scmp.eq.s32.totalorder %s27, 0
      %p110 = por %p108, %p109
      %p111 = scmp.ne.s32.totalorder %s103, %s105
      %p112 = scmp.eq.s32.totalorder %s32, 1
      %p113 = por %p111, %p112
      %p114 = scmp.ne.s32.totalorder %s105, %s106
      %p115 = scmp.eq.s32.totalorder %s32, 0
      %p116 = por %p114, %p115
      %p117 = scmp.ne.s32.totalorder %s105, %s106
      %p118 = scmp.eq.s32.totalorder %s33, 1
      %p119 = por %p117, %p118
      %p121 = scmp.ne.s32.totalorder %s106, %s120
      %p122 = scmp.eq.s32.totalorder %s33, 0
      %p123 = por %p121, %p122
      %s125 = sadd.s32 %s124, 1
      %p128 = scmp.eq.s32.totalorder %s27, 1
      %p129 = scmp.ne.s32.totalorder %s124, %s126
      %p130 = scmp.eq.s32.totalorder %s27, 0
      %p131 = por %p129, %p130
      %p132 = scmp.ne.s32.totalorder %s124, %s126
      %p133 = scmp.eq.s32.totalorder %s32, 1
      %p134 = por %p132, %p133
      %p135 = scmp.ne.s32.totalorder %s126, %s127
      %p136 = scmp.eq.s32.totalorder %s32, 0
      %p137 = por %p135, %p136
      %p138 = scmp.ne.s32.totalorder %s126, %s127
      %p139 = scmp.eq.s32.totalorder %s33, 1
      %p140 = por %p138, %p139
      %p142 = scmp.ne.s32.totalorder %s127, %s141
      %p143 = scmp.eq.s32.totalorder %s33, 0
      %p144 = por %p142, %p143
      %s146 = sadd.s32 %s145, 1
      %p149 = scmp.eq.s32.totalorder %s27, 1
      %p150 = scmp.ne.s32.totalorder %s145, %s147
      %p151 = scmp.eq.s32.totalorder %s27, 0
      %p152 = por %p150, %p151
      %p153 = scmp.ne.s32.totalorder %s145, %s147
      %p154 = scmp.eq.s32.totalorder %s32, 1
      %p155 = por %p153, %p154
      %p156 = scmp.ne.s32.totalorder %s147, %s148
      %p157 = scmp.eq.s32.totalorder %s32, 0
      %p158 = por %p156, %p157
      %p159 = scmp.ne.s32.totalorder %s147, %s148
      %p160 = scmp.eq.s32.totalorder %s33, 1
      %p161 = por %p159, %p160
      %p163 = scmp.ne.s32.totalorder %s148, %s162
      %p164 = scmp.eq.s32.totalorder %s33, 0
      %p165 = por %p163, %p164
      %s167 = sadd.s32 %s166, 1
      %p170 = scmp.eq.s32.totalorder %s27, 1
      %p171 = scmp.ne.s32.totalorder %s166, %s168
      %p172 = scmp.eq.s32.totalorder %s27, 0
      %p173 = por %p171, %p172
      %p174 = scmp.ne.s32.totalorder %s166, %s168
      %p175 = scmp.eq.s32.totalorder %s32, 1
      %p176 = por %p174, %p175
      %p177 = scmp.ne.s32.totalorder %s168, %s169
      %p178 = scmp.eq.s32.totalorder %s32, 0
      %p179 = por %p177, %p178
      %p180 = scmp.ne.s32.totalorder %s168, %s169
      %p181 = scmp.eq.s32.totalorder %s33, 1
      %p182 = por %p180, %p181
      %p184 = scmp.ne.s32.totalorder %s169, %s183
      %p185 = scmp.eq.s32.totalorder %s33, 0
      %p186 = por %p184, %p185
      %s188 = sadd.s32 %s187, 1
      %p191 = scmp.eq.s32.totalorder %s27, 1
      %p192 = scmp.ne.s32.totalorder %s187, %s189
      %p193 = scmp.eq.s32.totalorder %s27, 0
      %p194 = por %p192, %p193
      %p195 = scmp.ne.s32.totalorder %s187, %s189
      %p196 = scmp.eq.s32.totalorder %s32, 1
      %p197 = por %p195, %p196
      %p198 = scmp.ne.s32.totalorder %s189, %s190
      %p199 = scmp.eq.s32.totalorder %s32, 0
      %p200 = por %p198, %p199
      %p201 = scmp.ne.s32.totalorder %s189, %s190
      %p202 = scmp.eq.s32.totalorder %s33, 1
      %p203 = por %p201, %p202
      %p205 = scmp.ne.s32.totalorder %s190, %s204
      %p206 = scmp.eq.s32.totalorder %s33, 0
      %p207 = por %p205, %p206
      %s209 = sadd.s32 %s208, 1
      %p212 = scmp.eq.s32.totalorder %s27, 1
      %p213 = scmp.ne.s32.totalorder %s208, %s210
      %p214 = scmp.eq.s32.totalorder %s27, 0
      %p215 = por %p213, %p214
      %p216 = scmp.ne.s32.totalorder %s208, %s210
      %p217 = scmp.eq.s32.totalorder %s32, 1
      %p218 = por %p216, %p217
      %p219 = scmp.ne.s32.totalorder %s210, %s211
      %p220 = scmp.eq.s32.totalorder %s32, 0
      %p221 = por %p219, %p220
      %p222 = scmp.ne.s32.totalorder %s210, %s211
      %p223 = scmp.eq.s32.totalorder %s33, 1
      %p224 = por %p222, %p223
      %p226 = scmp.ne.s32.totalorder %s211, %s225
      %p227 = scmp.eq.s32.totalorder %s33, 0
      %p228 = por %p226, %p227
      %s230 = sadd.s32 %s229, 1
      %p233 = scmp.eq.s32.totalorder %s27, 1
      %p234 = scmp.ne.s32.totalorder %s229, %s231
      %p235 = scmp.eq.s32.totalorder %s27, 0
      %p236 = por %p234, %p235
      %p237 = scmp.ne.s32.totalorder %s229, %s231
      %p238 = scmp.eq.s32.totalorder %s32, 1
      %p239 = por %p237, %p238
      %p240 = scmp.ne.s32.totalorder %s231, %s232
      %p241 = scmp.eq.s32.totalorder %s32, 0
      %p242 = por %p240, %p241
      %p243 = scmp.ne.s32.totalorder %s231, %s232
      %p244 = scmp.eq.s32.totalorder %s33, 1
      %p245 = por %p243, %p244
      %p247 = scmp.ne.s32.totalorder %s232, %s246
      %p248 = scmp.eq.s32.totalorder %s33, 0
      %p249 = por %p247, %p248
      %s251 = sadd.s32 %s250, 1
      %p254 = scmp.eq.s32.totalorder %s27, 1
      %p255 = scmp.ne.s32.totalorder %s250, %s252
      %p256 = scmp.eq.s32.totalorder %s27, 0
      %p257 = por %p255, %p256
      %p258 = scmp.ne.s32.totalorder %s250, %s252
      %p259 = scmp.eq.s32.totalorder %s32, 1
      %p260 = por %p258, %p259
      %p261 = scmp.ne.s32.totalorder %s252, %s253
      %p262 = scmp.eq.s32.totalorder %s32, 0
      %p263 = por %p261, %p262
      %p264 = scmp.ne.s32.totalorder %s252, %s253
      %p265 = scmp.eq.s32.totalorder %s33, 1
      %p266 = por %p264, %p265
      %p268 = scmp.ne.s32.totalorder %s253, %s267
      %p269 = scmp.eq.s32.totalorder %s33, 0
      %p270 = por %p268, %p269
      %s272 = sadd.s32 %s271, 1
      %p275 = scmp.eq.s32.totalorder %s27, 1
      %p276 = scmp.ne.s32.totalorder %s271, %s273
      %p277 = scmp.eq.s32.totalorder %s27, 0
      %p278 = por %p276, %p277
      %p279 = scmp.ne.s32.totalorder %s271, %s273
      %p280 = scmp.eq.s32.totalorder %s32, 1
      %p281 = por %p279, %p280
      %p282 = scmp.ne.s32.totalorder %s273, %s274
      %p283 = scmp.eq.s32.totalorder %s32, 0
      %p284 = por %p282, %p283
      %p285 = scmp.ne.s32.totalorder %s273, %s274
      %p286 = scmp.eq.s32.totalorder %s33, 1
      %p287 = por %p285, %p286
      %p289 = scmp.ne.s32.totalorder %s274, %s288
      %p290 = scmp.eq.s32.totalorder %s33, 0
      %p291 = por %p289, %p290
      %s293 = sadd.s32 %s292, 1
      %p296 = scmp.eq.s32.totalorder %s27, 1
      %p297 = scmp.ne.s32.totalorder %s292, %s294
      %p298 = scmp.eq.s32.totalorder %s27, 0
      %p299 = por %p297, %p298
      %p300 = scmp.ne.s32.totalorder %s292, %s294
      %p301 = scmp.eq.s32.totalorder %s32, 1
      %p302 = por %p300, %p301
      %p303 = scmp.ne.s32.totalorder %s294, %s295
      %p304 = scmp.eq.s32.totalorder %s32, 0
      %p305 = por %p303, %p304
      %p306 = scmp.ne.s32.totalorder %s294, %s295
      %p307 = scmp.eq.s32.totalorder %s33, 1
      %p308 = por %p306, %p307
      %p310 = scmp.ne.s32.totalorder %s295, %s309
      %p311 = scmp.eq.s32.totalorder %s33, 0
      %p312 = por %p310, %p311
      %s314 = sadd.s32 %s313, 1
      %p317 = scmp.eq.s32.totalorder %s27, 1
      %p318 = scmp.ne.s32.totalorder %s313, %s315
      %p319 = scmp.eq.s32.totalorder %s27, 0
      %p320 = por %p318, %p319
      %p321 = scmp.ne.s32.totalorder %s313, %s315
      %p322 = scmp.eq.s32.totalorder %s32, 1
      %p323 = por %p321, %p322
      %p324 = scmp.ne.s32.totalorder %s315, %s316
      %p325 = scmp.eq.s32.totalorder %s32, 0
      %p326 = por %p324, %p325
      %p327 = scmp.ne.s32.totalorder %s315, %s316
      %p328 = scmp.eq.s32.totalorder %s33, 1
      %p329 = por %p327, %p328
      %p331 = scmp.ne.s32.totalorder %s316, %s330
      %p332 = scmp.eq.s32.totalorder %s33, 0
      %p333 = por %p331, %p332
      %s335 = sadd.s32 %s334, 1
      %p338 = scmp.eq.s32.totalorder %s27, 1
      %p339 = scmp.ne.s32.totalorder %s334, %s336
      %p340 = scmp.eq.s32.totalorder %s27, 0
      %p341 = por %p339, %p340
      %p342 = scmp.ne.s32.totalorder %s334, %s336
      %p343 = scmp.eq.s32.totalorder %s32, 1
      %p344 = por %p342, %p343
      %p345 = scmp.ne.s32.totalorder %s336, %s337
      %p346 = scmp.eq.s32.totalorder %s32, 0
      %p347 = por %p345, %p346
      %p348 = scmp.ne.s32.totalorder %s336, %s337
      %p349 = scmp.eq.s32.totalorder %s33, 1
      %p350 = por %p348, %p349
      %p352 = scmp.ne.s32.totalorder %s337, %s351
      %p353 = scmp.eq.s32.totalorder %s33, 0
      %p354 = por %p352, %p353
      %s356 = sadd.s32 %s355, 1
      %p359 = scmp.eq.s32.totalorder %s27, 1
      %p360 = scmp.ne.s32.totalorder %s355, %s357
      %p361 = scmp.eq.s32.totalorder %s27, 0
      %p362 = por %p360, %p361
      %p363 = scmp.ne.s32.totalorder %s355, %s357
      %p364 = scmp.eq.s32.totalorder %s32, 1
      %p365 = por %p363, %p364
      %p366 = scmp.ne.s32.totalorder %s357, %s358
      %p367 = scmp.eq.s32.totalorder %s32, 0
      %p368 = por %p366, %p367
      %p369 = scmp.ne.s32.totalorder %s357, %s358
      %p370 = scmp.eq.s32.totalorder %s33, 1
      %p371 = por %p369, %p370
      %p373 = scmp.ne.s32.totalorder %s358, %s372
      %p374 = scmp.eq.s32.totalorder %s33, 0
      %p375 = por %p373, %p374
      %s377 = sadd.s32 %s376, 1
      %p380 = scmp.eq.s32.totalorder %s27, 1
      %p381 = scmp.ne.s32.totalorder %s376, %s378
      %p382 = scmp.eq.s32.totalorder %s27, 0
      %p383 = por %p381, %p382
      %p384 = scmp.ne.s32.totalorder %s376, %s378
      %p385 = scmp.eq.s32.totalorder %s32, 1
      %p386 = por %p384, %p385
      %p387 = scmp.ne.s32.totalorder %s378, %s379
      %p388 = scmp.eq.s32.totalorder %s32, 0
      %p389 = por %p387, %p388
      %p390 = scmp.ne.s32.totalorder %s378, %s379
      %p391 = scmp.eq.s32.totalorder %s33, 1
      %p392 = por %p390, %p391
      %p394 = scmp.ne.s32.totalorder %s379, %s393
      %p395 = scmp.eq.s32.totalorder %s33, 0
      %p396 = por %p394, %p395
      %s398 = sadd.s32 %s397, 1
      %p401 = scmp.eq.s32.totalorder %s27, 1
      %p402 = scmp.ne.s32.totalorder %s397, %s399
      %p403 = scmp.eq.s32.totalorder %s27, 0
      %p404 = por %p402, %p403
      %p405 = scmp.ne.s32.totalorder %s397, %s399
      %p406 = scmp.eq.s32.totalorder %s32, 1
      %p407 = por %p405, %p406
      %p408 = scmp.ne.s32.totalorder %s399, %s400
      %p409 = scmp.eq.s32.totalorder %s32, 0
      %p410 = por %p408, %p409
      %p411 = scmp.ne.s32.totalorder %s399, %s400
      %p412 = scmp.eq.s32.totalorder %s33, 1
      %p413 = por %p411, %p412
      %p415 = scmp.ne.s32.totalorder %s400, %s414
      %p416 = scmp.eq.s32.totalorder %s33, 0
      %p417 = por %p415, %p416
      %s419 = sadd.s32 %s418, 1
      %p422 = scmp.eq.s32.totalorder %s27, 1
      %p423 = scmp.ne.s32.totalorder %s418, %s420
      %p424 = scmp.eq.s32.totalorder %s27, 0
      %p425 = por %p423, %p424
      %p426 = scmp.ne.s32.totalorder %s418, %s420
      %p427 = scmp.eq.s32.totalorder %s32, 1
      %p428 = por %p426, %p427
      %p429 = scmp.ne.s32.totalorder %s420, %s421
      %p430 = scmp.eq.s32.totalorder %s32, 0
      %p431 = por %p429, %p430
      %p432 = scmp.ne.s32.totalorder %s420, %s421
      %p433 = scmp.eq.s32.totalorder %s33, 1
      %p434 = por %p432, %p433
      %p436 = scmp.ne.s32.totalorder %s421, %s435
      %p437 = scmp.eq.s32.totalorder %s33, 0
      %p438 = por %p436, %p437
      %s440 = sadd.s32 %s439, 1
      %p443 = scmp.eq.s32.totalorder %s27, 1
      %p444 = scmp.ne.s32.totalorder %s439, %s441
      %p445 = scmp.eq.s32.totalorder %s27, 0
      %p446 = por %p444, %p445
      %p447 = scmp.ne.s32.totalorder %s439, %s441
      %p448 = scmp.eq.s32.totalorder %s32, 1
      %p449 = por %p447, %p448
      %p450 = scmp.ne.s32.totalorder %s441, %s442
      %p451 = scmp.eq.s32.totalorder %s32, 0
      %p452 = por %p450, %p451
      %p453 = scmp.ne.s32.totalorder %s441, %s442
      %p454 = scmp.eq.s32.totalorder %s33, 1
      %p455 = por %p453, %p454
      %p457 = scmp.ne.s32.totalorder %s442, %s456
      %p458 = scmp.eq.s32.totalorder %s33, 0
      %p459 = por %p457, %p458
      %s461 = sadd.s32 %s460, 1
      %p464 = scmp.eq.s32.totalorder %s27, 1
      %p465 = scmp.ne.s32.totalorder %s460, %s462
      %p466 = scmp.eq.s32.totalorder %s27, 0
      %p467 = por %p465, %p466
      %p468 = scmp.ne.s32.totalorder %s460, %s462
      %p469 = scmp.eq.s32.totalorder %s32, 1
      %p470 = por %p468, %p469
      %p471 = scmp.ne.s32.totalorder %s462, %s463
      %p472 = scmp.eq.s32.totalorder %s32, 0
      %p473 = por %p471, %p472
      %p474 = scmp.ne.s32.totalorder %s462, %s463
      %p475 = scmp.eq.s32.totalorder %s33, 1
      %p476 = por %p474, %p475
      %p478 = scmp.ne.s32.totalorder %s463, %s477
      %p479 = scmp.eq.s32.totalorder %s33, 0
      %p480 = por %p478, %p479
      %s481 = ssub.s32 %s27, %s34
      %p482 = scmp.eq.s32.totalorder %s481, 0
      %s484 = sadd.s32 %s483, 1
      %s485 = scalar_select %p482, %s483, %s484
      %p488 = pneg %p482
      %p489 = scmp.eq.s32.totalorder %s27, 1
      %p490 = por %p488, %p489
      %p491 = scmp.ne.s32.totalorder %s483, %s486
      %p492 = scmp.eq.s32.totalorder %s27, 0
      %p493 = por %p491, %p492
      %p494 = scmp.ne.s32.totalorder %s483, %s486
      %p495 = scmp.eq.s32.totalorder %s32, 1
      %p496 = por %p494, %p495
      %p497 = scmp.ne.s32.totalorder %s486, %s487
      %p498 = scmp.eq.s32.totalorder %s32, 0
      %p499 = por %p497, %p498
      %p500 = scmp.ne.s32.totalorder %s486, %s487
      %p501 = scmp.eq.s32.totalorder %s33, 1
      %p502 = por %p500, %p501
      %p504 = scmp.ne.s32.totalorder %s487, %s503
      %p505 = scmp.eq.s32.totalorder %s33, 0
      %p506 = por %p504, %p505
      %p507 = scmp.le.s32.totalorder 1, %s27
      %p508 = scmp.lt.s32.totalorder %s27, 3
      %p509 = pnand %p507, %p508
      %p510 = pneg %p509
      // Predicated region
      $region9: #{transformer_forward.8} parent=5 // pred_check
        _
      $region10: #{transformer_forward.8} parent=5 // pred_check_branch
        %512 = sbr.rel (%p509) target = $region12
      $region11: #{transformer_forward.8} parent=5 // pred_region
        %s513 = ssub.s32 %s27, 1
        // Predicated region
        $region13: #{transformer_forward.8} parent=11 // pred_check
          %p514 = pneg %p74
        $region14: #{transformer_forward.8} parent=11 // pred_check_branch
          %516 = sbr.rel (%p514) target = $region16
        $region15: #{transformer_forward.8} parent=11 // pred_region
          _
        $region16: #{transformer_forward.8} parent=11 // pred_fallthru
          _
        // Predicated region
        $region17: #{transformer_forward.8} parent=11 // pred_check
          %p517 = pneg %p95
        $region18: #{transformer_forward.8} parent=11 // pred_check_branch
          %519 = sbr.rel (%p517) target = $region20
        $region19: #{transformer_forward.8} parent=11 // pred_region
          _
        $region20: #{transformer_forward.8} parent=11 // pred_fallthru
          _
        // Predicated region
        $region21: #{transformer_forward.8} parent=11 // pred_check
          %p520 = pneg %p116
        $region22: #{transformer_forward.8} parent=11 // pred_check_branch
          %522 = sbr.rel (%p520) target = $region24
        $region23: #{transformer_forward.8} parent=11 // pred_region
          _
        $region24: #{transformer_forward.8} parent=11 // pred_fallthru
          _
        // Predicated region
        $region25: #{transformer_forward.8} parent=11 // pred_check
          %p523 = pneg %p137
        $region26: #{transformer_forward.8} parent=11 // pred_check_branch
          %525 = sbr.rel (%p523) target = $region28
        $region27: #{transformer_forward.8} parent=11 // pred_region
          _
        $region28: #{transformer_forward.8} parent=11 // pred_fallthru
          _
        // Predicated region
        $region29: #{transformer_forward.8} parent=11 // pred_check
          %p526 = pneg %p158
        $region30: #{transformer_forward.8} parent=11 // pred_check_branch
          %528 = sbr.rel (%p526) target = $region32
        $region31: #{transformer_forward.8} parent=11 // pred_region
          _
        $region32: #{transformer_forward.8} parent=11 // pred_fallthru
          _
        // Predicated region
        $region33: #{transformer_forward.8} parent=11 // pred_check
          %p529 = pneg %p179
        $region34: #{transformer_forward.8} parent=11 // pred_check_branch
          %531 = sbr.rel (%p529) target = $region36
        $region35: #{transformer_forward.8} parent=11 // pred_region
          _
        $region36: #{transformer_forward.8} parent=11 // pred_fallthru
          _
        // Predicated region
        $region37: #{transformer_forward.8} parent=11 // pred_check
          %p532 = pneg %p200
        $region38: #{transformer_forward.8} parent=11 // pred_check_branch
          %534 = sbr.rel (%p532) target = $region40
        $region39: #{transformer_forward.8} parent=11 // pred_region
          _
        $region40: #{transformer_forward.8} parent=11 // pred_fallthru
          _
        // Predicated region
        $region41: #{transformer_forward.8} parent=11 // pred_check
          %p535 = pneg %p221
        $region42: #{transformer_forward.8} parent=11 // pred_check_branch
          %537 = sbr.rel (%p535) target = $region44
        $region43: #{transformer_forward.8} parent=11 // pred_region
          _
        $region44: #{transformer_forward.8} parent=11 // pred_fallthru
          _
        // Predicated region
        $region45: #{transformer_forward.8} parent=11 // pred_check
          %p538 = pneg %p242
        $region46: #{transformer_forward.8} parent=11 // pred_check_branch
          %540 = sbr.rel (%p538) target = $region48
        $region47: #{transformer_forward.8} parent=11 // pred_region
          _
        $region48: #{transformer_forward.8} parent=11 // pred_fallthru
          _
        // Predicated region
        $region49: #{transformer_forward.8} parent=11 // pred_check
          %p541 = pneg %p263
        $region50: #{transformer_forward.8} parent=11 // pred_check_branch
          %543 = sbr.rel (%p541) target = $region52
        $region51: #{transformer_forward.8} parent=11 // pred_region
          _
        $region52: #{transformer_forward.8} parent=11 // pred_fallthru
          _
        // Predicated region
        $region53: #{transformer_forward.8} parent=11 // pred_check
          %p544 = pneg %p284
        $region54: #{transformer_forward.8} parent=11 // pred_check_branch
          %546 = sbr.rel (%p544) target = $region56
        $region55: #{transformer_forward.8} parent=11 // pred_region
          _
        $region56: #{transformer_forward.8} parent=11 // pred_fallthru
          _
        // Predicated region
        $region57: #{transformer_forward.8} parent=11 // pred_check
          %p547 = pneg %p305
        $region58: #{transformer_forward.8} parent=11 // pred_check_branch
          %549 = sbr.rel (%p547) target = $region60
        $region59: #{transformer_forward.8} parent=11 // pred_region
          _
        $region60: #{transformer_forward.8} parent=11 // pred_fallthru
          _
        // Predicated region
        $region61: #{transformer_forward.8} parent=11 // pred_check
          %p550 = pneg %p326
        $region62: #{transformer_forward.8} parent=11 // pred_check_branch
          %552 = sbr.rel (%p550) target = $region64
        $region63: #{transformer_forward.8} parent=11 // pred_region
          _
        $region64: #{transformer_forward.8} parent=11 // pred_fallthru
          _
        // Predicated region
        $region65: #{transformer_forward.8} parent=11 // pred_check
          %p553 = pneg %p347
        $region66: #{transformer_forward.8} parent=11 // pred_check_branch
          %555 = sbr.rel (%p553) target = $region68
        $region67: #{transformer_forward.8} parent=11 // pred_region
          _
        $region68: #{transformer_forward.8} parent=11 // pred_fallthru
          _
        // Predicated region
        $region69: #{transformer_forward.8} parent=11 // pred_check
          %p556 = pneg %p368
        $region70: #{transformer_forward.8} parent=11 // pred_check_branch
          %558 = sbr.rel (%p556) target = $region72
        $region71: #{transformer_forward.8} parent=11 // pred_region
          _
        $region72: #{transformer_forward.8} parent=11 // pred_fallthru
          _
        // Predicated region
        $region73: #{transformer_forward.8} parent=11 // pred_check
          %p559 = pneg %p389
        $region74: #{transformer_forward.8} parent=11 // pred_check_branch
          %561 = sbr.rel (%p559) target = $region76
        $region75: #{transformer_forward.8} parent=11 // pred_region
          _
        $region76: #{transformer_forward.8} parent=11 // pred_fallthru
          _
        // Predicated region
        $region77: #{transformer_forward.8} parent=11 // pred_check
          %p562 = pneg %p410
        $region78: #{transformer_forward.8} parent=11 // pred_check_branch
          %564 = sbr.rel (%p562) target = $region80
        $region79: #{transformer_forward.8} parent=11 // pred_region
          _
        $region80: #{transformer_forward.8} parent=11 // pred_fallthru
          _
        // Predicated region
        $region81: #{transformer_forward.8} parent=11 // pred_check
          %p565 = pneg %p431
        $region82: #{transformer_forward.8} parent=11 // pred_check_branch
          %567 = sbr.rel (%p565) target = $region84
        $region83: #{transformer_forward.8} parent=11 // pred_region
          _
        $region84: #{transformer_forward.8} parent=11 // pred_fallthru
          _
        // Predicated region
        $region85: #{transformer_forward.8} parent=11 // pred_check
          %p568 = pneg %p452
        $region86: #{transformer_forward.8} parent=11 // pred_check_branch
          %570 = sbr.rel (%p568) target = $region88
        $region87: #{transformer_forward.8} parent=11 // pred_region
          _
        $region88: #{transformer_forward.8} parent=11 // pred_fallthru
          _
        // Predicated region
        $region89: #{transformer_forward.8} parent=11 // pred_check
          %p571 = pneg %p473
        $region90: #{transformer_forward.8} parent=11 // pred_check_branch
          %573 = sbr.rel (%p571) target = $region92
        $region91: #{transformer_forward.8} parent=11 // pred_region
          _
        $region92: #{transformer_forward.8} parent=11 // pred_fallthru
          _
      $region12: #{transformer_forward.8} parent=5 // pred_fallthru
        _
      %p574 = scmp.lt.s32.totalorder %s27, 2
      // Predicated region
      $region93: #{transformer_forward.8} parent=5 // pred_check
        %p575 = pneg %p574
      $region94: #{transformer_forward.8} parent=5 // pred_check_branch
        %577 = sbr.rel (%p575) target = $region96
      $region95: #{transformer_forward.8} parent=5 // pred_region
        // Predicated region
        $region97: #{transformer_forward.8} parent=95 // pred_check
          %p578 = pneg %p47
        $region98: #{transformer_forward.8} parent=95 // pred_check_branch
          %580 = sbr.rel (%p578) target = $region100
        $region99: #{transformer_forward.8} parent=95 // pred_region
          %s581 = sand.u32 %s37, 1
          %s582 = sand.u32 %s37, 1
          %s583 = smul.addr %s582, 16
          %s584 = scalar_lea.vmem [#allocation2], %s583
          %s585 = smul.addr %s27, 8
          %s586 = scalar_lea.vmem %s0, %s585
          // Predicated region
          $region101: #{transformer_forward.8} parent=99 // pred_check
            _
          $region102: #{transformer_forward.8} parent=99 // pred_check_branch
            %588 = sbr.rel (0) target = $region104
          $region103: #{transformer_forward.8} parent=99 // pred_region
            // Predicated region
            $region105: #{transformer_forward.8} parent=103 // pred_check
              _
            $region106: #{transformer_forward.8} parent=103 // pred_check_branch
              %590 = sbr.rel (0) target = $region108
            $region107: #{transformer_forward.8} parent=103 // pred_region
              // Predicated region
              $region120: #{transformer_forward.8} parent=107 // pred_check
                _
              $region121: #{transformer_forward.8} parent=107 // pred_check_branch
                %607 = sbr.rel (0) target = $region123
              $region122: #{transformer_forward.8} parent=107 // pred_region
                loop: start=0, step=1, limit=1
                $region124: #{transformer_forward.8} parent=122 // loop_pre_header
                  _
                $region125: #{transformer_forward.8} parent=122 // loop_header
                  %s609 = sphi 0, %s613
                  %p610 = scmp.ge.s32.totalorder %s609, 1
                  %s614 = sphi %s586, %s586
                  %s615 = sphi %s584, %s584
                $region126: #{transformer_forward.8} parent=122 // loop_header_branch
                  %612 = sbr.rel (%p610) target = $region130
                $region127: #{transformer_forward.8} parent=122 // loop_body
                  %v616 = vld [vmem:[%s614] sm:$0xff]
                  %617 = vst [vmem:[%s615] sm:$0xff] %v616
                  %v618 = vld [vmem:[%s614 + $0x10] sm:$0xff]
                  %619 = vst [vmem:[%s615 + $0x8] sm:$0xff] %v618
                $region128: #{transformer_forward.8} parent=122 // loop_footer
                  %s613 = sadd.s32 1, %s609
                $region129: #{transformer_forward.8} parent=122 // loop_footer_branch
                  %608 = sbr.rel target = $region125
                $region130: #{transformer_forward.8} parent=122 // loop_exit
                  _
              $region123: #{transformer_forward.8} parent=107 // pred_fallthru
                _
              // Predicated region
              $region131: #{transformer_forward.8} parent=107 // pred_check
                _
              $region132: #{transformer_forward.8} parent=107 // pred_check_branch
                %621 = sbr.rel target = $region134
              $region133: #{transformer_forward.8} parent=107 // pred_region
                _
              $region134: #{transformer_forward.8} parent=107 // pred_fallthru
                _
            $region108: #{transformer_forward.8} parent=103 // pred_fallthru
              _
            // Predicated region
            $region109: #{transformer_forward.8} parent=103 // pred_check
              _
            $region110: #{transformer_forward.8} parent=103 // pred_check_branch
              %592 = sbr.rel target = $region112
            $region111: #{transformer_forward.8} parent=103 // pred_region
              loop: start=0, step=1, limit=1
              $region113: #{transformer_forward.8} parent=111 // loop_pre_header
                _
              $region114: #{transformer_forward.8} parent=111 // loop_header
                %s595 = sphi 0, %s599
                %p596 = scmp.ge.s32.totalorder %s595, 1
                %s600 = sphi %s586, %s586
                %s601 = sphi %s584, %s584
              $region115: #{transformer_forward.8} parent=111 // loop_header_branch
                %598 = sbr.rel (%p596) target = $region119
              $region116: #{transformer_forward.8} parent=111 // loop_body
                %v602 = vld [vmem:[%s600] sm:$0xff]
                %603 = vst [vmem:[%s601] sm:$0xff] %v602
                %v604 = vld [vmem:[%s600 + $0x10] sm:$0xff]
                %605 = vst [vmem:[%s601 + $0x8] sm:$0xff] %v604
              $region117: #{transformer_forward.8} parent=111 // loop_footer
                %s599 = sadd.s32 1, %s595
              $region118: #{transformer_forward.8} parent=111 // loop_footer_branch
                %594 = sbr.rel target = $region114
              $region119: #{transformer_forward.8} parent=111 // loop_exit
                _
            $region112: #{transformer_forward.8} parent=103 // pred_fallthru
              _
          $region104: #{transformer_forward.8} parent=99 // pred_fallthru
            _
          %622 = vnop
        $region100: #{transformer_forward.8} parent=95 // pred_fallthru
          _
      $region96: #{transformer_forward.8} parent=5 // pred_fallthru
        _
      %p623 = scmp.le.s32.totalorder 1, %s27
      %p624 = scmp.lt.s32.totalorder %s27, 3
      %p625 = pnand %p623, %p624
      %p626 = pneg %p625
      // Predicated region
      $region135: #{transformer_forward.8} parent=5 // pred_check
        _
      $region136: #{transformer_forward.8} parent=5 // pred_check_branch
        %628 = sbr.rel (%p625) target = $region138
      $region137: #{transformer_forward.8} parent=5 // pred_region
        %s629 = ssub.s32 %s27, 1
        %s630 = sand.u32 %s40, 1
        %s631 = sand.u32 %s40, 1
        %s632 = smul.addr %s631, 16
        %s633 = scalar_lea.vmem [#allocation2], %s632
        // Predicated region
        $region139: #{transformer_forward.8} parent=137 // pred_check
          %p634 = pneg %p53
        $region140: #{transformer_forward.8} parent=137 // pred_check_branch
          %636 = sbr.rel (%p634) target = $region142
        $region141: #{transformer_forward.8} parent=137 // pred_region
          _
        $region142: #{transformer_forward.8} parent=137 // pred_fallthru
          _
        %s637 = sand.u32 %s40, 1
        %s638 = sand.u32 %s40, 1
        %s639 = smul.addr %s638, 16
        %s640 = scalar_lea.vmem [#allocation2], %s639
        %p641 = pneg %p53
        %p642 = pneg %p50
        %p643 = pneg %p74
        %p644 = pneg %p71
        %p645 = pneg %p95
        %p646 = pneg %p92
        %p647 = pneg %p116
        %p648 = pneg %p113
        %p649 = pneg %p137
        %p650 = pneg %p134
        %p651 = pneg %p158
        %p652 = pneg %p155
        %p653 = pneg %p179
        %p654 = pneg %p176
        %p655 = pneg %p200
        %p656 = pneg %p197
        %p657 = pneg %p221
        %p658 = pneg %p218
        %p659 = pneg %p242
        %p660 = pneg %p239
        %p661 = pneg %p263
        %p662 = pneg %p260
        %p663 = pneg %p284
        %p664 = pneg %p281
        %p665 = pneg %p305
        %p666 = pneg %p302
        %p667 = pneg %p326
        %p668 = pneg %p323
        %p669 = pneg %p347
        %p670 = pneg %p344
        %p671 = pneg %p368
        %p672 = pneg %p365
        %p673 = pneg %p389
        %p674 = pneg %p386
        %p675 = pneg %p410
        %p676 = pneg %p407
        %p677 = pneg %p431
        %p678 = pneg %p428
        %p679 = pneg %p452
        %p680 = pneg %p449
        %p681 = pneg %p473
        %p682 = pneg %p470
        %p683 = pneg %p499
        %p684 = pneg %p496
        %s685 = sand.u32 %s486, 1
        %s686 = sand.u32 %s486, 1
        %s687 = smul.addr %s686, 16
        %s688 = scalar_lea.vmem [#allocation3], %s687
        %v690 = vld [vmem:[%s633] sm:$0xff]
        %v691 = vld [vmem:[%s633 + $0x8] sm:$0xff]
        %v692 = vld [vmem:[%s1] sm:$0x1]
        %v693 = vld [vmem:[%s2] sm:$0x1]
        %vm694 = vcmask 261120
        %v695 = vsel %vm694, %v690, 0.0
        %696 = vadd.xlane.f32.xlu0 %v695
        %v697 = vpop.xlane.xlu0 %696
        %v698 = vsel %vm694, %v691, 0.0
        %699 = vadd.xlane.f32.xlu0 %v698
        %v700 = vpop.xlane.xlu0 %699
        %v701 = vrcp.pop 32.0
        %v702 = vmul.f32 %v697, %v701
        %v703 = vmul.f32 %v700, %v701
        %v704 = vsub.f32 %v690, %v702
        %v705 = vsub.f32 %v691, %v703
        %v706 = vmul.f32 %v704, %v704
        %v707 = vmul.f32 %v705, %v705
        %v708 = vsel %vm694, %v706, 0.0
        %709 = vadd.xlane.f32.xlu0 %v708
        %v710 = vpop.xlane.xlu0 %709
        %v711 = vsel %vm694, %v707, 0.0
        %712 = vadd.xlane.f32.xlu0 %v711
        %v713 = vpop.xlane.xlu0 %712
        %v714 = vmul.f32 %v710, %v701
        %v715 = vmul.f32 %v713, %v701
        %v716 = vadd.f32 %v714, 1e-05
        %v717 = vadd.f32 %v715, 1e-05
        %v718 = vrsqrt.pop %v716
        %v719 = vrsqrt.pop %v717
        %v720 = vmul.f32 %v704, %v718
        %v721 = vmul.f32 %v705, %v719
        %v723 = vlaneseq
        %v724 = vshrl.u32 %v723, 7
        %v725 = vsub.s32 0, %v724
        %v726 = vrot.slane %v692, %v725
        %v728 = vmul.f32 %v720, %v726
        %v729 = vmul.f32 %v721, %v726
        %v731 = vlaneseq
        %v732 = vshrl.u32 %v731, 7
        %v733 = vsub.s32 0, %v732
        %v734 = vrot.slane %v693, %v733
        %v736 = vadd.f32 %v728, %v734
        %v737 = vadd.f32 %v729, %v734
        %v738 = vpack.c.bf16 %v737, %v736
        %v739 = vld [vmem:[%s3] sm:$0xf]
        %v740 = vld [vmem:[%s3 + $0x4] sm:$0xf]
        %v741 = vld [vmem:[%s3 + $0x8] sm:$0xf]
        %v742 = vld [vmem:[%s3 + $0xc] sm:$0xf]
        %v743 = vld [vmem:[%s4] sm:$0x1]
        %v745 = vlaneseq
        %v746 = vshrl.u32 %v745, 7
        %v747 = vsub.s32 0, %v746
        %v748 = vrot.slane %v743, %v747
        %v754 = vunpack.c.l.b16 %v739
        %v755 = vunpack.c.l.b16 %v740
        %v756 = vunpack.c.l.b16 %v741
        %v757 = vunpack.c.l.b16 %v742
        %v758 = vpack.c.b16 %v755, %v754
        %v759 = vpack.c.b16 %v757, %v756
        %v763 = vsel %vm694, %v738, 0
        %765 = vmatprep.subr.bf16.mxu0 0
        %766 = vmatpush1.bf16.msra.mxu0 %v758
        %767 = vmatprep.subr.bf16.mxu0 0
        %768 = vmatpush1.bf16.msra.mxu0 %v759
        %769 = vmatprep.subr.bf16.mxu0 0
        %770 = vmatpush1.bf16.msra.mxu0 0
        %771 = vmatprep.subr.bf16.mxu0 0
        %772 = vmatpush1.bf16.msra.mxu0 0
        %773 = vmatprep.subr.bf16.mxu0 0
        %774 = vmatpush1.bf16.msra.mxu0 0
        %775 = vmatprep.subr.bf16.mxu0 0
        %776 = vmatpush1.bf16.msra.mxu0 0
        %777 = vmatprep.subr.bf16.mxu0 0
        %778 = vmatpush1.bf16.msra.mxu0 0
        %779 = vmatprep.subr.bf16.mxu0 0
        %780 = vmatpush1.bf16.msra.mxu0 0
        %781 = vmatprep.subr.bf16.mxu0 0
        %782 = vmatpush1.bf16.msra.mxu0 0
        %783 = vmatprep.subr.bf16.mxu0 0
        %784 = vmatpush1.bf16.msra.mxu0 0
        %785 = vmatprep.subr.bf16.mxu0 0
        %786 = vmatpush1.bf16.msra.mxu0 0
        %787 = vmatprep.subr.bf16.mxu0 0
        %788 = vmatpush1.bf16.msra.mxu0 0
        %789 = vmatprep.subr.bf16.mxu0 0
        %790 = vmatpush1.bf16.msra.mxu0 0
        %791 = vmatprep.subr.bf16.mxu0 0
        %792 = vmatpush1.bf16.msra.mxu0 0
        %793 = vmatprep.subr.bf16.mxu0 0
        %794 = vmatpush1.bf16.msra.mxu0 0
        %795 = vmatprep.subr.bf16.mxu0 0
        %796 = vmatpush1.bf16.msra.mxu0 0
        %797 = vmatprep.mubr.bf16.mxu0 0
        %798 = vmatmul.mubr.bf16.gmra.mrb[0].mxu0 %v763
        %v799 = vpop.f32.mrb[0].mxu0
        %v800 = vadd.f32 %v748, %v799
        %v801 = vpop.f32.mrb[0].mxu0
        %v802 = vpop.f32.mrb[0].mxu0
        %v803 = vadd.f32 %v748, %v802
        %v804 = vpop.f32.mrb[0].mxu0
        %805 = vdwg.mxu0
        %v806 = vmax.f32 %v800, 0.0
        %v807 = vmax.f32 %v803, 0.0
        %v808 = vpack.c.bf16 %v807, %v806
        %v809 = vld [vmem:[%s5] sm:$0xf]
        %v810 = vld [vmem:[%s5 + $0x4] sm:$0xf]
        %v811 = vld [vmem:[%s5 + $0x8] sm:$0xf]
        %v812 = vld [vmem:[%s5 + $0xc] sm:$0xf]
        %v813 = vld [vmem:[%s5 + $0x10] sm:$0xf]
        %v814 = vld [vmem:[%s5 + $0x14] sm:$0xf]
        %v815 = vld [vmem:[%s5 + $0x18] sm:$0xf]
        %v816 = vld [vmem:[%s5 + $0x1c] sm:$0xf]
        %v817 = vld [vmem:[%s5 + $0x20] sm:$0xf]
        %v818 = vld [vmem:[%s5 + $0x24] sm:$0xf]
        %v819 = vld [vmem:[%s5 + $0x28] sm:$0xf]
        %v820 = vld [vmem:[%s5 + $0x2c] sm:$0xf]
        %v821 = vld [vmem:[%s6] sm:$0x1]
        %v823 = vlaneseq
        %v824 = vshrl.u32 %v823, 7
        %v825 = vsub.s32 0, %v824
        %v826 = vrot.slane %v821, %v825
        %v840 = vunpack.c.l.b16 %v809
        %v841 = vunpack.c.l.b16 %v810
        %v842 = vunpack.c.l.b16 %v811
        %v843 = vunpack.c.l.b16 %v812
        %v844 = vunpack.c.l.b16 %v813
        %v845 = vunpack.c.l.b16 %v814
        %v846 = vunpack.c.l.b16 %v815
        %v847 = vunpack.c.l.b16 %v816
        %v848 = vunpack.c.l.b16 %v817
        %v849 = vunpack.c.l.b16 %v818
        %v850 = vunpack.c.l.b16 %v819
        %v851 = vunpack.c.l.b16 %v820
        %v852 = vpack.c.b16 %v841, %v840
        %v853 = vpack.c.b16 %v843, %v842
        %v854 = vpack.c.b16 %v845, %v844
        %v855 = vpack.c.b16 %v847, %v846
        %v856 = vpack.c.b16 %v849, %v848
        %v857 = vpack.c.b16 %v851, %v850
        %vm864 = vcmask 785408
        %v866 = vsel %vm864, %v808, 0
        %868 = vmatprep.subr.bf16.mxu0 0
        %869 = vmatpush1.bf16.msra.mxu0 %v852
        %870 = vmatprep.subr.bf16.mxu0 0
        %871 = vmatpush1.bf16.msra.mxu0 %v853
        %872 = vmatprep.subr.bf16.mxu0 0
        %873 = vmatpush1.bf16.msra.mxu0 %v854
        %874 = vmatprep.subr.bf16.mxu0 0
        %875 = vmatpush1.bf16.msra.mxu0 %v855
        %876 = vmatprep.subr.bf16.mxu0 0
        %877 = vmatpush1.bf16.msra.mxu0 %v856
        %878 = vmatprep.subr.bf16.mxu0 0
        %879 = vmatpush1.bf16.msra.mxu0 %v857
        %880 = vmatprep.subr.bf16.mxu0 0
        %881 = vmatpush1.bf16.msra.mxu0 0
        %882 = vmatprep.subr.bf16.mxu0 0
        %883 = vmatpush1.bf16.msra.mxu0 0
        %884 = vmatprep.subr.bf16.mxu0 0
        %885 = vmatpush1.bf16.msra.mxu0 0
        %886 = vmatprep.subr.bf16.mxu0 0
        %887 = vmatpush1.bf16.msra.mxu0 0
        %888 = vmatprep.subr.bf16.mxu0 0
        %889 = vmatpush1.bf16.msra.mxu0 0
        %890 = vmatprep.subr.bf16.mxu0 0
        %891 = vmatpush1.bf16.msra.mxu0 0
        %892 = vmatprep.subr.bf16.mxu0 0
        %893 = vmatpush1.bf16.msra.mxu0 0
        %894 = vmatprep.subr.bf16.mxu0 0
        %895 = vmatpush1.bf16.msra.mxu0 0
        %896 = vmatprep.subr.bf16.mxu0 0
        %897 = vmatpush1.bf16.msra.mxu0 0
        %898 = vmatprep.subr.bf16.mxu0 0
        %899 = vmatpush1.bf16.msra.mxu0 0
        %900 = vmatprep.mubr.bf16.mxu0 0
        %901 = vmatmul.mubr.bf16.gmra.mrb[0].mxu0 %v866
        %v902 = vpop.f32.mrb[0].mxu0
        %v903 = vadd.f32 %v826, %v902
        %v904 = vpop.f32.mrb[0].mxu0
        %v905 = vpop.f32.mrb[0].mxu0
        %v906 = vadd.f32 %v826, %v905
        %v907 = vpop.f32.mrb[0].mxu0
        %908 = vdwg.mxu0
        %v909 = vld [vmem:[%s7] sm:$0xf]
        %v910 = vld [vmem:[%s7 + $0x4] sm:$0xf]
        %v911 = vld [vmem:[%s7 + $0x8] sm:$0xf]
        %v912 = vld [vmem:[%s7 + $0xc] sm:$0xf]
        %v913 = vld [vmem:[%s7 + $0x10] sm:$0xf]
        %v914 = vld [vmem:[%s7 + $0x14] sm:$0xf]
        %v915 = vld [vmem:[%s7 + $0x18] sm:$0xf]
        %v916 = vld [vmem:[%s7 + $0x1c] sm:$0xf]
        %v917 = vld [vmem:[%s7 + $0x20] sm:$0xf]
        %v918 = vld [vmem:[%s7 + $0x24] sm:$0xf]
        %v919 = vld [vmem:[%s7 + $0x28] sm:$0xf]
        %v920 = vld [vmem:[%s7 + $0x2c] sm:$0xf]
        %v921 = vld [vmem:[%s8] sm:$0x1]
        %v923 = vlaneseq
        %v924 = vshrl.u32 %v923, 7
        %v925 = vsub.s32 0, %v924
        %v926 = vrot.slane %v921, %v925
        %v940 = vunpack.c.l.b16 %v909
        %v941 = vunpack.c.l.b16 %v910
        %v942 = vunpack.c.l.b16 %v911
        %v943 = vunpack.c.l.b16 %v912
        %v944 = vunpack.c.l.b16 %v913
        %v945 = vunpack.c.l.b16 %v914
        %v946 = vunpack.c.l.b16 %v915
        %v947 = vunpack.c.l.b16 %v916
        %v948 = vunpack.c.l.b16 %v917
        %v949 = vunpack.c.l.b16 %v918
        %v950 = vunpack.c.l.b16 %v919
        %v951 = vunpack.c.l.b16 %v920
        %v952 = vpack.c.b16 %v941, %v940
        %v953 = vpack.c.b16 %v943, %v942
        %v954 = vpack.c.b16 %v945, %v944
        %v955 = vpack.c.b16 %v947, %v946
        %v956 = vpack.c.b16 %v949, %v948
        %v957 = vpack.c.b16 %v951, %v950
        %964 = vmatprep.subr.bf16.mxu0 0
        %965 = vmatpush1.bf16.msra.mxu0 %v952
        %966 = vmatprep.subr.bf16.mxu0 0
        %967 = vmatpush1.bf16.msra.mxu0 %v953
        %968 = vmatprep.subr.bf16.mxu0 0
        %969 = vmatpush1.bf16.msra.mxu0 %v954
        %970 = vmatprep.subr.bf16.mxu0 0
        %971 = vmatpush1.bf16.msra.mxu0 %v955
        %972 = vmatprep.subr.bf16.mxu0 0
        %973 = vmatpush1.bf16.msra.mxu0 %v956
        %974 = vmatprep.subr.bf16.mxu0 0
        %975 = vmatpush1.bf16.msra.mxu0 %v957
        %976 = vmatprep.subr.bf16.mxu0 0
        %977 = vmatpush1.bf16.msra.mxu0 0
        %978 = vmatprep.subr.bf16.mxu0 0
        %979 = vmatpush1.bf16.msra.mxu0 0
        %980 = vmatprep.subr.bf16.mxu0 0
        %981 = vmatpush1.bf16.msra.mxu0 0
        %982 = vmatprep.subr.bf16.mxu0 0
        %983 = vmatpush1.bf16.msra.mxu0 0
        %984 = vmatprep.subr.bf16.mxu0 0
        %985 = vmatpush1.bf16.msra.mxu0 0
        %986 = vmatprep.subr.bf16.mxu0 0
        %987 = vmatpush1.bf16.msra.mxu0 0
        %988 = vmatprep.subr.bf16.mxu0 0
        %989 = vmatpush1.bf16.msra.mxu0 0
        %990 = vmatprep.subr.bf16.mxu0 0
        %991 = vmatpush1.bf16.msra.mxu0 0
        %992 = vmatprep.subr.bf16.mxu0 0
        %993 = vmatpush1.bf16.msra.mxu0 0
        %994 = vmatprep.subr.bf16.mxu0 0
        %995 = vmatpush1.bf16.msra.mxu0 0
        %996 = vmatprep.mubr.bf16.mxu0 0
        %997 = vmatmul.mubr.bf16.gmra.mrb[0].mxu0 %v866
        %v998 = vpop.f32.mrb[0].mxu0
        %v999 = vadd.f32 %v926, %v998
        %v1000 = vpop.f32.mrb[0].mxu0
        %v1001 = vpop.f32.mrb[0].mxu0
        %v1002 = vadd.f32 %v926, %v1001
        %v1003 = vpop.f32.mrb[0].mxu0
        %1004 = vdwg.mxu0
        %v1005 = vld [vmem:[%s9] sm:$0xf]
        %v1006 = vld [vmem:[%s9 + $0x4] sm:$0xf]
        %v1007 = vld [vmem:[%s9 + $0x8] sm:$0xf]
        %v1008 = vld [vmem:[%s9 + $0xc] sm:$0xf]
        %v1009 = vld [vmem:[%s9 + $0x10] sm:$0xf]
        %v1010 = vld [vmem:[%s9 + $0x14] sm:$0xf]
        %v1011 = vld [vmem:[%s9 + $0x18] sm:$0xf]
        %v1012 = vld [vmem:[%s9 + $0x1c] sm:$0xf]
        %v1013 = vld [vmem:[%s9 + $0x20] sm:$0xf]
        %v1014 = vld [vmem:[%s9 + $0x24] sm:$0xf]
        %v1015 = vld [vmem:[%s9 + $0x28] sm:$0xf]
        %v1016 = vld [vmem:[%s9 + $0x2c] sm:$0xf]
        %v1017 = vld [vmem:[%s10] sm:$0x1]
        %v1019 = vlaneseq
        %v1020 = vshrl.u32 %v1019, 7
        %v1021 = vsub.s32 0, %v1020
        %v1022 = vrot.slane %v1017, %v1021
        %v1036 = vunpack.c.l.b16 %v1005
        %v1037 = vunpack.c.l.b16 %v1006
        %v1038 = vunpack.c.l.b16 %v1007
        %v1039 = vunpack.c.l.b16 %v1008
        %v1040 = vunpack.c.l.b16 %v1009
        %v1041 = vunpack.c.l.b16 %v1010
        %v1042 = vunpack.c.l.b16 %v1011
        %v1043 = vunpack.c.l.b16 %v1012
        %v1044 = vunpack.c.l.b16 %v1013
        %v1045 = vunpack.c.l.b16 %v1014
        %v1046 = vunpack.c.l.b16 %v1015
        %v1047 = vunpack.c.l.b16 %v1016
        %v1048 = vpack.c.b16 %v1037, %v1036
        %v1049 = vpack.c.b16 %v1039, %v1038
        %v1050 = vpack.c.b16 %v1041, %v1040
        %v1051 = vpack.c.b16 %v1043, %v1042
        %v1052 = vpack.c.b16 %v1045, %v1044
        %v1053 = vpack.c.b16 %v1047, %v1046
        %1060 = vmatprep.subr.bf16.mxu0 0
        %1061 = vmatpush1.bf16.msra.mxu0 %v1048
        %1062 = vmatprep.subr.bf16.mxu0 0
        %1063 = vmatpush1.bf16.msra.mxu0 %v1049
        %1064 = vmatprep.subr.bf16.mxu0 0
        %1065 = vmatpush1.bf16.msra.mxu0 %v1050
        %1066 = vmatprep.subr.bf16.mxu0 0
        %1067 = vmatpush1.bf16.msra.mxu0 %v1051
        %1068 = vmatprep.subr.bf16.mxu0 0
        %1069 = vmatpush1.bf16.msra.mxu0 %v1052
        %1070 = vmatprep.subr.bf16.mxu0 0
        %1071 = vmatpush1.bf16.msra.mxu0 %v1053
        %1072 = vmatprep.subr.bf16.mxu0 0
        %1073 = vmatpush1.bf16.msra.mxu0 0
        %1074 = vmatprep.subr.bf16.mxu0 0
        %1075 = vmatpush1.bf16.msra.mxu0 0
        %1076 = vmatprep.subr.bf16.mxu0 0
        %1077 = vmatpush1.bf16.msra.mxu0 0
        %1078 = vmatprep.subr.bf16.mxu0 0
        %1079 = vmatpush1.bf16.msra.mxu0 0
        %1080 = vmatprep.subr.bf16.mxu0 0
        %1081 = vmatpush1.bf16.msra.mxu0 0
        %1082 = vmatprep.subr.bf16.mxu0 0
        %1083 = vmatpush1.bf16.msra.mxu0 0
        %1084 = vmatprep.subr.bf16.mxu0 0
        %1085 = vmatpush1.bf16.msra.mxu0 0
        %1086 = vmatprep.subr.bf16.mxu0 0
        %1087 = vmatpush1.bf16.msra.mxu0 0
        %1088 = vmatprep.subr.bf16.mxu0 0
        %1089 = vmatpush1.bf16.msra.mxu0 0
        %1090 = vmatprep.subr.bf16.mxu0 0
        %1091 = vmatpush1.bf16.msra.mxu0 0
        %1092 = vmatprep.mubr.bf16.mxu0 0
        %1093 = vmatmul.mubr.bf16.gmra.mrb[0].mxu0 %v866
        %v1094 = vpop.f32.mrb[0].mxu0
        %v1095 = vadd.f32 %v1022, %v1094
        %v1096 = vpop.f32.mrb[0].mxu0
        %v1097 = vpop.f32.mrb[0].mxu0
        %v1098 = vadd.f32 %v1022, %v1097
        %v1099 = vpop.f32.mrb[0].mxu0
        %1100 = vdwg.mxu0
        %v1101 = vld [vmem:[%s13] sm:$0xff]
        %v1102 = vld [vmem:[%s13 + $0x8] sm:$0xff]
        %v1103 = vld [vmem:[%s13 + $0x10] sm:$0xff]
        %v1104 = vld [vmem:[%s13 + $0x18] sm:$0xff]
        %v1105 = vld [vmem:[%s14] sm:$0xff]
        %v1106 = vmul.f32 %v903, %v999
        %v1108 = vsel %vm694, %v1106, 0
        %1110 = vmatprep.subr.mxu0 0.0
        %1111 = vmatpush1.msra.mxu0 %v1101
        %1112 = vmatprep.subr.mxu0 0.0
        %1113 = vmatpush1.msra.mxu0 %v1102
        %1114 = vmatprep.subr.mxu0 0.0
        %1115 = vmatpush1.msra.mxu0 %v1103
        %1116 = vmatprep.subr.mxu0 0.0
        %1117 = vmatpush1.msra.mxu0 %v1104
        %1118 = vmatprep.subr.mxu0 0.0
        %1119 = vmatpush1.msra.mxu0 0.0
        %1120 = vmatprep.subr.mxu0 0.0
        %1121 = vmatpush1.msra.mxu0 0.0
        %1122 = vmatprep.subr.mxu0 0.0
        %1123 = vmatpush1.msra.mxu0 0.0
        %1124 = vmatprep.subr.mxu0 0.0
        %1125 = vmatpush1.msra.mxu0 0.0
        %1126 = vmatprep.subr.mxu0 0.0
        %1127 = vmatpush1.msra.mxu0 0.0
        %1128 = vmatprep.subr.mxu0 0.0
        %1129 = vmatpush1.msra.mxu0 0.0
        %1130 = vmatprep.subr.mxu0 0.0
        %1131 = vmatpush1.msra.mxu0 0.0
        %1132 = vmatprep.subr.mxu0 0.0
        %1133 = vmatpush1.msra.mxu0 0.0
        %1134 = vmatprep.subr.mxu0 0.0
        %1135 = vmatpush1.msra.mxu0 0.0
        %1136 = vmatprep.subr.mxu0 0.0
        %1137 = vmatpush1.msra.mxu0 0.0
        %1138 = vmatprep.subr.mxu0 0.0
        %1139 = vmatpush1.msra.mxu0 0.0
        %1140 = vmatprep.subr.mxu0 0.0
        %1141 = vmatpush1.msra.mxu0 0.0
        %1142 = vmatprep.subr.mxu0 0.0
        %1143 = vmatpush1.msra.mxu0 0.0
        %1144 = vmatprep.subr.mxu0 0.0
        %1145 = vmatpush1.msra.mxu0 0.0
        %1146 = vmatprep.subr.mxu0 0.0
        %1147 = vmatpush1.msra.mxu0 0.0
        %1148 = vmatprep.subr.mxu0 0.0
        %1149 = vmatpush1.msra.mxu0 0.0
        %1150 = vmatprep.subr.mxu0 0.0
        %1151 = vmatpush1.msra.mxu0 0.0
        %1152 = vmatprep.subr.mxu0 0.0
        %1153 = vmatpush1.msra.mxu0 0.0
        %1154 = vmatprep.subr.mxu0 0.0
        %1155 = vmatpush1.msra.mxu0 0.0
        %1156 = vmatprep.subr.mxu0 0.0
        %1157 = vmatpush1.msra.mxu0 0.0
        %1158 = vmatprep.subr.mxu0 0.0
        %1159 = vmatpush1.msra.mxu0 0.0
        %1160 = vmatprep.subr.mxu0 0.0
        %1161 = vmatpush1.msra.mxu0 0.0
        %1162 = vmatprep.subr.mxu0 0.0
        %1163 = vmatpush1.msra.mxu0 0.0
        %1164 = vmatprep.subr.mxu0 0.0
        %1165 = vmatpush1.msra.mxu0 0.0
        %1166 = vmatprep.subr.mxu0 0.0
        %1167 = vmatpush1.msra.mxu0 0.0
        %1168 = vmatprep.subr.mxu0 0.0
        %1169 = vmatpush1.msra.mxu0 0.0
        %1170 = vmatprep.subr.mxu0 0.0
        %1171 = vmatpush1.msra.mxu0 0.0
        %1172 = vmatprep.subr.mxu0 0.0
        %1173 = vmatpush1.msra.mxu0 0.0
        %1174 = vmatprep.mubr.f32.mxu0 0.0
        %1175 = vmatmul.mubr.f32.gmra.mrb[0].mxu0 %v1108
        %v1176 = vpop.f32.mrb[0].mxu0
        %v1177 = vadd.f32 0.0, %v1176
        %v1178 = vpop.f32.mrb[0].mxu0
        %1179 = vdwg.mxu0
        %v1180 = vmul.f32 %v1177, 0.5
        %v1181 = vmul.f32 %v903, %v1002
        %v1183 = vsel %vm694, %v1181, 0
        %1185 = vmatprep.subr.mxu0 0.0
        %1186 = vmatpush1.msra.mxu0 %v1101
        %1187 = vmatprep.subr.mxu0 0.0
        %1188 = vmatpush1.msra.mxu0 %v1102
        %1189 = vmatprep.subr.mxu0 0.0
        %1190 = vmatpush1.msra.mxu0 %v1103
        %1191 = vmatprep.subr.mxu0 0.0
        %1192 = vmatpush1.msra.mxu0 %v1104
        %1193 = vmatprep.subr.mxu0 0.0
        %1194 = vmatpush1.msra.mxu0 0.0
        %1195 = vmatprep.subr.mxu0 0.0
        %1196 = vmatpush1.msra.mxu0 0.0
        %1197 = vmatprep.subr.mxu0 0.0
        %1198 = vmatpush1.msra.mxu0 0.0
        %1199 = vmatprep.subr.mxu0 0.0
        %1200 = vmatpush1.msra.mxu0 0.0
        %1201 = vmatprep.subr.mxu0 0.0
        %1202 = vmatpush1.msra.mxu0 0.0
        %1203 = vmatprep.subr.mxu0 0.0
        %1204 = vmatpush1.msra.mxu0 0.0
        %1205 = vmatprep.subr.mxu0 0.0
        %1206 = vmatpush1.msra.mxu0 0.0
        %1207 = vmatprep.subr.mxu0 0.0
        %1208 = vmatpush1.msra.mxu0 0.0
        %1209 = vmatprep.subr.mxu0 0.0
        %1210 = vmatpush1.msra.mxu0 0.0
        %1211 = vmatprep.subr.mxu0 0.0
        %1212 = vmatpush1.msra.mxu0 0.0
        %1213 = vmatprep.subr.mxu0 0.0
        %1214 = vmatpush1.msra.mxu0 0.0
        %1215 = vmatprep.subr.mxu0 0.0
        %1216 = vmatpush1.msra.mxu0 0.0
        %1217 = vmatprep.subr.mxu0 0.0
        %1218 = vmatpush1.msra.mxu0 0.0
        %1219 = vmatprep.subr.mxu0 0.0
        %1220 = vmatpush1.msra.mxu0 0.0
        %1221 = vmatprep.subr.mxu0 0.0
        %1222 = vmatpush1.msra.mxu0 0.0
        %1223 = vmatprep.subr.mxu0 0.0
        %1224 = vmatpush1.msra.mxu0 0.0
        %1225 = vmatprep.subr.mxu0 0.0
        %1226 = vmatpush1.msra.mxu0 0.0
        %1227 = vmatprep.subr.mxu0 0.0
        %1228 = vmatpush1.msra.mxu0 0.0
        %1229 = vmatprep.subr.mxu0 0.0
        %1230 = vmatpush1.msra.mxu0 0.0
        %1231 = vmatprep.subr.mxu0 0.0
        %1232 = vmatpush1.msra.mxu0 0.0
        %1233 = vmatprep.subr.mxu0 0.0
        %1234 = vmatpush1.msra.mxu0 0.0
        %1235 = vmatprep.subr.mxu0 0.0
        %1236 = vmatpush1.msra.mxu0 0.0
        %1237 = vmatprep.subr.mxu0 0.0
        %1238 = vmatpush1.msra.mxu0 0.0
        %1239 = vmatprep.subr.mxu0 0.0
        %1240 = vmatpush1.msra.mxu0 0.0
        %1241 = vmatprep.subr.mxu0 0.0
        %1242 = vmatpush1.msra.mxu0 0.0
        %1243 = vmatprep.subr.mxu0 0.0
        %1244 = vmatpush1.msra.mxu0 0.0
        %1245 = vmatprep.subr.mxu0 0.0
        %1246 = vmatpush1.msra.mxu0 0.0
        %1247 = vmatprep.subr.mxu0 0.0
        %1248 = vmatpush1.msra.mxu0 0.0
        %1249 = vmatprep.mubr.f32.mxu0 0.0
        %1250 = vmatmul.mubr.f32.gmra.mrb[0].mxu0 %v1183
        %v1251 = vpop.f32.mrb[0].mxu0
        %v1252 = vadd.f32 0.0, %v1251
        %v1253 = vpop.f32.mrb[0].mxu0
        %1254 = vdwg.mxu0
        %v1255 = vmul.f32 %v1252, 0.5
        %v1256 = vmax.f32 %v1180, %v1255
        %v1257 = vsub.f32 %v1180, %v1256
        %v1258 = vmul.f32 %v1257, 1.442695
        %v1259 = vpow.pop %v1258
        %v1260 = vsub.f32 %v1255, %v1256
        %v1261 = vmul.f32 %v1260, 1.442695
        %v1262 = vpow.pop %v1261
        %v1263 = vadd.f32 %v1259, %v1262
        %v1264 = vrcp.pop %v1263
        %v1265 = vmul.f32 %v1259, %v1264
        %vm1266 = vcmask 64512
        %v1268 = vsel %vm1266, %v1265, 0
        %1270 = vmatprep.subr.mxu0 0.0
        %1271 = vmatpush1.msra.mxu0 %v1105
        %1272 = vmatprep.subr.mxu0 0.0
        %1273 = vmatpush1.msra.mxu0 0.0
        %1274 = vmatprep.subr.mxu0 0.0
        %1275 = vmatpush1.msra.mxu0 0.0
        %1276 = vmatprep.subr.mxu0 0.0
        %1277 = vmatpush1.msra.mxu0 0.0
        %1278 = vmatprep.subr.mxu0 0.0
        %1279 = vmatpush1.msra.mxu0 0.0
        %1280 = vmatprep.subr.mxu0 0.0
        %1281 = vmatpush1.msra.mxu0 0.0
        %1282 = vmatprep.subr.mxu0 0.0
        %1283 = vmatpush1.msra.mxu0 0.0
        %1284 = vmatprep.subr.mxu0 0.0
        %1285 = vmatpush1.msra.mxu0 0.0
        %1286 = vmatprep.subr.mxu0 0.0
        %1287 = vmatpush1.msra.mxu0 0.0
        %1288 = vmatprep.subr.mxu0 0.0
        %1289 = vmatpush1.msra.mxu0 0.0
        %1290 = vmatprep.subr.mxu0 0.0
        %1291 = vmatpush1.msra.mxu0 0.0
        %1292 = vmatprep.subr.mxu0 0.0
        %1293 = vmatpush1.msra.mxu0 0.0
        %1294 = vmatprep.subr.mxu0 0.0
        %1295 = vmatpush1.msra.mxu0 0.0
        %1296 = vmatprep.subr.mxu0 0.0
        %1297 = vmatpush1.msra.mxu0 0.0
        %1298 = vmatprep.subr.mxu0 0.0
        %1299 = vmatpush1.msra.mxu0 0.0
        %1300 = vmatprep.subr.mxu0 0.0
        %1301 = vmatpush1.msra.mxu0 0.0
        %1302 = vmatprep.subr.mxu0 0.0
        %1303 = vmatpush1.msra.mxu0 0.0
        %1304 = vmatprep.subr.mxu0 0.0
        %1305 = vmatpush1.msra.mxu0 0.0
        %1306 = vmatprep.subr.mxu0 0.0
        %1307 = vmatpush1.msra.mxu0 0.0
        %1308 = vmatprep.subr.mxu0 0.0
        %1309 = vmatpush1.msra.mxu0 0.0
        %1310 = vmatprep.subr.mxu0 0.0
        %1311 = vmatpush1.msra.mxu0 0.0
        %1312 = vmatprep.subr.mxu0 0.0
        %1313 = vmatpush1.msra.mxu0 0.0
        %1314 = vmatprep.subr.mxu0 0.0
        %1315 = vmatpush1.msra.mxu0 0.0
        %1316 = vmatprep.subr.mxu0 0.0
        %1317 = vmatpush1.msra.mxu0 0.0
        %1318 = vmatprep.subr.mxu0 0.0
        %1319 = vmatpush1.msra.mxu0 0.0
        %1320 = vmatprep.subr.mxu0 0.0
        %1321 = vmatpush1.msra.mxu0 0.0
        %1322 = vmatprep.subr.mxu0 0.0
        %1323 = vmatpush1.msra.mxu0 0.0
        %1324 = vmatprep.subr.mxu0 0.0
        %1325 = vmatpush1.msra.mxu0 0.0
        %1326 = vmatprep.subr.mxu0 0.0
        %1327 = vmatpush1.msra.mxu0 0.0
        %1328 = vmatprep.subr.mxu0 0.0
        %1329 = vmatpush1.msra.mxu0 0.0
        %1330 = vmatprep.subr.mxu0 0.0
        %1331 = vmatpush1.msra.mxu0 0.0
        %1332 = vmatprep.subr.mxu0 0.0
        %1333 = vmatpush1.msra.mxu0 0.0
        %1334 = vmatprep.mubr.f32.mxu0 0.0
        %1335 = vmatmul.mubr.f32.gmra.mrb[0].mxu0 %v1268
        %v1336 = vpop.f32.mrb[0].mxu0
        %v1337 = vadd.f32 0.0, %v1336
        %v1338 = vpop.f32.mrb[0].mxu0
        %1339 = vdwg.mxu0
        %v1340 = vmul.f32 %v1337, %v1095
        %v1341 = vadd.f32 %v1340, 0.0
        %v1342 = vmul.f32 %v1262, %v1264
        %v1344 = vsel %vm1266, %v1342, 0
        %1346 = vmatprep.subr.mxu0 0.0
        %1347 = vmatpush1.msra.mxu0 %v1105
        %1348 = vmatprep.subr.mxu0 0.0
        %1349 = vmatpush1.msra.mxu0 0.0
        %1350 = vmatprep.subr.mxu0 0.0
        %1351 = vmatpush1.msra.mxu0 0.0
        %1352 = vmatprep.subr.mxu0 0.0
        %1353 = vmatpush1.msra.mxu0 0.0
        %1354 = vmatprep.subr.mxu0 0.0
        %1355 = vmatpush1.msra.mxu0 0.0
        %1356 = vmatprep.subr.mxu0 0.0
        %1357 = vmatpush1.msra.mxu0 0.0
        %1358 = vmatprep.subr.mxu0 0.0
        %1359 = vmatpush1.msra.mxu0 0.0
        %1360 = vmatprep.subr.mxu0 0.0
        %1361 = vmatpush1.msra.mxu0 0.0
        %1362 = vmatprep.subr.mxu0 0.0
        %1363 = vmatpush1.msra.mxu0 0.0
        %1364 = vmatprep.subr.mxu0 0.0
        %1365 = vmatpush1.msra.mxu0 0.0
        %1366 = vmatprep.subr.mxu0 0.0
        %1367 = vmatpush1.msra.mxu0 0.0
        %1368 = vmatprep.subr.mxu0 0.0
        %1369 = vmatpush1.msra.mxu0 0.0
        %1370 = vmatprep.subr.mxu0 0.0
        %1371 = vmatpush1.msra.mxu0 0.0
        %1372 = vmatprep.subr.mxu0 0.0
        %1373 = vmatpush1.msra.mxu0 0.0
        %1374 = vmatprep.subr.mxu0 0.0
        %1375 = vmatpush1.msra.mxu0 0.0
        %1376 = vmatprep.subr.mxu0 0.0
        %1377 = vmatpush1.msra.mxu0 0.0
        %1378 = vmatprep.subr.mxu0 0.0
        %1379 = vmatpush1.msra.mxu0 0.0
        %1380 = vmatprep.subr.mxu0 0.0
        %1381 = vmatpush1.msra.mxu0 0.0
        %1382 = vmatprep.subr.mxu0 0.0
        %1383 = vmatpush1.msra.mxu0 0.0
        %1384 = vmatprep.subr.mxu0 0.0
        %1385 = vmatpush1.msra.mxu0 0.0
        %1386 = vmatprep.subr.mxu0 0.0
        %1387 = vmatpush1.msra.mxu0 0.0
        %1388 = vmatprep.subr.mxu0 0.0
        %1389 = vmatpush1.msra.mxu0 0.0
        %1390 = vmatprep.subr.mxu0 0.0
        %1391 = vmatpush1.msra.mxu0 0.0
        %1392 = vmatprep.subr.mxu0 0.0
        %1393 = vmatpush1.msra.mxu0 0.0
        %1394 = vmatprep.subr.mxu0 0.0
        %1395 = vmatpush1.msra.mxu0 0.0
        %1396 = vmatprep.subr.mxu0 0.0
        %1397 = vmatpush1.msra.mxu0 0.0
        %1398 = vmatprep.subr.mxu0 0.0
        %1399 = vmatpush1.msra.mxu0 0.0
        %1400 = vmatprep.subr.mxu0 0.0
        %1401 = vmatpush1.msra.mxu0 0.0
        %1402 = vmatprep.subr.mxu0 0.0
        %1403 = vmatpush1.msra.mxu0 0.0
        %1404 = vmatprep.subr.mxu0 0.0
        %1405 = vmatpush1.msra.mxu0 0.0
        %1406 = vmatprep.subr.mxu0 0.0
        %1407 = vmatpush1.msra.mxu0 0.0
        %1408 = vmatprep.subr.mxu0 0.0
        %1409 = vmatpush1.msra.mxu0 0.0
        %1410 = vmatprep.mubr.f32.mxu0 0.0
        %1411 = vmatmul.mubr.f32.gmra.mrb[0].mxu0 %v1344
        %v1412 = vpop.f32.mrb[0].mxu0
        %v1413 = vadd.f32 0.0, %v1412
        %v1414 = vpop.f32.mrb[0].mxu0
        %1415 = vdwg.mxu0
        %v1416 = vmul.f32 %v1413, %v1098
        %v1417 = vadd.f32 %v1341, %v1416
        %v1418 = vmul.f32 %v906, %v999
        %v1420 = vsel %vm694, %v1418, 0
        %1422 = vmatprep.subr.mxu0 0.0
        %1423 = vmatpush1.msra.mxu0 %v1101
        %1424 = vmatprep.subr.mxu0 0.0
        %1425 = vmatpush1.msra.mxu0 %v1102
        %1426 = vmatprep.subr.mxu0 0.0
        %1427 = vmatpush1.msra.mxu0 %v1103
        %1428 = vmatprep.subr.mxu0 0.0
        %1429 = vmatpush1.msra.mxu0 %v1104
        %1430 = vmatprep.subr.mxu0 0.0
        %1431 = vmatpush1.msra.mxu0 0.0
        %1432 = vmatprep.subr.mxu0 0.0
        %1433 = vmatpush1.msra.mxu0 0.0
        %1434 = vmatprep.subr.mxu0 0.0
        %1435 = vmatpush1.msra.mxu0 0.0
        %1436 = vmatprep.subr.mxu0 0.0
        %1437 = vmatpush1.msra.mxu0 0.0
        %1438 = vmatprep.subr.mxu0 0.0
        %1439 = vmatpush1.msra.mxu0 0.0
        %1440 = vmatprep.subr.mxu0 0.0
        %1441 = vmatpush1.msra.mxu0 0.0
        %1442 = vmatprep.subr.mxu0 0.0
        %1443 = vmatpush1.msra.mxu0 0.0
        %1444 = vmatprep.subr.mxu0 0.0
        %1445 = vmatpush1.msra.mxu0 0.0
        %1446 = vmatprep.subr.mxu0 0.0
        %1447 = vmatpush1.msra.mxu0 0.0
        %1448 = vmatprep.subr.mxu0 0.0
        %1449 = vmatpush1.msra.mxu0 0.0
        %1450 = vmatprep.subr.mxu0 0.0
        %1451 = vmatpush1.msra.mxu0 0.0
        %1452 = vmatprep.subr.mxu0 0.0
        %1453 = vmatpush1.msra.mxu0 0.0
        %1454 = vmatprep.subr.mxu0 0.0
        %1455 = vmatpush1.msra.mxu0 0.0
        %1456 = vmatprep.subr.mxu0 0.0
        %1457 = vmatpush1.msra.mxu0 0.0
        %1458 = vmatprep.subr.mxu0 0.0
        %1459 = vmatpush1.msra.mxu0 0.0
        %1460 = vmatprep.subr.mxu0 0.0
        %1461 = vmatpush1.msra.mxu0 0.0
        %1462 = vmatprep.subr.mxu0 0.0
        %1463 = vmatpush1.msra.mxu0 0.0
        %1464 = vmatprep.subr.mxu0 0.0
        %1465 = vmatpush1.msra.mxu0 0.0
        %1466 = vmatprep.subr.mxu0 0.0
        %1467 = vmatpush1.msra.mxu0 0.0
        %1468 = vmatprep.subr.mxu0 0.0
        %1469 = vmatpush1.msra.mxu0 0.0
        %1470 = vmatprep.subr.mxu0 0.0
        %1471 = vmatpush1.msra.mxu0 0.0
        %1472 = vmatprep.subr.mxu0 0.0
        %1473 = vmatpush1.msra.mxu0 0.0
        %1474 = vmatprep.subr.mxu0 0.0
        %1475 = vmatpush1.msra.mxu0 0.0
        %1476 = vmatprep.subr.mxu0 0.0
        %1477 = vmatpush1.msra.mxu0 0.0
        %1478 = vmatprep.subr.mxu0 0.0
        %1479 = vmatpush1.msra.mxu0 0.0
        %1480 = vmatprep.subr.mxu0 0.0
        %1481 = vmatpush1.msra.mxu0 0.0
        %1482 = vmatprep.subr.mxu0 0.0
        %1483 = vmatpush1.msra.mxu0 0.0
        %1484 = vmatprep.subr.mxu0 0.0
        %1485 = vmatpush1.msra.mxu0 0.0
        %1486 = vmatprep.mubr.f32.mxu0 0.0
        %1487 = vmatmul.mubr.f32.gmra.mrb[0].mxu0 %v1420
        %v1488 = vpop.f32.mrb[0].mxu0
        %v1489 = vadd.f32 0.0, %v1488
        %v1490 = vpop.f32.mrb[0].mxu0
        %1491 = vdwg.mxu0
        %v1492 = vmul.f32 %v1489, 0.5
        %v1493 = vmul.f32 %v906, %v1002
        %v1495 = vsel %vm694, %v1493, 0
        %1497 = vmatprep.subr.mxu0 0.0
        %1498 = vmatpush1.msra.mxu0 %v1101
        %1499 = vmatprep.subr.mxu0 0.0
        %1500 = vmatpush1.msra.mxu0 %v1102
        %1501 = vmatprep.subr.mxu0 0.0
        %1502 = vmatpush1.msra.mxu0 %v1103
        %1503 = vmatprep.subr.mxu0 0.0
        %1504 = vmatpush1.msra.mxu0 %v1104
        %1505 = vmatprep.subr.mxu0 0.0
        %1506 = vmatpush1.msra.mxu0 0.0
        %1507 = vmatprep.subr.mxu0 0.0
        %1508 = vmatpush1.msra.mxu0 0.0
        %1509 = vmatprep.subr.mxu0 0.0
        %1510 = vmatpush1.msra.mxu0 0.0
        %1511 = vmatprep.subr.mxu0 0.0
        %1512 = vmatpush1.msra.mxu0 0.0
        %1513 = vmatprep.subr.mxu0 0.0
        %1514 = vmatpush1.msra.mxu0 0.0
        %1515 = vmatprep.subr.mxu0 0.0
        %1516 = vmatpush1.msra.mxu0 0.0
        %1517 = vmatprep.subr.mxu0 0.0
        %1518 = vmatpush1.msra.mxu0 0.0
        %1519 = vmatprep.subr.mxu0 0.0
        %1520 = vmatpush1.msra.mxu0 0.0
        %1521 = vmatprep.subr.mxu0 0.0
        %1522 = vmatpush1.msra.mxu0 0.0
        %1523 = vmatprep.subr.mxu0 0.0
        %1524 = vmatpush1.msra.mxu0 0.0
        %1525 = vmatprep.subr.mxu0 0.0
        %1526 = vmatpush1.msra.mxu0 0.0
        %1527 = vmatprep.subr.mxu0 0.0
        %1528 = vmatpush1.msra.mxu0 0.0
        %1529 = vmatprep.subr.mxu0 0.0
        %1530 = vmatpush1.msra.mxu0 0.0
        %1531 = vmatprep.subr.mxu0 0.0
        %1532 = vmatpush1.msra.mxu0 0.0
        %1533 = vmatprep.subr.mxu0 0.0
        %1534 = vmatpush1.msra.mxu0 0.0
        %1535 = vmatprep.subr.mxu0 0.0
        %1536 = vmatpush1.msra.mxu0 0.0
        %1537 = vmatprep.subr.mxu0 0.0
        %1538 = vmatpush1.msra.mxu0 0.0
        %1539 = vmatprep.subr.mxu0 0.0
        %1540 = vmatpush1.msra.mxu0 0.0
        %1541 = vmatprep.subr.mxu0 0.0
        %1542 = vmatpush1.msra.mxu0 0.0
        %1543 = vmatprep.subr.mxu0 0.0
        %1544 = vmatpush1.msra.mxu0 0.0
        %1545 = vmatprep.subr.mxu0 0.0
        %1546 = vmatpush1.msra.mxu0 0.0
        %1547 = vmatprep.subr.mxu0 0.0
        %1548 = vmatpush1.msra.mxu0 0.0
        %1549 = vmatprep.subr.mxu0 0.0
        %1550 = vmatpush1.msra.mxu0 0.0
        %1551 = vmatprep.subr.mxu0 0.0
        %1552 = vmatpush1.msra.mxu0 0.0
        %1553 = vmatprep.subr.mxu0 0.0
        %1554 = vmatpush1.msra.mxu0 0.0
        %1555 = vmatprep.subr.mxu0 0.0
        %1556 = vmatpush1.msra.mxu0 0.0
        %1557 = vmatprep.subr.mxu0 0.0
        %1558 = vmatpush1.msra.mxu0 0.0
        %1559 = vmatprep.subr.mxu0 0.0
        %1560 = vmatpush1.msra.mxu0 0.0
        %1561 = vmatprep.mubr.f32.mxu0 0.0
        %1562 = vmatmul.mubr.f32.gmra.mrb[0].mxu0 %v1495
        %v1563 = vpop.f32.mrb[0].mxu0
        %v1564 = vadd.f32 0.0, %v1563
        %v1565 = vpop.f32.mrb[0].mxu0
        %1566 = vdwg.mxu0
        %v1567 = vmul.f32 %v1564, 0.5
        %v1568 = vmax.f32 %v1492, %v1567
        %v1569 = vsub.f32 %v1492, %v1568
        %v1570 = vmul.f32 %v1569, 1.442695
        %v1571 = vpow.pop %v1570
        %v1572 = vsub.f32 %v1567, %v1568
        %v1573 = vmul.f32 %v1572, 1.442695
        %v1574 = vpow.pop %v1573
        %v1575 = vadd.f32 %v1571, %v1574
        %v1576 = vrcp.pop %v1575
        %v1577 = vmul.f32 %v1571, %v1576
        %v1579 = vsel %vm1266, %v1577, 0
        %1581 = vmatprep.subr.mxu0 0.0
        %1582 = vmatpush1.msra.mxu0 %v1105
        %1583 = vmatprep.subr.mxu0 0.0
        %1584 = vmatpush1.msra.mxu0 0.0
        %1585 = vmatprep.subr.mxu0 0.0
        %1586 = vmatpush1.msra.mxu0 0.0
        %1587 = vmatprep.subr.mxu0 0.0
        %1588 = vmatpush1.msra.mxu0 0.0
        %1589 = vmatprep.subr.mxu0 0.0
        %1590 = vmatpush1.msra.mxu0 0.0
        %1591 = vmatprep.subr.mxu0 0.0
        %1592 = vmatpush1.msra.mxu0 0.0
        %1593 = vmatprep.subr.mxu0 0.0
        %1594 = vmatpush1.msra.mxu0 0.0
        %1595 = vmatprep.subr.mxu0 0.0
        %1596 = vmatpush1.msra.mxu0 0.0
        %1597 = vmatprep.subr.mxu0 0.0
        %1598 = vmatpush1.msra.mxu0 0.0
        %1599 = vmatprep.subr.mxu0 0.0
        %1600 = vmatpush1.msra.mxu0 0.0
        %1601 = vmatprep.subr.mxu0 0.0
        %1602 = vmatpush1.msra.mxu0 0.0
        %1603 = vmatprep.subr.mxu0 0.0
        %1604 = vmatpush1.msra.mxu0 0.0
        %1605 = vmatprep.subr.mxu0 0.0
        %1606 = vmatpush1.msra.mxu0 0.0
        %1607 = vmatprep.subr.mxu0 0.0
        %1608 = vmatpush1.msra.mxu0 0.0
        %1609 = vmatprep.subr.mxu0 0.0
        %1610 = vmatpush1.msra.mxu0 0.0
        %1611 = vmatprep.subr.mxu0 0.0
        %1612 = vmatpush1.msra.mxu0 0.0
        %1613 = vmatprep.subr.mxu0 0.0
        %1614 = vmatpush1.msra.mxu0 0.0
        %1615 = vmatprep.subr.mxu0 0.0
        %1616 = vmatpush1.msra.mxu0 0.0
        %1617 = vmatprep.subr.mxu0 0.0
        %1618 = vmatpush1.msra.mxu0 0.0
        %1619 = vmatprep.subr.mxu0 0.0
        %1620 = vmatpush1.msra.mxu0 0.0
        %1621 = vmatprep.subr.mxu0 0.0
        %1622 = vmatpush1.msra.mxu0 0.0
        %1623 = vmatprep.subr.mxu0 0.0
        %1624 = vmatpush1.msra.mxu0 0.0
        %1625 = vmatprep.subr.mxu0 0.0
        %1626 = vmatpush1.msra.mxu0 0.0
        %1627 = vmatprep.subr.mxu0 0.0
        %1628 = vmatpush1.msra.mxu0 0.0
        %1629 = vmatprep.subr.mxu0 0.0
        %1630 = vmatpush1.msra.mxu0 0.0
        %1631 = vmatprep.subr.mxu0 0.0
        %1632 = vmatpush1.msra.mxu0 0.0
        %1633 = vmatprep.subr.mxu0 0.0
        %1634 = vmatpush1.msra.mxu0 0.0
        %1635 = vmatprep.subr.mxu0 0.0
        %1636 = vmatpush1.msra.mxu0 0.0
        %1637 = vmatprep.subr.mxu0 0.0
        %1638 = vmatpush1.msra.mxu0 0.0
        %1639 = vmatprep.subr.mxu0 0.0
        %1640 = vmatpush1.msra.mxu0 0.0
        %1641 = vmatprep.subr.mxu0 0.0
        %1642 = vmatpush1.msra.mxu0 0.0
        %1643 = vmatprep.subr.mxu0 0.0
        %1644 = vmatpush1.msra.mxu0 0.0
        %1645 = vmatprep.mubr.f32.mxu0 0.0
        %1646 = vmatmul.mubr.f32.gmra.mrb[0].mxu0 %v1579
        %v1647 = vpop.f32.mrb[0].mxu0
        %v1648 = vadd.f32 0.0, %v1647
        %v1649 = vpop.f32.mrb[0].mxu0
        %1650 = vdwg.mxu0
        %v1651 = vmul.f32 %v1648, %v1095
        %v1652 = vadd.f32 %v1651, 0.0
        %v1653 = vmul.f32 %v1574, %v1576
        %v1655 = vsel %vm1266, %v1653, 0
        %1657 = vmatprep.subr.mxu0 0.0
        %1658 = vmatpush1.msra.mxu0 %v1105
        %1659 = vmatprep.subr.mxu0 0.0
        %1660 = vmatpush1.msra.mxu0 0.0
        %1661 = vmatprep.subr.mxu0 0.0
        %1662 = vmatpush1.msra.mxu0 0.0
        %1663 = vmatprep.subr.mxu0 0.0
        %1664 = vmatpush1.msra.mxu0 0.0
        %1665 = vmatprep.subr.mxu0 0.0
        %1666 = vmatpush1.msra.mxu0 0.0
        %1667 = vmatprep.subr.mxu0 0.0
        %1668 = vmatpush1.msra.mxu0 0.0
        %1669 = vmatprep.subr.mxu0 0.0
        %1670 = vmatpush1.msra.mxu0 0.0
        %1671 = vmatprep.subr.mxu0 0.0
        %1672 = vmatpush1.msra.mxu0 0.0
        %1673 = vmatprep.subr.mxu0 0.0
        %1674 = vmatpush1.msra.mxu0 0.0
        %1675 = vmatprep.subr.mxu0 0.0
        %1676 = vmatpush1.msra.mxu0 0.0
        %1677 = vmatprep.subr.mxu0 0.0
        %1678 = vmatpush1.msra.mxu0 0.0
        %1679 = vmatprep.subr.mxu0 0.0
        %1680 = vmatpush1.msra.mxu0 0.0
        %1681 = vmatprep.subr.mxu0 0.0
        %1682 = vmatpush1.msra.mxu0 0.0
        %1683 = vmatprep.subr.mxu0 0.0
        %1684 = vmatpush1.msra.mxu0 0.0
        %1685 = vmatprep.subr.mxu0 0.0
        %1686 = vmatpush1.msra.mxu0 0.0
        %1687 = vmatprep.subr.mxu0 0.0
        %1688 = vmatpush1.msra.mxu0 0.0
        %1689 = vmatprep.subr.mxu0 0.0
        %1690 = vmatpush1.msra.mxu0 0.0
        %1691 = vmatprep.subr.mxu0 0.0
        %1692 = vmatpush1.msra.mxu0 0.0
        %1693 = vmatprep.subr.mxu0 0.0
        %1694 = vmatpush1.msra.mxu0 0.0
        %1695 = vmatprep.subr.mxu0 0.0
        %1696 = vmatpush1.msra.mxu0 0.0
        %1697 = vmatprep.subr.mxu0 0.0
        %1698 = vmatpush1.msra.mxu0 0.0
        %1699 = vmatprep.subr.mxu0 0.0
        %1700 = vmatpush1.msra.mxu0 0.0
        %1701 = vmatprep.subr.mxu0 0.0
        %1702 = vmatpush1.msra.mxu0 0.0
        %1703 = vmatprep.subr.mxu0 0.0
        %1704 = vmatpush1.msra.mxu0 0.0
        %1705 = vmatprep.subr.mxu0 0.0
        %1706 = vmatpush1.msra.mxu0 0.0
        %1707 = vmatprep.subr.mxu0 0.0
        %1708 = vmatpush1.msra.mxu0 0.0
        %1709 = vmatprep.subr.mxu0 0.0
        %1710 = vmatpush1.msra.mxu0 0.0
        %1711 = vmatprep.subr.mxu0 0.0
        %1712 = vmatpush1.msra.mxu0 0.0
        %1713 = vmatprep.subr.mxu0 0.0
        %1714 = vmatpush1.msra.mxu0 0.0
        %1715 = vmatprep.subr.mxu0 0.0
        %1716 = vmatpush1.msra.mxu0 0.0
        %1717 = vmatprep.subr.mxu0 0.0
        %1718 = vmatpush1.msra.mxu0 0.0
        %1719 = vmatprep.subr.mxu0 0.0
        %1720 = vmatpush1.msra.mxu0 0.0
        %1721 = vmatprep.mubr.f32.mxu0 0.0
        %1722 = vmatmul.mubr.f32.gmra.mrb[0].mxu0 %v1655
        %v1723 = vpop.f32.mrb[0].mxu0
        %v1724 = vadd.f32 0.0, %v1723
        %v1725 = vpop.f32.mrb[0].mxu0
        %1726 = vdwg.mxu0
        %v1727 = vmul.f32 %v1724, %v1098
        %v1728 = vadd.f32 %v1652, %v1727
        %v1729 = vpack.c.bf16 %v1728, %v1417
        %v1730 = vld [vmem:[%s11] sm:$0xf]
        %v1731 = vld [vmem:[%s11 + $0x4] sm:$0xf]
        %v1732 = vld [vmem:[%s11 + $0x8] sm:$0xf]
        %v1733 = vld [vmem:[%s11 + $0xc] sm:$0xf]
        %v1734 = vld [vmem:[%s12] sm:$0x1]
        %v1736 = vlaneseq
        %v1737 = vshrl.u32 %v1736, 7
        %v1738 = vsub.s32 0, %v1737
        %v1739 = vrot.slane %v1734, %v1738
        %v1745 = vunpack.c.l.b16 %v1730
        %v1746 = vunpack.c.l.b16 %v1731
        %v1747 = vunpack.c.l.b16 %v1732
        %v1748 = vunpack.c.l.b16 %v1733
        %v1749 = vpack.c.b16 %v1746, %v1745
        %v1750 = vpack.c.b16 %v1748, %v1747
        %v1754 = vsel %vm694, %v1729, 0
        %1756 = vmatprep.subr.bf16.mxu0 0
        %1757 = vmatpush1.bf16.msra.mxu0 %v1749
        %1758 = vmatprep.subr.bf16.mxu0 0
        %1759 = vmatpush1.bf16.msra.mxu0 %v1750
        %1760 = vmatprep.subr.bf16.mxu0 0
        %1761 = vmatpush1.bf16.msra.mxu0 0
        %1762 = vmatprep.subr.bf16.mxu0 0
        %1763 = vmatpush1.bf16.msra.mxu0 0
        %1764 = vmatprep.subr.bf16.mxu0 0
        %1765 = vmatpush1.bf16.msra.mxu0 0
        %1766 = vmatprep.subr.bf16.mxu0 0
        %1767 = vmatpush1.bf16.msra.mxu0 0
        %1768 = vmatprep.subr.bf16.mxu0 0
        %1769 = vmatpush1.bf16.msra.mxu0 0
        %1770 = vmatprep.subr.bf16.mxu0 0
        %1771 = vmatpush1.bf16.msra.mxu0 0
        %1772 = vmatprep.subr.bf16.mxu0 0
        %1773 = vmatpush1.bf16.msra.mxu0 0
        %1774 = vmatprep.subr.bf16.mxu0 0
        %1775 = vmatpush1.bf16.msra.mxu0 0
        %1776 = vmatprep.subr.bf16.mxu0 0
        %1777 = vmatpush1.bf16.msra.mxu0 0
        %1778 = vmatprep.subr.bf16.mxu0 0
        %1779 = vmatpush1.bf16.msra.mxu0 0
        %1780 = vmatprep.subr.bf16.mxu0 0
        %1781 = vmatpush1.bf16.msra.mxu0 0
        %1782 = vmatprep.subr.bf16.mxu0 0
        %1783 = vmatpush1.bf16.msra.mxu0 0
        %1784 = vmatprep.subr.bf16.mxu0 0
        %1785 = vmatpush1.bf16.msra.mxu0 0
        %1786 = vmatprep.subr.bf16.mxu0 0
        %1787 = vmatpush1.bf16.msra.mxu0 0
        %1788 = vmatprep.mubr.bf16.mxu0 0
        %1789 = vmatmul.mubr.bf16.gmra.mrb[0].mxu0 %v1754
        %v1790 = vpop.f32.mrb[0].mxu0
        %v1791 = vadd.f32 %v1739, %v1790
        %v1792 = vpop.f32.mrb[0].mxu0
        %v1793 = vpop.f32.mrb[0].mxu0
        %v1794 = vadd.f32 %v1739, %v1793
        %v1795 = vpop.f32.mrb[0].mxu0
        %1796 = vdwg.mxu0
        %v1797 = vld [vmem:[%s15] sm:$0x1]
        %v1798 = vld [vmem:[%s16] sm:$0x1]
        %v1799 = vsel %vm694, %v1791, 0.0
        %1800 = vadd.xlane.f32.xlu0 %v1799
        %v1801 = vpop.xlane.xlu0 %1800
        %v1802 = vsel %vm694, %v1794, 0.0
        %1803 = vadd.xlane.f32.xlu0 %v1802
        %v1804 = vpop.xlane.xlu0 %1803
        %v1805 = vmul.f32 %v1801, %v701
        %v1806 = vmul.f32 %v1804, %v701
        %v1807 = vsub.f32 %v1791, %v1805
        %v1808 = vsub.f32 %v1794, %v1806
        %v1809 = vmul.f32 %v1807, %v1807
        %v1810 = vmul.f32 %v1808, %v1808
        %v1811 = vsel %vm694, %v1809, 0.0
        %1812 = vadd.xlane.f32.xlu0 %v1811
        %v1813 = vpop.xlane.xlu0 %1812
        %v1814 = vsel %vm694, %v1810, 0.0
        %1815 = vadd.xlane.f32.xlu0 %v1814
        %v1816 = vpop.xlane.xlu0 %1815
        %v1817 = vmul.f32 %v1813, %v701
        %v1818 = vmul.f32 %v1816, %v701
        %v1819 = vadd.f32 %v1817, 1e-05
        %v1820 = vadd.f32 %v1818, 1e-05
        %v1821 = vrsqrt.pop %v1819
        %v1822 = vrsqrt.pop %v1820
        %v1823 = vmul.f32 %v1807, %v1821
        %v1824 = vmul.f32 %v1808, %v1822
        %v1826 = vlaneseq
        %v1827 = vshrl.u32 %v1826, 7
        %v1828 = vsub.s32 0, %v1827
        %v1829 = vrot.slane %v1797, %v1828
        %v1831 = vmul.f32 %v1823, %v1829
        %v1832 = vmul.f32 %v1824, %v1829
        %v1834 = vlaneseq
        %v1835 = vshrl.u32 %v1834, 7
        %v1836 = vsub.s32 0, %v1835
        %v1837 = vrot.slane %v1798, %v1836
        %v1839 = vadd.f32 %v1831, %v1837
        %v1840 = vadd.f32 %v1832, %v1837
        %v1841 = vpack.c.bf16 %v1840, %v1839
        %v1842 = vld [vmem:[%s17] sm:$0xf]
        %v1843 = vld [vmem:[%s17 + $0x4] sm:$0xf]
        %v1844 = vld [vmem:[%s17 + $0x8] sm:$0xf]
        %v1845 = vld [vmem:[%s17 + $0xc] sm:$0xf]
        %v1846 = vld [vmem:[%s18] sm:$0x1]
        %v1848 = vlaneseq
        %v1849 = vshrl.u32 %v1848, 7
        %v1850 = vsub.s32 0, %v1849
        %v1851 = vrot.slane %v1846, %v1850
        %v1857 = vunpack.c.l.b16 %v1842
        %v1858 = vunpack.c.l.b16 %v1843
        %v1859 = vunpack.c.l.b16 %v1844
        %v1860 = vunpack.c.l.b16 %v1845
        %v1861 = vpack.c.b16 %v1858, %v1857
        %v1862 = vpack.c.b16 %v1860, %v1859
        %v1866 = vsel %vm694, %v1841, 0
        %1868 = vmatprep.subr.bf16.mxu0 0
        %1869 = vmatpush1.bf16.msra.mxu0 %v1861
        %1870 = vmatprep.subr.bf16.mxu0 0
        %1871 = vmatpush1.bf16.msra.mxu0 %v1862
        %1872 = vmatprep.subr.bf16.mxu0 0
        %1873 = vmatpush1.bf16.msra.mxu0 0
        %1874 = vmatprep.subr.bf16.mxu0 0
        %1875 = vmatpush1.bf16.msra.mxu0 0
        %1876 = vmatprep.subr.bf16.mxu0 0
        %1877 = vmatpush1.bf16.msra.mxu0 0
        %1878 = vmatprep.subr.bf16.mxu0 0
        %1879 = vmatpush1.bf16.msra.mxu0 0
        %1880 = vmatprep.subr.bf16.mxu0 0
        %1881 = vmatpush1.bf16.msra.mxu0 0
        %1882 = vmatprep.subr.bf16.mxu0 0
        %1883 = vmatpush1.bf16.msra.mxu0 0
        %1884 = vmatprep.subr.bf16.mxu0 0
        %1885 = vmatpush1.bf16.msra.mxu0 0
        %1886 = vmatprep.subr.bf16.mxu0 0
        %1887 = vmatpush1.bf16.msra.mxu0 0
        %1888 = vmatprep.subr.bf16.mxu0 0
        %1889 = vmatpush1.bf16.msra.mxu0 0
        %1890 = vmatprep.subr.bf16.mxu0 0
        %1891 = vmatpush1.bf16.msra.mxu0 0
        %1892 = vmatprep.subr.bf16.mxu0 0
        %1893 = vmatpush1.bf16.msra.mxu0 0
        %1894 = vmatprep.subr.bf16.mxu0 0
        %1895 = vmatpush1.bf16.msra.mxu0 0
        %1896 = vmatprep.subr.bf16.mxu0 0
        %1897 = vmatpush1.bf16.msra.mxu0 0
        %1898 = vmatprep.subr.bf16.mxu0 0
        %1899 = vmatpush1.bf16.msra.mxu0 0
        %1900 = vmatprep.mubr.bf16.mxu0 0
        %1901 = vmatmul.mubr.bf16.gmra.mrb[0].mxu0 %v1866
        %v1902 = vpop.f32.mrb[0].mxu0
        %v1903 = vadd.f32 %v1851, %v1902
        %v1904 = vpop.f32.mrb[0].mxu0
        %v1905 = vpop.f32.mrb[0].mxu0
        %v1906 = vadd.f32 %v1851, %v1905
        %v1907 = vpop.f32.mrb[0].mxu0
        %1908 = vdwg.mxu0
        %v1909 = vmax.f32 %v1903, 0.0
        %v1910 = vmax.f32 %v1906, 0.0
        %v1911 = vpack.c.bf16 %v1910, %v1909
        %v1912 = vld [vmem:[%s19] sm:$0xf]
        %v1913 = vld [vmem:[%s19 + $0x4] sm:$0xf]
        %v1914 = vld [vmem:[%s19 + $0x8] sm:$0xf]
        %v1915 = vld [vmem:[%s19 + $0xc] sm:$0xf]
        %v1916 = vld [vmem:[%s19 + $0x10] sm:$0xf]
        %v1917 = vld [vmem:[%s19 + $0x14] sm:$0xf]
        %v1918 = vld [vmem:[%s19 + $0x18] sm:$0xf]
        %v1919 = vld [vmem:[%s19 + $0x1c] sm:$0xf]
        %v1920 = vld [vmem:[%s20] sm:$0x1]
        %v1922 = vlaneseq
        %v1923 = vshrl.u32 %v1922, 7
        %v1924 = vsub.s32 0, %v1923
        %v1925 = vrot.slane %v1920, %v1924
        %v1935 = vunpack.c.l.b16 %v1912
        %v1936 = vunpack.c.l.b16 %v1913
        %v1937 = vunpack.c.l.b16 %v1914
        %v1938 = vunpack.c.l.b16 %v1915
        %v1939 = vunpack.c.l.b16 %v1916
        %v1940 = vunpack.c.l.b16 %v1917
        %v1941 = vunpack.c.l.b16 %v1918
        %v1942 = vunpack.c.l.b16 %v1919
        %v1943 = vpack.c.b16 %v1936, %v1935
        %v1944 = vpack.c.b16 %v1938, %v1937
        %v1945 = vpack.c.b16 %v1940, %v1939
        %v1946 = vpack.c.b16 %v1942, %v1941
        %vm1951 = vcmask 523264
        %v1953 = vsel %vm1951, %v1911, 0
        %1955 = vmatprep.subr.bf16.mxu0 0
        %1956 = vmatpush1.bf16.msra.mxu0 %v1943
        %1957 = vmatprep.subr.bf16.mxu0 0
        %1958 = vmatpush1.bf16.msra.mxu0 %v1944
        %1959 = vmatprep.subr.bf16.mxu0 0
        %1960 = vmatpush1.bf16.msra.mxu0 %v1945
        %1961 = vmatprep.subr.bf16.mxu0 0
        %1962 = vmatpush1.bf16.msra.mxu0 %v1946
        %1963 = vmatprep.subr.bf16.mxu0 0
        %1964 = vmatpush1.bf16.msra.mxu0 0
        %1965 = vmatprep.subr.bf16.mxu0 0
        %1966 = vmatpush1.bf16.msra.mxu0 0
        %1967 = vmatprep.subr.bf16.mxu0 0
        %1968 = vmatpush1.bf16.msra.mxu0 0
        %1969 = vmatprep.subr.bf16.mxu0 0
        %1970 = vmatpush1.bf16.msra.mxu0 0
        %1971 = vmatprep.subr.bf16.mxu0 0
        %1972 = vmatpush1.bf16.msra.mxu0 0
        %1973 = vmatprep.subr.bf16.mxu0 0
        %1974 = vmatpush1.bf16.msra.mxu0 0
        %1975 = vmatprep.subr.bf16.mxu0 0
        %1976 = vmatpush1.bf16.msra.mxu0 0
        %1977 = vmatprep.subr.bf16.mxu0 0
        %1978 = vmatpush1.bf16.msra.mxu0 0
        %1979 = vmatprep.subr.bf16.mxu0 0
        %1980 = vmatpush1.bf16.msra.mxu0 0
        %1981 = vmatprep.subr.bf16.mxu0 0
        %1982 = vmatpush1.bf16.msra.mxu0 0
        %1983 = vmatprep.subr.bf16.mxu0 0
        %1984 = vmatpush1.bf16.msra.mxu0 0
        %1985 = vmatprep.subr.bf16.mxu0 0
        %1986 = vmatpush1.bf16.msra.mxu0 0
        %1987 = vmatprep.mubr.bf16.mxu0 0
        %1988 = vmatmul.mubr.bf16.gmra.mrb[0].mxu0 %v1953
        %v1989 = vpop.f32.mrb[0].mxu0
        %v1990 = vadd.f32 %v1925, %v1989
        %v1991 = vpop.f32.mrb[0].mxu0
        %v1992 = vpop.f32.mrb[0].mxu0
        %v1993 = vadd.f32 %v1925, %v1992
        %v1994 = vpop.f32.mrb[0].mxu0
        %1995 = vdwg.mxu0
        %1996 = vst.msk [vmem:[%s688] sm:$0xff] %vm694, %v1990
        %1997 = vst.msk [vmem:[%s688 + $0x8] sm:$0xff] %vm694, %v1993
        %s1998 = sand.u32 %s486, 1
        %s1999 = sand.u32 %s486, 1
        %s2000 = smul.addr %s1999, 16
        %s2001 = scalar_lea.vmem [#allocation3], %s2000
        // Predicated region
        $region143: #{transformer_forward.8} parent=137 // pred_check
          %p2002 = pneg %p496
        $region144: #{transformer_forward.8} parent=137 // pred_check_branch
          %2004 = sbr.rel (%p2002) target = $region146
        $region145: #{transformer_forward.8} parent=137 // pred_region
          %s2005 = smul.addr %s32, 8
          %s2006 = scalar_lea.vmem %s21, %s2005
          // Predicated region
          $region147: #{transformer_forward.8} parent=145 // pred_check
            _
          $region148: #{transformer_forward.8} parent=145 // pred_check_branch
            %2008 = sbr.rel (0) target = $region150
          $region149: #{transformer_forward.8} parent=145 // pred_region
            // Predicated region
            $region151: #{transformer_forward.8} parent=149 // pred_check
              _
            $region152: #{transformer_forward.8} parent=149 // pred_check_branch
              %2010 = sbr.rel (0) target = $region154
            $region153: #{transformer_forward.8} parent=149 // pred_region
              // Predicated region
              $region166: #{transformer_forward.8} parent=153 // pred_check
                _
              $region167: #{transformer_forward.8} parent=153 // pred_check_branch
                %2027 = sbr.rel (0) target = $region169
              $region168: #{transformer_forward.8} parent=153 // pred_region
                loop: start=0, step=1, limit=1
                $region170: #{transformer_forward.8} parent=168 // loop_pre_header
                  _
                $region171: #{transformer_forward.8} parent=168 // loop_header
                  %s2029 = sphi 0, %s2033
                  %p2030 = scmp.ge.s32.totalorder %s2029, 1
                  %s2034 = sphi %s2001, %s2001
                  %s2035 = sphi %s2006, %s2006
                $region172: #{transformer_forward.8} parent=168 // loop_header_branch
                  %2032 = sbr.rel (%p2030) target = $region176
                $region173: #{transformer_forward.8} parent=168 // loop_body
                  %v2036 = vld [vmem:[%s2034] sm:$0xff]
                  %2037 = vst [vmem:[%s2035] sm:$0xff] %v2036
                  %v2038 = vld [vmem:[%s2034 + $0x8] sm:$0xff]
                  %2039 = vst [vmem:[%s2035 + $0x10] sm:$0xff] %v2038
                $region174: #{transformer_forward.8} parent=168 // loop_footer
                  %s2033 = sadd.s32 1, %s2029
                $region175: #{transformer_forward.8} parent=168 // loop_footer_branch
                  %2028 = sbr.rel target = $region171
                $region176: #{transformer_forward.8} parent=168 // loop_exit
                  _
              $region169: #{transformer_forward.8} parent=153 // pred_fallthru
                _
              // Predicated region
              $region177: #{transformer_forward.8} parent=153 // pred_check
                _
              $region178: #{transformer_forward.8} parent=153 // pred_check_branch
                %2041 = sbr.rel target = $region180
              $region179: #{transformer_forward.8} parent=153 // pred_region
                _
              $region180: #{transformer_forward.8} parent=153 // pred_fallthru
                _
            $region154: #{transformer_forward.8} parent=149 // pred_fallthru
              _
            // Predicated region
            $region155: #{transformer_forward.8} parent=149 // pred_check
              _
            $region156: #{transformer_forward.8} parent=149 // pred_check_branch
              %2012 = sbr.rel target = $region158
            $region157: #{transformer_forward.8} parent=149 // pred_region
              loop: start=0, step=1, limit=1
              $region159: #{transformer_forward.8} parent=157 // loop_pre_header
                _
              $region160: #{transformer_forward.8} parent=157 // loop_header
                %s2015 = sphi 0, %s2019
                %p2016 = scmp.ge.s32.totalorder %s2015, 1
                %s2020 = sphi %s2001, %s2001
                %s2021 = sphi %s2006, %s2006
              $region161: #{transformer_forward.8} parent=157 // loop_header_branch
                %2018 = sbr.rel (%p2016) target = $region165
              $region162: #{transformer_forward.8} parent=157 // loop_body
                %v2022 = vld [vmem:[%s2020] sm:$0xff]
                %2023 = vst [vmem:[%s2021] sm:$0xff] %v2022
                %v2024 = vld [vmem:[%s2020 + $0x8] sm:$0xff]
                %2025 = vst [vmem:[%s2021 + $0x10] sm:$0xff] %v2024
              $region163: #{transformer_forward.8} parent=157 // loop_footer
                %s2019 = sadd.s32 1, %s2015
              $region164: #{transformer_forward.8} parent=157 // loop_footer_branch
                %2014 = sbr.rel target = $region160
              $region165: #{transformer_forward.8} parent=157 // loop_exit
                _
            $region158: #{transformer_forward.8} parent=149 // pred_fallthru
              _
          $region150: #{transformer_forward.8} parent=145 // pred_fallthru
            _
          %2042 = vnop
        $region146: #{transformer_forward.8} parent=137 // pred_fallthru
          _
      $region138: #{transformer_forward.8} parent=5 // pred_fallthru
        _
      %p2043 = scmp.le.s32.totalorder 2, %s27
      // Predicated region
      $region181: #{transformer_forward.8} parent=5 // pred_check
        %p2044 = pneg %p2043
      $region182: #{transformer_forward.8} parent=5 // pred_check_branch
        %2046 = sbr.rel (%p2044) target = $region184
      $region183: #{transformer_forward.8} parent=5 // pred_region
        %s2047 = ssub.s32 %s27, 2
        // Predicated region
        $region185: #{transformer_forward.8} parent=183 // pred_check
          %p2048 = pneg %p502
        $region186: #{transformer_forward.8} parent=183 // pred_check_branch
          %2050 = sbr.rel (%p2048) target = $region188
        $region187: #{transformer_forward.8} parent=183 // pred_region
          %s2051 = sand.u32 %s487, 1
          %s2052 = sand.u32 %s487, 1
          %s2053 = smul.addr %s2052, 16
          %s2054 = scalar_lea.vmem [#allocation3], %s2053
        $region188: #{transformer_forward.8} parent=183 // pred_fallthru
          _
      $region184: #{transformer_forward.8} parent=5 // pred_fallthru
        _
    $region6: #{transformer_forward.8} parent=1 // loop_footer
      %s31 = sadd.s32 1, %s27
    $region7: #{transformer_forward.8} parent=1 // loop_footer_branch
      %26 = sbr.rel target = $region3
    $region8: #{transformer_forward.8} parent=1 // loop_exit
      _

</llo_original>
